<compile_context>
chip_gen: v6e
topology: v6e:2x2x1
jax: 0.10.0
libtpu: 0.0.40
codegen_flags: <defaults>
</compile_context>

<pallas_src>
import math
import jax
import jax.numpy as jnp
from jax.experimental import pallas as pl
from jax.experimental.pallas import tpu as pltpu  # noqa: F401  (TPU backend import)

B, S, D = 2, 8, 32          # batch, seq, d_model
H = 4                       # heads
DK = D // H                 # head dim
DFF = 64                    # feed-forward hidden
NLAYERS = 2
EPS = 1e-5                  # nn.LayerNorm-style epsilon (inside sqrt, biased variance)


def _layernorm(x, g, b):
    mu = jnp.mean(x, axis=-1, keepdims=True)
    var = jnp.mean((x - mu) ** 2, axis=-1, keepdims=True)
    return (x - mu) * jax.lax.rsqrt(var + EPS) * g + b


def transformer_kernel(src_ref, pe_ref, mask_ref,
                       wqkv_ref, bqkv_ref, wo_ref, w1_ref, w2_ref,
                       vecs_ref, b1_ref, lnf_ref,
                       o_ref):
    # ---- src_embed: add positional encoding; flatten batch into sublanes (B*S, D) ----
    x = (src_ref[...] + pe_ref[...][None]).reshape(B * S, D)

    # Additive attention-mask bias: computed and broadcast to (B, S, S) exactly once,
    # reused by every layer and head (broadcast_in_dim is not CSE'd by JAX).
    bias = jnp.broadcast_to(jnp.where(mask_ref[...] < 0.5, -1e9, 0.0), (B, S, S))

    for l in range(NLAYERS):                         # static loop, weights VMEM-resident
        ln1g = vecs_ref[l, 0:1]; ln1b = vecs_ref[l, 1:2]
        bo   = vecs_ref[l, 2:3]
        ln2g = vecs_ref[l, 3:4]; ln2b = vecs_ref[l, 4:5]
        b2   = vecs_ref[l, 5:6]

        # ---- sublayer 1: pre-norm multi-head self-attention + residual ----
        xn = _layernorm(x, ln1g, ln1b)                                   # (B*S, D)
        # Fused QKV matmul + single fused bias add; 1/sqrt(DK) already folded into the
        # q-columns of wqkv / bqkv at pack time.
        qkv = jnp.dot(xn, wqkv_ref[l],
                      preferred_element_type=jnp.float32) + bqkv_ref[l]  # (B*S, 3D)
        qb = qkv[:, 0 * D:1 * D].reshape(B, S, D)    # leading-dim split only
        kb = qkv[:, 1 * D:2 * D].reshape(B, S, D)
        vb = qkv[:, 2 * D:3 * D].reshape(B, S, D)

        # Per-head attention; output projection accumulated per head (no concat).
        attn = jnp.zeros((B * S, D), jnp.float32)
        for h in range(H):                           # small static loop, batched over B
            sl = slice(h * DK, (h + 1) * DK)
            sc = jnp.einsum('bqd,bkd->bqk', qb[:, :, sl], kb[:, :, sl],
                            preferred_element_type=jnp.float32)          # (B, S, S)
            sc = sc + bias
            sc = sc - jnp.max(sc, axis=-1, keepdims=True)
            p = jnp.exp(sc)
            p = p / jnp.sum(p, axis=-1, keepdims=True)                   # exact divide
            ctx_h = jnp.einsum('bqk,bkd->bqd', p, vb[:, :, sl],
                               preferred_element_type=jnp.float32)       # (B, S, DK)
            attn = attn + jnp.dot(ctx_h.reshape(B * S, DK), wo_ref[l, sl, :],
                                  preferred_element_type=jnp.float32)    # (B*S, D)
        x = x + attn + bo                            # dropout == identity (eval mode)

        # ---- sublayer 2: pre-norm position-wise feed-forward + residual ----
        xn2 = _layernorm(x, ln2g, ln2b)
        h1 = jnp.maximum(
            jnp.dot(xn2, w1_ref[l], preferred_element_type=jnp.float32) + b1_ref[l], 0.0)
        x = x + jnp.dot(h1, w2_ref[l], preferred_element_type=jnp.float32) + b2

    # ---- final encoder LayerNorm; store the flat (B*S, D) slab (reshape in wrapper) ----
    o_ref[...] = _layernorm(x, lnf_ref[0:1], lnf_ref[1:2])


def pack_params(p):
    """One-time packing at init: fuse QKV (scale pre-folded), pack tiny per-layer vectors."""
    inv_sqrt_dk = 1.0 / math.sqrt(DK)
    wqkv = jnp.concatenate([p["wq"] * inv_sqrt_dk, p["wk"], p["wv"]], axis=-1)  # (L, D, 3D)
    bqkv = jnp.concatenate([p["bq"] * inv_sqrt_dk, p["bk"], p["bv"]], axis=-1)  # (L, 1, 3D)
    vecs = jnp.concatenate([p["ln1g"], p["ln1b"], p["bo"],
                            p["ln2g"], p["ln2b"], p["b2"]], axis=1)             # (L, 6, D)
    lnf = jnp.concatenate([p["lnfg"], p["lnfb"]], axis=0)                       # (2, D)
    return dict(pe=p["pe"], wqkv=wqkv, bqkv=bqkv, wo=p["wo"],
                w1=p["w1"], b1=p["b1"], w2=p["w2"], vecs=vecs, lnf=lnf)


@jax.jit
def transformer_forward(src, src_mask, packed):
    # Single invocation, no grid: every operand is a whole-array VMEM block (~100 KiB
    # total), so weights are DMA'd exactly once.  All packing happened at init.
    out_flat = pl.pallas_call(
        transformer_kernel,
        out_shape=jax.ShapeDtypeStruct((B * S, D), jnp.float32),
    )(src, packed["pe"], src_mask,
      packed["wqkv"], packed["bqkv"], packed["wo"], packed["w1"], packed["w2"],
      packed["vecs"], packed["b1"], packed["lnf"])
    return out_flat.reshape(B, S, D)


# ---------------- pure-JAX reference (same math, batched) for validation ----------------
def ref_forward(src, src_mask, p):
    x = src + p["pe"][None]
    bias = jnp.where(src_mask == 0.0, -1e9, 0.0)            # (B, 1, S)
    for l in range(NLAYERS):
        xn = _layernorm(x, p["ln1g"][l, 0], p["ln1b"][l, 0])
        q = xn @ p["wq"][l] + p["bq"][l, 0]
        k = xn @ p["wk"][l] + p["bk"][l, 0]
        v = xn @ p["wv"][l] + p["bv"][l, 0]
        qh = q.reshape(B, S, H, DK).transpose(0, 2, 1, 3)
        kh = k.reshape(B, S, H, DK).transpose(0, 2, 1, 3)
        vh = v.reshape(B, S, H, DK).transpose(0, 2, 1, 3)
        sc = (qh @ kh.transpose(0, 1, 3, 2)) / math.sqrt(DK)  # (B, H, S, S)
        sc = sc + bias[:, :, None, :]
        pa = jax.nn.softmax(sc, axis=-1)
        ctx = (pa @ vh).transpose(0, 2, 1, 3).reshape(B, S, D)
        x = x + ctx @ p["wo"][l] + p["bo"][l, 0]
        xn2 = _layernorm(x, p["ln2g"][l, 0], p["ln2b"][l, 0])
        x = x + jnp.maximum(xn2 @ p["w1"][l] + p["b1"][l, 0], 0.0) @ p["w2"][l] + p["b2"][l, 0]
    return _layernorm(x, p["lnfg"][0], p["lnfb"][0])


def init_params(key):
    ks = jax.random.split(key, 10)

    def rnd(k, shape, scale=0.05):
        return (scale * jax.random.normal(k, shape)).astype(jnp.float32)

    # sinusoidal positional encoding
    pos = jnp.arange(S, dtype=jnp.float32)[:, None]
    div = jnp.exp(jnp.arange(0, D, 2, dtype=jnp.float32) * (-math.log(10000.0) / D))
    pe = jnp.zeros((S, D), jnp.float32)
    pe = pe.at[:, 0::2].set(jnp.sin(pos * div)).at[:, 1::2].set(jnp.cos(pos * div))

    p = dict(
        pe=pe,
        ln1g=jnp.ones((NLAYERS, 1, D), jnp.float32),
        ln1b=jnp.zeros((NLAYERS, 1, D), jnp.float32),
        ln2g=jnp.ones((NLAYERS, 1, D), jnp.float32),
        ln2b=jnp.zeros((NLAYERS, 1, D), jnp.float32),
        lnfg=jnp.ones((1, D), jnp.float32),
        lnfb=jnp.zeros((1, D), jnp.float32),
        wq=rnd(ks[0], (NLAYERS, D, D)), bq=rnd(ks[1], (NLAYERS, 1, D)),
        wk=rnd(ks[2], (NLAYERS, D, D)), bk=rnd(ks[3], (NLAYERS, 1, D)),
        wv=rnd(ks[4], (NLAYERS, D, D)), bv=rnd(ks[5], (NLAYERS, 1, D)),
        wo=rnd(ks[6], (NLAYERS, D, D)), bo=rnd(ks[7], (NLAYERS, 1, D)),
        w1=rnd(ks[8], (NLAYERS, D, DFF)), b1=jnp.zeros((NLAYERS, 1, DFF), jnp.float32),
        w2=rnd(ks[9], (NLAYERS, DFF, D)), b2=jnp.zeros((NLAYERS, 1, D), jnp.float32),
    )
    return p


if __name__ == "__main__":
    key = jax.random.PRNGKey(0)
    k_src, k_par = jax.random.split(key)
    src = jax.random.normal(k_src, (B, S, D), jnp.float32)
    # mask: attend everywhere, except last two key positions of batch element 1
    src_mask = jnp.ones((B, 1, S), jnp.float32)
    src_mask = src_mask.at[1, 0, -2:].set(0.0)
    params = init_params(k_par)

    packed = pack_params(params)             # one-time packing, outside the forward path
    out = transformer_forward(src, src_mask, packed)
    out = jax.block_until_ready(out)

    ref = ref_forward(src, src_mask, params)
    assert out.shape == (B, S, D)
    assert jnp.allclose(out, ref, atol=1e-4, rtol=1e-4), (
        f"max abs err {jnp.max(jnp.abs(out - ref))}")
    print("KERNEL_OK")
</pallas_src>

<mosaic_0001>
module attributes {stable_mosaic.version = 11 : i64} {
  func.func @transformer_kernel(%arg0: memref<2x8x32xf32, #tpu.memory_space<vmem>>, %arg1: memref<8x32xf32, #tpu.memory_space<vmem>>, %arg2: memref<2x1x8xf32, #tpu.memory_space<vmem>>, %arg3: memref<2x32x96xf32, #tpu.memory_space<vmem>>, %arg4: memref<2x1x96xf32, #tpu.memory_space<vmem>>, %arg5: memref<2x32x32xf32, #tpu.memory_space<vmem>>, %arg6: memref<2x32x64xf32, #tpu.memory_space<vmem>>, %arg7: memref<2x64x32xf32, #tpu.memory_space<vmem>>, %arg8: memref<2x6x32xf32, #tpu.memory_space<vmem>>, %arg9: memref<2x1x64xf32, #tpu.memory_space<vmem>>, %arg10: memref<2x32xf32, #tpu.memory_space<vmem>>, %arg11: memref<16x32xf32, #tpu.memory_space<vmem>>) attributes {dimension_semantics = [], scalar_prefetch = 0 : i64, scratch_operands = 0 : i64, tpu.core_type = #tpu.core_type<tc>} {
    %c0 = arith.constant 0 : index
    %c0_0 = arith.constant 0 : index
    %c0_1 = arith.constant 0 : index
    %0 = vector.load %arg0[%c0, %c0_0, %c0_1] : memref<2x8x32xf32, #tpu.memory_space<vmem>>, vector<2x8x32xf32>
    %c0_2 = arith.constant 0 : index
    %c0_3 = arith.constant 0 : index
    %1 = vector.load %arg1[%c0_2, %c0_3] : memref<8x32xf32, #tpu.memory_space<vmem>>, vector<8x32xf32>
    %2 = vector.shape_cast %1 : vector<8x32xf32> to vector<1x8x32xf32>
    %3 = vector.broadcast %2 : vector<1x8x32xf32> to vector<2x8x32xf32>
    %4 = arith.addf %0, %3 : vector<2x8x32xf32>
    %5 = vector.shape_cast %4 : vector<2x8x32xf32> to vector<16x32xf32>
    %c0_4 = arith.constant 0 : index
    %c0_5 = arith.constant 0 : index
    %c0_6 = arith.constant 0 : index
    %6 = vector.load %arg2[%c0_4, %c0_5, %c0_6] : memref<2x1x8xf32, #tpu.memory_space<vmem>>, vector<2x1x8xf32>
    %cst = arith.constant 5.000000e-01 : f32
    %7 = vector.broadcast %cst : f32 to vector<2x1x8xf32>
    %8 = arith.cmpf olt, %6, %7 : vector<2x1x8xf32>
    %cst_7 = arith.constant -1.000000e+09 : f32
    %cst_8 = arith.constant 0.000000e+00 : f32
    %9 = vector.broadcast %cst_7 : f32 to vector<2x1x8xf32>
    %10 = vector.broadcast %cst_8 : f32 to vector<2x1x8xf32>
    %11 = arith.select %8, %9, %10 : vector<2x1x8xi1>, vector<2x1x8xf32>
    %12 = vector.shape_cast %11 : vector<2x1x8xf32> to vector<2x1x8xf32>
    %13 = vector.broadcast %12 : vector<2x1x8xf32> to vector<2x8x8xf32>
    %c0_9 = arith.constant 0 : index
    %c0_10 = arith.constant 0 : index
    %c0_11 = arith.constant 0 : index
    %14 = vector.load %arg8[%c0_9, %c0_10, %c0_11] : memref<2x6x32xf32, #tpu.memory_space<vmem>>, vector<1x1x32xf32>
    %15 = vector.shape_cast %14 : vector<1x1x32xf32> to vector<1x32xf32>
    %c0_12 = arith.constant 0 : index
    %c1 = arith.constant 1 : index
    %c0_13 = arith.constant 0 : index
    %16 = vector.load %arg8[%c0_12, %c1, %c0_13] : memref<2x6x32xf32, #tpu.memory_space<vmem>>, vector<1x1x32xf32>
    %17 = vector.shape_cast %16 : vector<1x1x32xf32> to vector<1x32xf32>
    %c0_14 = arith.constant 0 : index
    %c2 = arith.constant 2 : index
    %c0_15 = arith.constant 0 : index
    %18 = vector.load %arg8[%c0_14, %c2, %c0_15] : memref<2x6x32xf32, #tpu.memory_space<vmem>>, vector<1x1x32xf32>
    %19 = vector.shape_cast %18 : vector<1x1x32xf32> to vector<1x32xf32>
    %c0_16 = arith.constant 0 : index
    %c3 = arith.constant 3 : index
    %c0_17 = arith.constant 0 : index
    %20 = vector.load %arg8[%c0_16, %c3, %c0_17] : memref<2x6x32xf32, #tpu.memory_space<vmem>>, vector<1x1x32xf32>
    %21 = vector.shape_cast %20 : vector<1x1x32xf32> to vector<1x32xf32>
    %c0_18 = arith.constant 0 : index
    %c4 = arith.constant 4 : index
    %c0_19 = arith.constant 0 : index
    %22 = vector.load %arg8[%c0_18, %c4, %c0_19] : memref<2x6x32xf32, #tpu.memory_space<vmem>>, vector<1x1x32xf32>
    %23 = vector.shape_cast %22 : vector<1x1x32xf32> to vector<1x32xf32>
    %c0_20 = arith.constant 0 : index
    %c5 = arith.constant 5 : index
    %c0_21 = arith.constant 0 : index
    %24 = vector.load %arg8[%c0_20, %c5, %c0_21] : memref<2x6x32xf32, #tpu.memory_space<vmem>>, vector<1x1x32xf32>
    %25 = vector.shape_cast %24 : vector<1x1x32xf32> to vector<1x32xf32>
    %cst_22 = arith.constant dense<0.000000e+00> : vector<16xf32>
    %26 = vector.multi_reduction <add>, %5, %cst_22 [1] : vector<16x32xf32> to vector<16xf32>
    %27 = vector.shape_cast %26 : vector<16xf32> to vector<16x1xf32>
    %cst_23 = arith.constant 3.200000e+01 : f32
    %28 = vector.broadcast %cst_23 : f32 to vector<16x1xf32>
    %29 = arith.divf %27, %28 : vector<16x1xf32>
    %30 = vector.broadcast %29 : vector<16x1xf32> to vector<16x32xf32>
    %31 = arith.subf %5, %30 : vector<16x32xf32>
    %32 = arith.mulf %31, %31 : vector<16x32xf32>
    %cst_24 = arith.constant dense<0.000000e+00> : vector<16xf32>
    %33 = vector.multi_reduction <add>, %32, %cst_24 [1] : vector<16x32xf32> to vector<16xf32>
    %34 = vector.shape_cast %33 : vector<16xf32> to vector<16x1xf32>
    %cst_25 = arith.constant 3.200000e+01 : f32
    %35 = vector.broadcast %cst_25 : f32 to vector<16x1xf32>
    %36 = arith.divf %34, %35 : vector<16x1xf32>
    %37 = vector.broadcast %29 : vector<16x1xf32> to vector<16x32xf32>
    %38 = arith.subf %5, %37 : vector<16x32xf32>
    %cst_26 = arith.constant 9.99999974E-6 : f32
    %39 = vector.broadcast %cst_26 : f32 to vector<16x1xf32>
    %40 = arith.addf %36, %39 : vector<16x1xf32>
    %41 = math.rsqrt %40 : vector<16x1xf32>
    %42 = vector.broadcast %41 : vector<16x1xf32> to vector<16x32xf32>
    %43 = arith.mulf %38, %42 : vector<16x32xf32>
    %44 = vector.broadcast %15 : vector<1x32xf32> to vector<16x32xf32>
    %45 = arith.mulf %43, %44 : vector<16x32xf32>
    %46 = vector.broadcast %17 : vector<1x32xf32> to vector<16x32xf32>
    %47 = arith.addf %45, %46 : vector<16x32xf32>
    %c0_27 = arith.constant 0 : index
    %c0_28 = arith.constant 0 : index
    %c0_29 = arith.constant 0 : index
    %48 = vector.load %arg3[%c0_27, %c0_28, %c0_29] : memref<2x32x96xf32, #tpu.memory_space<vmem>>, vector<1x32x96xf32>
    %49 = vector.shape_cast %48 : vector<1x32x96xf32> to vector<32x96xf32>
    %cst_30 = arith.constant dense<0.000000e+00> : vector<16x96xf32>
    %50 = tpu.matmul %47, %49, %cst_30 {dimension_numbers = #tpu.dot_dimension_numbers<[1], [0], [0], [1], [0, 0, 1, 1], [], []>} : vector<16x32xf32>, vector<32x96xf32>, vector<16x96xf32> -> vector<16x96xf32>
    %c0_31 = arith.constant 0 : index
    %c0_32 = arith.constant 0 : index
    %c0_33 = arith.constant 0 : index
    %51 = vector.load %arg4[%c0_31, %c0_32, %c0_33] : memref<2x1x96xf32, #tpu.memory_space<vmem>>, vector<1x1x96xf32>
    %52 = vector.shape_cast %51 : vector<1x1x96xf32> to vector<1x96xf32>
    %53 = vector.broadcast %52 : vector<1x96xf32> to vector<16x96xf32>
    %54 = arith.addf %50, %53 : vector<16x96xf32>
    %55 = vector.extract_strided_slice %54 {offsets = [0, 0], sizes = [16, 32], strides = [1, 1]} : vector<16x96xf32> to vector<16x32xf32>
    %56 = vector.shape_cast %55 : vector<16x32xf32> to vector<2x8x32xf32>
    %57 = vector.extract_strided_slice %54 {offsets = [0, 32], sizes = [16, 32], strides = [1, 1]} : vector<16x96xf32> to vector<16x32xf32>
    %58 = vector.shape_cast %57 : vector<16x32xf32> to vector<2x8x32xf32>
    %59 = vector.extract_strided_slice %54 {offsets = [0, 64], sizes = [16, 32], strides = [1, 1]} : vector<16x96xf32> to vector<16x32xf32>
    %60 = vector.shape_cast %59 : vector<16x32xf32> to vector<2x8x32xf32>
    %cst_34 = arith.constant 0.000000e+00 : f32
    %61 = vector.broadcast %cst_34 : f32 to vector<16x32xf32>
    %62 = vector.extract_strided_slice %56 {offsets = [0, 0, 0], sizes = [2, 8, 8], strides = [1, 1, 1]} : vector<2x8x32xf32> to vector<2x8x8xf32>
    %63 = vector.extract_strided_slice %58 {offsets = [0, 0, 0], sizes = [2, 8, 8], strides = [1, 1, 1]} : vector<2x8x32xf32> to vector<2x8x8xf32>
    "tpu.trace_start"() <{level = 10 : i32, message = "bqd,bkd->bqk"}> : () -> ()
    %cst_35 = arith.constant dense<0.000000e+00> : vector<2x8x8xf32>
    %64 = tpu.matmul %62, %63, %cst_35 {dimension_numbers = #tpu.dot_dimension_numbers<[2], [2], [1], [1], [0, 0, 0, 1, 1, 1], [0], [0]>} : vector<2x8x8xf32>, vector<2x8x8xf32>, vector<2x8x8xf32> -> vector<2x8x8xf32>
    "tpu.trace_stop"() : () -> ()
    %65 = arith.addf %64, %13 : vector<2x8x8xf32>
    %cst_36 = arith.constant dense<0xFF800000> : vector<2x8xf32>
    %66 = vector.multi_reduction <maximumf>, %65, %cst_36 [2] : vector<2x8x8xf32> to vector<2x8xf32>
    %67 = vector.shape_cast %66 : vector<2x8xf32> to vector<2x8x1xf32>
    %68 = vector.broadcast %67 : vector<2x8x1xf32> to vector<2x8x8xf32>
    %69 = arith.subf %65, %68 : vector<2x8x8xf32>
    %70 = math.exp %69 : vector<2x8x8xf32>
    %cst_37 = arith.constant dense<0.000000e+00> : vector<2x8xf32>
    %71 = vector.multi_reduction <add>, %70, %cst_37 [2] : vector<2x8x8xf32> to vector<2x8xf32>
    %72 = vector.shape_cast %71 : vector<2x8xf32> to vector<2x8x1xf32>
    %73 = vector.broadcast %72 : vector<2x8x1xf32> to vector<2x8x8xf32>
    %74 = arith.divf %70, %73 : vector<2x8x8xf32>
    %75 = vector.extract_strided_slice %60 {offsets = [0, 0, 0], sizes = [2, 8, 8], strides = [1, 1, 1]} : vector<2x8x32xf32> to vector<2x8x8xf32>
    "tpu.trace_start"() <{level = 10 : i32, message = "bqk,bkd->bqd"}> : () -> ()
    %cst_38 = arith.constant dense<0.000000e+00> : vector<2x8x8xf32>
    %76 = tpu.matmul %74, %75, %cst_38 {dimension_numbers = #tpu.dot_dimension_numbers<[2], [1], [1], [2], [0, 0, 0, 1, 1, 2], [0], [0]>} : vector<2x8x8xf32>, vector<2x8x8xf32>, vector<2x8x8xf32> -> vector<2x8x8xf32>
    "tpu.trace_stop"() : () -> ()
    %77 = vector.shape_cast %76 : vector<2x8x8xf32> to vector<16x8xf32>
    %c0_39 = arith.constant 0 : index
    %c0_40 = arith.constant 0 : index
    %c0_41 = arith.constant 0 : index
    %78 = vector.load %arg5[%c0_39, %c0_40, %c0_41] : memref<2x32x32xf32, #tpu.memory_space<vmem>>, vector<1x8x32xf32>
    %79 = vector.shape_cast %78 : vector<1x8x32xf32> to vector<8x32xf32>
    %cst_42 = arith.constant dense<0.000000e+00> : vector<16x32xf32>
    %80 = tpu.matmul %77, %79, %cst_42 {dimension_numbers = #tpu.dot_dimension_numbers<[1], [0], [0], [1], [0, 0, 1, 1], [], []>} : vector<16x8xf32>, vector<8x32xf32>, vector<16x32xf32> -> vector<16x32xf32>
    %81 = arith.addf %61, %80 : vector<16x32xf32>
    %82 = vector.extract_strided_slice %56 {offsets = [0, 0, 8], sizes = [2, 8, 8], strides = [1, 1, 1]} : vector<2x8x32xf32> to vector<2x8x8xf32>
    %83 = vector.extract_strided_slice %58 {offsets = [0, 0, 8], sizes = [2, 8, 8], strides = [1, 1, 1]} : vector<2x8x32xf32> to vector<2x8x8xf32>
    "tpu.trace_start"() <{level = 10 : i32, message = "bqd,bkd->bqk"}> : () -> ()
    %cst_43 = arith.constant dense<0.000000e+00> : vector<2x8x8xf32>
    %84 = tpu.matmul %82, %83, %cst_43 {dimension_numbers = #tpu.dot_dimension_numbers<[2], [2], [1], [1], [0, 0, 0, 1, 1, 1], [0], [0]>} : vector<2x8x8xf32>, vector<2x8x8xf32>, vector<2x8x8xf32> -> vector<2x8x8xf32>
    "tpu.trace_stop"() : () -> ()
    %85 = arith.addf %84, %13 : vector<2x8x8xf32>
    %cst_44 = arith.constant dense<0xFF800000> : vector<2x8xf32>
    %86 = vector.multi_reduction <maximumf>, %85, %cst_44 [2] : vector<2x8x8xf32> to vector<2x8xf32>
    %87 = vector.shape_cast %86 : vector<2x8xf32> to vector<2x8x1xf32>
    %88 = vector.broadcast %87 : vector<2x8x1xf32> to vector<2x8x8xf32>
    %89 = arith.subf %85, %88 : vector<2x8x8xf32>
    %90 = math.exp %89 : vector<2x8x8xf32>
    %cst_45 = arith.constant dense<0.000000e+00> : vector<2x8xf32>
    %91 = vector.multi_reduction <add>, %90, %cst_45 [2] : vector<2x8x8xf32> to vector<2x8xf32>
    %92 = vector.shape_cast %91 : vector<2x8xf32> to vector<2x8x1xf32>
    %93 = vector.broadcast %92 : vector<2x8x1xf32> to vector<2x8x8xf32>
    %94 = arith.divf %90, %93 : vector<2x8x8xf32>
    %95 = vector.extract_strided_slice %60 {offsets = [0, 0, 8], sizes = [2, 8, 8], strides = [1, 1, 1]} : vector<2x8x32xf32> to vector<2x8x8xf32>
    "tpu.trace_start"() <{level = 10 : i32, message = "bqk,bkd->bqd"}> : () -> ()
    %cst_46 = arith.constant dense<0.000000e+00> : vector<2x8x8xf32>
    %96 = tpu.matmul %94, %95, %cst_46 {dimension_numbers = #tpu.dot_dimension_numbers<[2], [1], [1], [2], [0, 0, 0, 1, 1, 2], [0], [0]>} : vector<2x8x8xf32>, vector<2x8x8xf32>, vector<2x8x8xf32> -> vector<2x8x8xf32>
    "tpu.trace_stop"() : () -> ()
    %97 = vector.shape_cast %96 : vector<2x8x8xf32> to vector<16x8xf32>
    %c0_47 = arith.constant 0 : index
    %c8 = arith.constant 8 : index
    %c0_48 = arith.constant 0 : index
    %98 = vector.load %arg5[%c0_47, %c8, %c0_48] : memref<2x32x32xf32, #tpu.memory_space<vmem>>, vector<1x8x32xf32>
    %99 = vector.shape_cast %98 : vector<1x8x32xf32> to vector<8x32xf32>
    %cst_49 = arith.constant dense<0.000000e+00> : vector<16x32xf32>
    %100 = tpu.matmul %97, %99, %cst_49 {dimension_numbers = #tpu.dot_dimension_numbers<[1], [0], [0], [1], [0, 0, 1, 1], [], []>} : vector<16x8xf32>, vector<8x32xf32>, vector<16x32xf32> -> vector<16x32xf32>
    %101 = arith.addf %81, %100 : vector<16x32xf32>
    %102 = vector.extract_strided_slice %56 {offsets = [0, 0, 16], sizes = [2, 8, 8], strides = [1, 1, 1]} : vector<2x8x32xf32> to vector<2x8x8xf32>
    %103 = vector.extract_strided_slice %58 {offsets = [0, 0, 16], sizes = [2, 8, 8], strides = [1, 1, 1]} : vector<2x8x32xf32> to vector<2x8x8xf32>
    "tpu.trace_start"() <{level = 10 : i32, message = "bqd,bkd->bqk"}> : () -> ()
    %cst_50 = arith.constant dense<0.000000e+00> : vector<2x8x8xf32>
    %104 = tpu.matmul %102, %103, %cst_50 {dimension_numbers = #tpu.dot_dimension_numbers<[2], [2], [1], [1], [0, 0, 0, 1, 1, 1], [0], [0]>} : vector<2x8x8xf32>, vector<2x8x8xf32>, vector<2x8x8xf32> -> vector<2x8x8xf32>
    "tpu.trace_stop"() : () -> ()
    %105 = arith.addf %104, %13 : vector<2x8x8xf32>
    %cst_51 = arith.constant dense<0xFF800000> : vector<2x8xf32>
    %106 = vector.multi_reduction <maximumf>, %105, %cst_51 [2] : vector<2x8x8xf32> to vector<2x8xf32>
    %107 = vector.shape_cast %106 : vector<2x8xf32> to vector<2x8x1xf32>
    %108 = vector.broadcast %107 : vector<2x8x1xf32> to vector<2x8x8xf32>
    %109 = arith.subf %105, %108 : vector<2x8x8xf32>
    %110 = math.exp %109 : vector<2x8x8xf32>
    %cst_52 = arith.constant dense<0.000000e+00> : vector<2x8xf32>
    %111 = vector.multi_reduction <add>, %110, %cst_52 [2] : vector<2x8x8xf32> to vector<2x8xf32>
    %112 = vector.shape_cast %111 : vector<2x8xf32> to vector<2x8x1xf32>
    %113 = vector.broadcast %112 : vector<2x8x1xf32> to vector<2x8x8xf32>
    %114 = arith.divf %110, %113 : vector<2x8x8xf32>
    %115 = vector.extract_strided_slice %60 {offsets = [0, 0, 16], sizes = [2, 8, 8], strides = [1, 1, 1]} : vector<2x8x32xf32> to vector<2x8x8xf32>
    "tpu.trace_start"() <{level = 10 : i32, message = "bqk,bkd->bqd"}> : () -> ()
    %cst_53 = arith.constant dense<0.000000e+00> : vector<2x8x8xf32>
    %116 = tpu.matmul %114, %115, %cst_53 {dimension_numbers = #tpu.dot_dimension_numbers<[2], [1], [1], [2], [0, 0, 0, 1, 1, 2], [0], [0]>} : vector<2x8x8xf32>, vector<2x8x8xf32>, vector<2x8x8xf32> -> vector<2x8x8xf32>
    "tpu.trace_stop"() : () -> ()
    %117 = vector.shape_cast %116 : vector<2x8x8xf32> to vector<16x8xf32>
    %c0_54 = arith.constant 0 : index
    %c16 = arith.constant 16 : index
    %c0_55 = arith.constant 0 : index
    %118 = vector.load %arg5[%c0_54, %c16, %c0_55] : memref<2x32x32xf32, #tpu.memory_space<vmem>>, vector<1x8x32xf32>
    %119 = vector.shape_cast %118 : vector<1x8x32xf32> to vector<8x32xf32>
    %cst_56 = arith.constant dense<0.000000e+00> : vector<16x32xf32>
    %120 = tpu.matmul %117, %119, %cst_56 {dimension_numbers = #tpu.dot_dimension_numbers<[1], [0], [0], [1], [0, 0, 1, 1], [], []>} : vector<16x8xf32>, vector<8x32xf32>, vector<16x32xf32> -> vector<16x32xf32>
    %121 = arith.addf %101, %120 : vector<16x32xf32>
    %122 = vector.extract_strided_slice %56 {offsets = [0, 0, 24], sizes = [2, 8, 8], strides = [1, 1, 1]} : vector<2x8x32xf32> to vector<2x8x8xf32>
    %123 = vector.extract_strided_slice %58 {offsets = [0, 0, 24], sizes = [2, 8, 8], strides = [1, 1, 1]} : vector<2x8x32xf32> to vector<2x8x8xf32>
    "tpu.trace_start"() <{level = 10 : i32, message = "bqd,bkd->bqk"}> : () -> ()
    %cst_57 = arith.constant dense<0.000000e+00> : vector<2x8x8xf32>
    %124 = tpu.matmul %122, %123, %cst_57 {dimension_numbers = #tpu.dot_dimension_numbers<[2], [2], [1], [1], [0, 0, 0, 1, 1, 1], [0], [0]>} : vector<2x8x8xf32>, vector<2x8x8xf32>, vector<2x8x8xf32> -> vector<2x8x8xf32>
    "tpu.trace_stop"() : () -> ()
    %125 = arith.addf %124, %13 : vector<2x8x8xf32>
    %cst_58 = arith.constant dense<0xFF800000> : vector<2x8xf32>
    %126 = vector.multi_reduction <maximumf>, %125, %cst_58 [2] : vector<2x8x8xf32> to vector<2x8xf32>
    %127 = vector.shape_cast %126 : vector<2x8xf32> to vector<2x8x1xf32>
    %128 = vector.broadcast %127 : vector<2x8x1xf32> to vector<2x8x8xf32>
    %129 = arith.subf %125, %128 : vector<2x8x8xf32>
    %130 = math.exp %129 : vector<2x8x8xf32>
    %cst_59 = arith.constant dense<0.000000e+00> : vector<2x8xf32>
    %131 = vector.multi_reduction <add>, %130, %cst_59 [2] : vector<2x8x8xf32> to vector<2x8xf32>
    %132 = vector.shape_cast %131 : vector<2x8xf32> to vector<2x8x1xf32>
    %133 = vector.broadcast %132 : vector<2x8x1xf32> to vector<2x8x8xf32>
    %134 = arith.divf %130, %133 : vector<2x8x8xf32>
    %135 = vector.extract_strided_slice %60 {offsets = [0, 0, 24], sizes = [2, 8, 8], strides = [1, 1, 1]} : vector<2x8x32xf32> to vector<2x8x8xf32>
    "tpu.trace_start"() <{level = 10 : i32, message = "bqk,bkd->bqd"}> : () -> ()
    %cst_60 = arith.constant dense<0.000000e+00> : vector<2x8x8xf32>
    %136 = tpu.matmul %134, %135, %cst_60 {dimension_numbers = #tpu.dot_dimension_numbers<[2], [1], [1], [2], [0, 0, 0, 1, 1, 2], [0], [0]>} : vector<2x8x8xf32>, vector<2x8x8xf32>, vector<2x8x8xf32> -> vector<2x8x8xf32>
    "tpu.trace_stop"() : () -> ()
    %137 = vector.shape_cast %136 : vector<2x8x8xf32> to vector<16x8xf32>
    %c0_61 = arith.constant 0 : index
    %c24 = arith.constant 24 : index
    %c0_62 = arith.constant 0 : index
    %138 = vector.load %arg5[%c0_61, %c24, %c0_62] : memref<2x32x32xf32, #tpu.memory_space<vmem>>, vector<1x8x32xf32>
    %139 = vector.shape_cast %138 : vector<1x8x32xf32> to vector<8x32xf32>
    %cst_63 = arith.constant dense<0.000000e+00> : vector<16x32xf32>
    %140 = tpu.matmul %137, %139, %cst_63 {dimension_numbers = #tpu.dot_dimension_numbers<[1], [0], [0], [1], [0, 0, 1, 1], [], []>} : vector<16x8xf32>, vector<8x32xf32>, vector<16x32xf32> -> vector<16x32xf32>
    %141 = arith.addf %121, %140 : vector<16x32xf32>
    %142 = arith.addf %5, %141 : vector<16x32xf32>
    %143 = vector.broadcast %19 : vector<1x32xf32> to vector<16x32xf32>
    %144 = arith.addf %142, %143 : vector<16x32xf32>
    %cst_64 = arith.constant dense<0.000000e+00> : vector<16xf32>
    %145 = vector.multi_reduction <add>, %144, %cst_64 [1] : vector<16x32xf32> to vector<16xf32>
    %146 = vector.shape_cast %145 : vector<16xf32> to vector<16x1xf32>
    %cst_65 = arith.constant 3.200000e+01 : f32
    %147 = vector.broadcast %cst_65 : f32 to vector<16x1xf32>
    %148 = arith.divf %146, %147 : vector<16x1xf32>
    %149 = vector.broadcast %148 : vector<16x1xf32> to vector<16x32xf32>
    %150 = arith.subf %144, %149 : vector<16x32xf32>
    %151 = arith.mulf %150, %150 : vector<16x32xf32>
    %cst_66 = arith.constant dense<0.000000e+00> : vector<16xf32>
    %152 = vector.multi_reduction <add>, %151, %cst_66 [1] : vector<16x32xf32> to vector<16xf32>
    %153 = vector.shape_cast %152 : vector<16xf32> to vector<16x1xf32>
    %cst_67 = arith.constant 3.200000e+01 : f32
    %154 = vector.broadcast %cst_67 : f32 to vector<16x1xf32>
    %155 = arith.divf %153, %154 : vector<16x1xf32>
    %156 = vector.broadcast %148 : vector<16x1xf32> to vector<16x32xf32>
    %157 = arith.subf %144, %156 : vector<16x32xf32>
    %cst_68 = arith.constant 9.99999974E-6 : f32
    %158 = vector.broadcast %cst_68 : f32 to vector<16x1xf32>
    %159 = arith.addf %155, %158 : vector<16x1xf32>
    %160 = math.rsqrt %159 : vector<16x1xf32>
    %161 = vector.broadcast %160 : vector<16x1xf32> to vector<16x32xf32>
    %162 = arith.mulf %157, %161 : vector<16x32xf32>
    %163 = vector.broadcast %21 : vector<1x32xf32> to vector<16x32xf32>
    %164 = arith.mulf %162, %163 : vector<16x32xf32>
    %165 = vector.broadcast %23 : vector<1x32xf32> to vector<16x32xf32>
    %166 = arith.addf %164, %165 : vector<16x32xf32>
    %c0_69 = arith.constant 0 : index
    %c0_70 = arith.constant 0 : index
    %c0_71 = arith.constant 0 : index
    %167 = vector.load %arg6[%c0_69, %c0_70, %c0_71] : memref<2x32x64xf32, #tpu.memory_space<vmem>>, vector<1x32x64xf32>
    %168 = vector.shape_cast %167 : vector<1x32x64xf32> to vector<32x64xf32>
    %cst_72 = arith.constant dense<0.000000e+00> : vector<16x64xf32>
    %169 = tpu.matmul %166, %168, %cst_72 {dimension_numbers = #tpu.dot_dimension_numbers<[1], [0], [0], [1], [0, 0, 1, 1], [], []>} : vector<16x32xf32>, vector<32x64xf32>, vector<16x64xf32> -> vector<16x64xf32>
    %c0_73 = arith.constant 0 : index
    %c0_74 = arith.constant 0 : index
    %c0_75 = arith.constant 0 : index
    %170 = vector.load %arg9[%c0_73, %c0_74, %c0_75] : memref<2x1x64xf32, #tpu.memory_space<vmem>>, vector<1x1x64xf32>
    %171 = vector.shape_cast %170 : vector<1x1x64xf32> to vector<1x64xf32>
    %172 = vector.broadcast %171 : vector<1x64xf32> to vector<16x64xf32>
    %173 = arith.addf %169, %172 : vector<16x64xf32>
    %cst_76 = arith.constant 0.000000e+00 : f32
    %174 = vector.broadcast %cst_76 : f32 to vector<16x64xf32>
    %175 = arith.maximumf %173, %174 : vector<16x64xf32>
    %c0_77 = arith.constant 0 : index
    %c0_78 = arith.constant 0 : index
    %c0_79 = arith.constant 0 : index
    %176 = vector.load %arg7[%c0_77, %c0_78, %c0_79] : memref<2x64x32xf32, #tpu.memory_space<vmem>>, vector<1x64x32xf32>
    %177 = vector.shape_cast %176 : vector<1x64x32xf32> to vector<64x32xf32>
    %cst_80 = arith.constant dense<0.000000e+00> : vector<16x32xf32>
    %178 = tpu.matmul %175, %177, %cst_80 {dimension_numbers = #tpu.dot_dimension_numbers<[1], [0], [0], [1], [0, 0, 1, 1], [], []>} : vector<16x64xf32>, vector<64x32xf32>, vector<16x32xf32> -> vector<16x32xf32>
    %179 = arith.addf %144, %178 : vector<16x32xf32>
    %180 = vector.broadcast %25 : vector<1x32xf32> to vector<16x32xf32>
    %181 = arith.addf %179, %180 : vector<16x32xf32>
    %c1_81 = arith.constant 1 : index
    %c0_82 = arith.constant 0 : index
    %c0_83 = arith.constant 0 : index
    %182 = vector.load %arg8[%c1_81, %c0_82, %c0_83] : memref<2x6x32xf32, #tpu.memory_space<vmem>>, vector<1x1x32xf32>
    %183 = vector.shape_cast %182 : vector<1x1x32xf32> to vector<1x32xf32>
    %c1_84 = arith.constant 1 : index
    %c1_85 = arith.constant 1 : index
    %c0_86 = arith.constant 0 : index
    %184 = vector.load %arg8[%c1_84, %c1_85, %c0_86] : memref<2x6x32xf32, #tpu.memory_space<vmem>>, vector<1x1x32xf32>
    %185 = vector.shape_cast %184 : vector<1x1x32xf32> to vector<1x32xf32>
    %c1_87 = arith.constant 1 : index
    %c2_88 = arith.constant 2 : index
    %c0_89 = arith.constant 0 : index
    %186 = vector.load %arg8[%c1_87, %c2_88, %c0_89] : memref<2x6x32xf32, #tpu.memory_space<vmem>>, vector<1x1x32xf32>
    %187 = vector.shape_cast %186 : vector<1x1x32xf32> to vector<1x32xf32>
    %c1_90 = arith.constant 1 : index
    %c3_91 = arith.constant 3 : index
    %c0_92 = arith.constant 0 : index
    %188 = vector.load %arg8[%c1_90, %c3_91, %c0_92] : memref<2x6x32xf32, #tpu.memory_space<vmem>>, vector<1x1x32xf32>
    %189 = vector.shape_cast %188 : vector<1x1x32xf32> to vector<1x32xf32>
    %c1_93 = arith.constant 1 : index
    %c4_94 = arith.constant 4 : index
    %c0_95 = arith.constant 0 : index
    %190 = vector.load %arg8[%c1_93, %c4_94, %c0_95] : memref<2x6x32xf32, #tpu.memory_space<vmem>>, vector<1x1x32xf32>
    %191 = vector.shape_cast %190 : vector<1x1x32xf32> to vector<1x32xf32>
    %c1_96 = arith.constant 1 : index
    %c5_97 = arith.constant 5 : index
    %c0_98 = arith.constant 0 : index
    %192 = vector.load %arg8[%c1_96, %c5_97, %c0_98] : memref<2x6x32xf32, #tpu.memory_space<vmem>>, vector<1x1x32xf32>
    %193 = vector.shape_cast %192 : vector<1x1x32xf32> to vector<1x32xf32>
    %cst_99 = arith.constant dense<0.000000e+00> : vector<16xf32>
    %194 = vector.multi_reduction <add>, %181, %cst_99 [1] : vector<16x32xf32> to vector<16xf32>
    %195 = vector.shape_cast %194 : vector<16xf32> to vector<16x1xf32>
    %cst_100 = arith.constant 3.200000e+01 : f32
    %196 = vector.broadcast %cst_100 : f32 to vector<16x1xf32>
    %197 = arith.divf %195, %196 : vector<16x1xf32>
    %198 = vector.broadcast %197 : vector<16x1xf32> to vector<16x32xf32>
    %199 = arith.subf %181, %198 : vector<16x32xf32>
    %200 = arith.mulf %199, %199 : vector<16x32xf32>
    %cst_101 = arith.constant dense<0.000000e+00> : vector<16xf32>
    %201 = vector.multi_reduction <add>, %200, %cst_101 [1] : vector<16x32xf32> to vector<16xf32>
    %202 = vector.shape_cast %201 : vector<16xf32> to vector<16x1xf32>
    %cst_102 = arith.constant 3.200000e+01 : f32
    %203 = vector.broadcast %cst_102 : f32 to vector<16x1xf32>
    %204 = arith.divf %202, %203 : vector<16x1xf32>
    %205 = vector.broadcast %197 : vector<16x1xf32> to vector<16x32xf32>
    %206 = arith.subf %181, %205 : vector<16x32xf32>
    %cst_103 = arith.constant 9.99999974E-6 : f32
    %207 = vector.broadcast %cst_103 : f32 to vector<16x1xf32>
    %208 = arith.addf %204, %207 : vector<16x1xf32>
    %209 = math.rsqrt %208 : vector<16x1xf32>
    %210 = vector.broadcast %209 : vector<16x1xf32> to vector<16x32xf32>
    %211 = arith.mulf %206, %210 : vector<16x32xf32>
    %212 = vector.broadcast %183 : vector<1x32xf32> to vector<16x32xf32>
    %213 = arith.mulf %211, %212 : vector<16x32xf32>
    %214 = vector.broadcast %185 : vector<1x32xf32> to vector<16x32xf32>
    %215 = arith.addf %213, %214 : vector<16x32xf32>
    %c1_104 = arith.constant 1 : index
    %c0_105 = arith.constant 0 : index
    %c0_106 = arith.constant 0 : index
    %216 = vector.load %arg3[%c1_104, %c0_105, %c0_106] : memref<2x32x96xf32, #tpu.memory_space<vmem>>, vector<1x32x96xf32>
    %217 = vector.shape_cast %216 : vector<1x32x96xf32> to vector<32x96xf32>
    %cst_107 = arith.constant dense<0.000000e+00> : vector<16x96xf32>
    %218 = tpu.matmul %215, %217, %cst_107 {dimension_numbers = #tpu.dot_dimension_numbers<[1], [0], [0], [1], [0, 0, 1, 1], [], []>} : vector<16x32xf32>, vector<32x96xf32>, vector<16x96xf32> -> vector<16x96xf32>
    %c1_108 = arith.constant 1 : index
    %c0_109 = arith.constant 0 : index
    %c0_110 = arith.constant 0 : index
    %219 = vector.load %arg4[%c1_108, %c0_109, %c0_110] : memref<2x1x96xf32, #tpu.memory_space<vmem>>, vector<1x1x96xf32>
    %220 = vector.shape_cast %219 : vector<1x1x96xf32> to vector<1x96xf32>
    %221 = vector.broadcast %220 : vector<1x96xf32> to vector<16x96xf32>
    %222 = arith.addf %218, %221 : vector<16x96xf32>
    %223 = vector.extract_strided_slice %222 {offsets = [0, 0], sizes = [16, 32], strides = [1, 1]} : vector<16x96xf32> to vector<16x32xf32>
    %224 = vector.shape_cast %223 : vector<16x32xf32> to vector<2x8x32xf32>
    %225 = vector.extract_strided_slice %222 {offsets = [0, 32], sizes = [16, 32], strides = [1, 1]} : vector<16x96xf32> to vector<16x32xf32>
    %226 = vector.shape_cast %225 : vector<16x32xf32> to vector<2x8x32xf32>
    %227 = vector.extract_strided_slice %222 {offsets = [0, 64], sizes = [16, 32], strides = [1, 1]} : vector<16x96xf32> to vector<16x32xf32>
    %228 = vector.shape_cast %227 : vector<16x32xf32> to vector<2x8x32xf32>
    %cst_111 = arith.constant 0.000000e+00 : f32
    %229 = vector.broadcast %cst_111 : f32 to vector<16x32xf32>
    %230 = vector.extract_strided_slice %224 {offsets = [0, 0, 0], sizes = [2, 8, 8], strides = [1, 1, 1]} : vector<2x8x32xf32> to vector<2x8x8xf32>
    %231 = vector.extract_strided_slice %226 {offsets = [0, 0, 0], sizes = [2, 8, 8], strides = [1, 1, 1]} : vector<2x8x32xf32> to vector<2x8x8xf32>
    "tpu.trace_start"() <{level = 10 : i32, message = "bqd,bkd->bqk"}> : () -> ()
    %cst_112 = arith.constant dense<0.000000e+00> : vector<2x8x8xf32>
    %232 = tpu.matmul %230, %231, %cst_112 {dimension_numbers = #tpu.dot_dimension_numbers<[2], [2], [1], [1], [0, 0, 0, 1, 1, 1], [0], [0]>} : vector<2x8x8xf32>, vector<2x8x8xf32>, vector<2x8x8xf32> -> vector<2x8x8xf32>
    "tpu.trace_stop"() : () -> ()
    %233 = arith.addf %232, %13 : vector<2x8x8xf32>
    %cst_113 = arith.constant dense<0xFF800000> : vector<2x8xf32>
    %234 = vector.multi_reduction <maximumf>, %233, %cst_113 [2] : vector<2x8x8xf32> to vector<2x8xf32>
    %235 = vector.shape_cast %234 : vector<2x8xf32> to vector<2x8x1xf32>
    %236 = vector.broadcast %235 : vector<2x8x1xf32> to vector<2x8x8xf32>
    %237 = arith.subf %233, %236 : vector<2x8x8xf32>
    %238 = math.exp %237 : vector<2x8x8xf32>
    %cst_114 = arith.constant dense<0.000000e+00> : vector<2x8xf32>
    %239 = vector.multi_reduction <add>, %238, %cst_114 [2] : vector<2x8x8xf32> to vector<2x8xf32>
    %240 = vector.shape_cast %239 : vector<2x8xf32> to vector<2x8x1xf32>
    %241 = vector.broadcast %240 : vector<2x8x1xf32> to vector<2x8x8xf32>
    %242 = arith.divf %238, %241 : vector<2x8x8xf32>
    %243 = vector.extract_strided_slice %228 {offsets = [0, 0, 0], sizes = [2, 8, 8], strides = [1, 1, 1]} : vector<2x8x32xf32> to vector<2x8x8xf32>
    "tpu.trace_start"() <{level = 10 : i32, message = "bqk,bkd->bqd"}> : () -> ()
    %cst_115 = arith.constant dense<0.000000e+00> : vector<2x8x8xf32>
    %244 = tpu.matmul %242, %243, %cst_115 {dimension_numbers = #tpu.dot_dimension_numbers<[2], [1], [1], [2], [0, 0, 0, 1, 1, 2], [0], [0]>} : vector<2x8x8xf32>, vector<2x8x8xf32>, vector<2x8x8xf32> -> vector<2x8x8xf32>
    "tpu.trace_stop"() : () -> ()
    %245 = vector.shape_cast %244 : vector<2x8x8xf32> to vector<16x8xf32>
    %c1_116 = arith.constant 1 : index
    %c0_117 = arith.constant 0 : index
    %c0_118 = arith.constant 0 : index
    %246 = vector.load %arg5[%c1_116, %c0_117, %c0_118] : memref<2x32x32xf32, #tpu.memory_space<vmem>>, vector<1x8x32xf32>
    %247 = vector.shape_cast %246 : vector<1x8x32xf32> to vector<8x32xf32>
    %cst_119 = arith.constant dense<0.000000e+00> : vector<16x32xf32>
    %248 = tpu.matmul %245, %247, %cst_119 {dimension_numbers = #tpu.dot_dimension_numbers<[1], [0], [0], [1], [0, 0, 1, 1], [], []>} : vector<16x8xf32>, vector<8x32xf32>, vector<16x32xf32> -> vector<16x32xf32>
    %249 = arith.addf %229, %248 : vector<16x32xf32>
    %250 = vector.extract_strided_slice %224 {offsets = [0, 0, 8], sizes = [2, 8, 8], strides = [1, 1, 1]} : vector<2x8x32xf32> to vector<2x8x8xf32>
    %251 = vector.extract_strided_slice %226 {offsets = [0, 0, 8], sizes = [2, 8, 8], strides = [1, 1, 1]} : vector<2x8x32xf32> to vector<2x8x8xf32>
    "tpu.trace_start"() <{level = 10 : i32, message = "bqd,bkd->bqk"}> : () -> ()
    %cst_120 = arith.constant dense<0.000000e+00> : vector<2x8x8xf32>
    %252 = tpu.matmul %250, %251, %cst_120 {dimension_numbers = #tpu.dot_dimension_numbers<[2], [2], [1], [1], [0, 0, 0, 1, 1, 1], [0], [0]>} : vector<2x8x8xf32>, vector<2x8x8xf32>, vector<2x8x8xf32> -> vector<2x8x8xf32>
    "tpu.trace_stop"() : () -> ()
    %253 = arith.addf %252, %13 : vector<2x8x8xf32>
    %cst_121 = arith.constant dense<0xFF800000> : vector<2x8xf32>
    %254 = vector.multi_reduction <maximumf>, %253, %cst_121 [2] : vector<2x8x8xf32> to vector<2x8xf32>
    %255 = vector.shape_cast %254 : vector<2x8xf32> to vector<2x8x1xf32>
    %256 = vector.broadcast %255 : vector<2x8x1xf32> to vector<2x8x8xf32>
    %257 = arith.subf %253, %256 : vector<2x8x8xf32>
    %258 = math.exp %257 : vector<2x8x8xf32>
    %cst_122 = arith.constant dense<0.000000e+00> : vector<2x8xf32>
    %259 = vector.multi_reduction <add>, %258, %cst_122 [2] : vector<2x8x8xf32> to vector<2x8xf32>
    %260 = vector.shape_cast %259 : vector<2x8xf32> to vector<2x8x1xf32>
    %261 = vector.broadcast %260 : vector<2x8x1xf32> to vector<2x8x8xf32>
    %262 = arith.divf %258, %261 : vector<2x8x8xf32>
    %263 = vector.extract_strided_slice %228 {offsets = [0, 0, 8], sizes = [2, 8, 8], strides = [1, 1, 1]} : vector<2x8x32xf32> to vector<2x8x8xf32>
    "tpu.trace_start"() <{level = 10 : i32, message = "bqk,bkd->bqd"}> : () -> ()
    %cst_123 = arith.constant dense<0.000000e+00> : vector<2x8x8xf32>
    %264 = tpu.matmul %262, %263, %cst_123 {dimension_numbers = #tpu.dot_dimension_numbers<[2], [1], [1], [2], [0, 0, 0, 1, 1, 2], [0], [0]>} : vector<2x8x8xf32>, vector<2x8x8xf32>, vector<2x8x8xf32> -> vector<2x8x8xf32>
    "tpu.trace_stop"() : () -> ()
    %265 = vector.shape_cast %264 : vector<2x8x8xf32> to vector<16x8xf32>
    %c1_124 = arith.constant 1 : index
    %c8_125 = arith.constant 8 : index
    %c0_126 = arith.constant 0 : index
    %266 = vector.load %arg5[%c1_124, %c8_125, %c0_126] : memref<2x32x32xf32, #tpu.memory_space<vmem>>, vector<1x8x32xf32>
    %267 = vector.shape_cast %266 : vector<1x8x32xf32> to vector<8x32xf32>
    %cst_127 = arith.constant dense<0.000000e+00> : vector<16x32xf32>
    %268 = tpu.matmul %265, %267, %cst_127 {dimension_numbers = #tpu.dot_dimension_numbers<[1], [0], [0], [1], [0, 0, 1, 1], [], []>} : vector<16x8xf32>, vector<8x32xf32>, vector<16x32xf32> -> vector<16x32xf32>
    %269 = arith.addf %249, %268 : vector<16x32xf32>
    %270 = vector.extract_strided_slice %224 {offsets = [0, 0, 16], sizes = [2, 8, 8], strides = [1, 1, 1]} : vector<2x8x32xf32> to vector<2x8x8xf32>
    %271 = vector.extract_strided_slice %226 {offsets = [0, 0, 16], sizes = [2, 8, 8], strides = [1, 1, 1]} : vector<2x8x32xf32> to vector<2x8x8xf32>
    "tpu.trace_start"() <{level = 10 : i32, message = "bqd,bkd->bqk"}> : () -> ()
    %cst_128 = arith.constant dense<0.000000e+00> : vector<2x8x8xf32>
    %272 = tpu.matmul %270, %271, %cst_128 {dimension_numbers = #tpu.dot_dimension_numbers<[2], [2], [1], [1], [0, 0, 0, 1, 1, 1], [0], [0]>} : vector<2x8x8xf32>, vector<2x8x8xf32>, vector<2x8x8xf32> -> vector<2x8x8xf32>
    "tpu.trace_stop"() : () -> ()
    %273 = arith.addf %272, %13 : vector<2x8x8xf32>
    %cst_129 = arith.constant dense<0xFF800000> : vector<2x8xf32>
    %274 = vector.multi_reduction <maximumf>, %273, %cst_129 [2] : vector<2x8x8xf32> to vector<2x8xf32>
    %275 = vector.shape_cast %274 : vector<2x8xf32> to vector<2x8x1xf32>
    %276 = vector.broadcast %275 : vector<2x8x1xf32> to vector<2x8x8xf32>
    %277 = arith.subf %273, %276 : vector<2x8x8xf32>
    %278 = math.exp %277 : vector<2x8x8xf32>
    %cst_130 = arith.constant dense<0.000000e+00> : vector<2x8xf32>
    %279 = vector.multi_reduction <add>, %278, %cst_130 [2] : vector<2x8x8xf32> to vector<2x8xf32>
    %280 = vector.shape_cast %279 : vector<2x8xf32> to vector<2x8x1xf32>
    %281 = vector.broadcast %280 : vector<2x8x1xf32> to vector<2x8x8xf32>
    %282 = arith.divf %278, %281 : vector<2x8x8xf32>
    %283 = vector.extract_strided_slice %228 {offsets = [0, 0, 16], sizes = [2, 8, 8], strides = [1, 1, 1]} : vector<2x8x32xf32> to vector<2x8x8xf32>
    "tpu.trace_start"() <{level = 10 : i32, message = "bqk,bkd->bqd"}> : () -> ()
    %cst_131 = arith.constant dense<0.000000e+00> : vector<2x8x8xf32>
    %284 = tpu.matmul %282, %283, %cst_131 {dimension_numbers = #tpu.dot_dimension_numbers<[2], [1], [1], [2], [0, 0, 0, 1, 1, 2], [0], [0]>} : vector<2x8x8xf32>, vector<2x8x8xf32>, vector<2x8x8xf32> -> vector<2x8x8xf32>
    "tpu.trace_stop"() : () -> ()
    %285 = vector.shape_cast %284 : vector<2x8x8xf32> to vector<16x8xf32>
    %c1_132 = arith.constant 1 : index
    %c16_133 = arith.constant 16 : index
    %c0_134 = arith.constant 0 : index
    %286 = vector.load %arg5[%c1_132, %c16_133, %c0_134] : memref<2x32x32xf32, #tpu.memory_space<vmem>>, vector<1x8x32xf32>
    %287 = vector.shape_cast %286 : vector<1x8x32xf32> to vector<8x32xf32>
    %cst_135 = arith.constant dense<0.000000e+00> : vector<16x32xf32>
    %288 = tpu.matmul %285, %287, %cst_135 {dimension_numbers = #tpu.dot_dimension_numbers<[1], [0], [0], [1], [0, 0, 1, 1], [], []>} : vector<16x8xf32>, vector<8x32xf32>, vector<16x32xf32> -> vector<16x32xf32>
    %289 = arith.addf %269, %288 : vector<16x32xf32>
    %290 = vector.extract_strided_slice %224 {offsets = [0, 0, 24], sizes = [2, 8, 8], strides = [1, 1, 1]} : vector<2x8x32xf32> to vector<2x8x8xf32>
    %291 = vector.extract_strided_slice %226 {offsets = [0, 0, 24], sizes = [2, 8, 8], strides = [1, 1, 1]} : vector<2x8x32xf32> to vector<2x8x8xf32>
    "tpu.trace_start"() <{level = 10 : i32, message = "bqd,bkd->bqk"}> : () -> ()
    %cst_136 = arith.constant dense<0.000000e+00> : vector<2x8x8xf32>
    %292 = tpu.matmul %290, %291, %cst_136 {dimension_numbers = #tpu.dot_dimension_numbers<[2], [2], [1], [1], [0, 0, 0, 1, 1, 1], [0], [0]>} : vector<2x8x8xf32>, vector<2x8x8xf32>, vector<2x8x8xf32> -> vector<2x8x8xf32>
    "tpu.trace_stop"() : () -> ()
    %293 = arith.addf %292, %13 : vector<2x8x8xf32>
    %cst_137 = arith.constant dense<0xFF800000> : vector<2x8xf32>
    %294 = vector.multi_reduction <maximumf>, %293, %cst_137 [2] : vector<2x8x8xf32> to vector<2x8xf32>
    %295 = vector.shape_cast %294 : vector<2x8xf32> to vector<2x8x1xf32>
    %296 = vector.broadcast %295 : vector<2x8x1xf32> to vector<2x8x8xf32>
    %297 = arith.subf %293, %296 : vector<2x8x8xf32>
    %298 = math.exp %297 : vector<2x8x8xf32>
    %cst_138 = arith.constant dense<0.000000e+00> : vector<2x8xf32>
    %299 = vector.multi_reduction <add>, %298, %cst_138 [2] : vector<2x8x8xf32> to vector<2x8xf32>
    %300 = vector.shape_cast %299 : vector<2x8xf32> to vector<2x8x1xf32>
    %301 = vector.broadcast %300 : vector<2x8x1xf32> to vector<2x8x8xf32>
    %302 = arith.divf %298, %301 : vector<2x8x8xf32>
    %303 = vector.extract_strided_slice %228 {offsets = [0, 0, 24], sizes = [2, 8, 8], strides = [1, 1, 1]} : vector<2x8x32xf32> to vector<2x8x8xf32>
    "tpu.trace_start"() <{level = 10 : i32, message = "bqk,bkd->bqd"}> : () -> ()
    %cst_139 = arith.constant dense<0.000000e+00> : vector<2x8x8xf32>
    %304 = tpu.matmul %302, %303, %cst_139 {dimension_numbers = #tpu.dot_dimension_numbers<[2], [1], [1], [2], [0, 0, 0, 1, 1, 2], [0], [0]>} : vector<2x8x8xf32>, vector<2x8x8xf32>, vector<2x8x8xf32> -> vector<2x8x8xf32>
    "tpu.trace_stop"() : () -> ()
    %305 = vector.shape_cast %304 : vector<2x8x8xf32> to vector<16x8xf32>
    %c1_140 = arith.constant 1 : index
    %c24_141 = arith.constant 24 : index
    %c0_142 = arith.constant 0 : index
    %306 = vector.load %arg5[%c1_140, %c24_141, %c0_142] : memref<2x32x32xf32, #tpu.memory_space<vmem>>, vector<1x8x32xf32>
    %307 = vector.shape_cast %306 : vector<1x8x32xf32> to vector<8x32xf32>
    %cst_143 = arith.constant dense<0.000000e+00> : vector<16x32xf32>
    %308 = tpu.matmul %305, %307, %cst_143 {dimension_numbers = #tpu.dot_dimension_numbers<[1], [0], [0], [1], [0, 0, 1, 1], [], []>} : vector<16x8xf32>, vector<8x32xf32>, vector<16x32xf32> -> vector<16x32xf32>
    %309 = arith.addf %289, %308 : vector<16x32xf32>
    %310 = arith.addf %181, %309 : vector<16x32xf32>
    %311 = vector.broadcast %187 : vector<1x32xf32> to vector<16x32xf32>
    %312 = arith.addf %310, %311 : vector<16x32xf32>
    %cst_144 = arith.constant dense<0.000000e+00> : vector<16xf32>
    %313 = vector.multi_reduction <add>, %312, %cst_144 [1] : vector<16x32xf32> to vector<16xf32>
    %314 = vector.shape_cast %313 : vector<16xf32> to vector<16x1xf32>
    %cst_145 = arith.constant 3.200000e+01 : f32
    %315 = vector.broadcast %cst_145 : f32 to vector<16x1xf32>
    %316 = arith.divf %314, %315 : vector<16x1xf32>
    %317 = vector.broadcast %316 : vector<16x1xf32> to vector<16x32xf32>
    %318 = arith.subf %312, %317 : vector<16x32xf32>
    %319 = arith.mulf %318, %318 : vector<16x32xf32>
    %cst_146 = arith.constant dense<0.000000e+00> : vector<16xf32>
    %320 = vector.multi_reduction <add>, %319, %cst_146 [1] : vector<16x32xf32> to vector<16xf32>
    %321 = vector.shape_cast %320 : vector<16xf32> to vector<16x1xf32>
    %cst_147 = arith.constant 3.200000e+01 : f32
    %322 = vector.broadcast %cst_147 : f32 to vector<16x1xf32>
    %323 = arith.divf %321, %322 : vector<16x1xf32>
    %324 = vector.broadcast %316 : vector<16x1xf32> to vector<16x32xf32>
    %325 = arith.subf %312, %324 : vector<16x32xf32>
    %cst_148 = arith.constant 9.99999974E-6 : f32
    %326 = vector.broadcast %cst_148 : f32 to vector<16x1xf32>
    %327 = arith.addf %323, %326 : vector<16x1xf32>
    %328 = math.rsqrt %327 : vector<16x1xf32>
    %329 = vector.broadcast %328 : vector<16x1xf32> to vector<16x32xf32>
    %330 = arith.mulf %325, %329 : vector<16x32xf32>
    %331 = vector.broadcast %189 : vector<1x32xf32> to vector<16x32xf32>
    %332 = arith.mulf %330, %331 : vector<16x32xf32>
    %333 = vector.broadcast %191 : vector<1x32xf32> to vector<16x32xf32>
    %334 = arith.addf %332, %333 : vector<16x32xf32>
    %c1_149 = arith.constant 1 : index
    %c0_150 = arith.constant 0 : index
    %c0_151 = arith.constant 0 : index
    %335 = vector.load %arg6[%c1_149, %c0_150, %c0_151] : memref<2x32x64xf32, #tpu.memory_space<vmem>>, vector<1x32x64xf32>
    %336 = vector.shape_cast %335 : vector<1x32x64xf32> to vector<32x64xf32>
    %cst_152 = arith.constant dense<0.000000e+00> : vector<16x64xf32>
    %337 = tpu.matmul %334, %336, %cst_152 {dimension_numbers = #tpu.dot_dimension_numbers<[1], [0], [0], [1], [0, 0, 1, 1], [], []>} : vector<16x32xf32>, vector<32x64xf32>, vector<16x64xf32> -> vector<16x64xf32>
    %c1_153 = arith.constant 1 : index
    %c0_154 = arith.constant 0 : index
    %c0_155 = arith.constant 0 : index
    %338 = vector.load %arg9[%c1_153, %c0_154, %c0_155] : memref<2x1x64xf32, #tpu.memory_space<vmem>>, vector<1x1x64xf32>
    %339 = vector.shape_cast %338 : vector<1x1x64xf32> to vector<1x64xf32>
    %340 = vector.broadcast %339 : vector<1x64xf32> to vector<16x64xf32>
    %341 = arith.addf %337, %340 : vector<16x64xf32>
    %cst_156 = arith.constant 0.000000e+00 : f32
    %342 = vector.broadcast %cst_156 : f32 to vector<16x64xf32>
    %343 = arith.maximumf %341, %342 : vector<16x64xf32>
    %c1_157 = arith.constant 1 : index
    %c0_158 = arith.constant 0 : index
    %c0_159 = arith.constant 0 : index
    %344 = vector.load %arg7[%c1_157, %c0_158, %c0_159] : memref<2x64x32xf32, #tpu.memory_space<vmem>>, vector<1x64x32xf32>
    %345 = vector.shape_cast %344 : vector<1x64x32xf32> to vector<64x32xf32>
    %cst_160 = arith.constant dense<0.000000e+00> : vector<16x32xf32>
    %346 = tpu.matmul %343, %345, %cst_160 {dimension_numbers = #tpu.dot_dimension_numbers<[1], [0], [0], [1], [0, 0, 1, 1], [], []>} : vector<16x64xf32>, vector<64x32xf32>, vector<16x32xf32> -> vector<16x32xf32>
    %347 = arith.addf %312, %346 : vector<16x32xf32>
    %348 = vector.broadcast %193 : vector<1x32xf32> to vector<16x32xf32>
    %349 = arith.addf %347, %348 : vector<16x32xf32>
    %c0_161 = arith.constant 0 : index
    %c0_162 = arith.constant 0 : index
    %350 = vector.load %arg10[%c0_161, %c0_162] : memref<2x32xf32, #tpu.memory_space<vmem>>, vector<1x32xf32>
    %c1_163 = arith.constant 1 : index
    %c0_164 = arith.constant 0 : index
    %351 = vector.load %arg10[%c1_163, %c0_164] : memref<2x32xf32, #tpu.memory_space<vmem>>, vector<1x32xf32>
    %cst_165 = arith.constant dense<0.000000e+00> : vector<16xf32>
    %352 = vector.multi_reduction <add>, %349, %cst_165 [1] : vector<16x32xf32> to vector<16xf32>
    %353 = vector.shape_cast %352 : vector<16xf32> to vector<16x1xf32>
    %cst_166 = arith.constant 3.200000e+01 : f32
    %354 = vector.broadcast %cst_166 : f32 to vector<16x1xf32>
    %355 = arith.divf %353, %354 : vector<16x1xf32>
    %356 = vector.broadcast %355 : vector<16x1xf32> to vector<16x32xf32>
    %357 = arith.subf %349, %356 : vector<16x32xf32>
    %358 = arith.mulf %357, %357 : vector<16x32xf32>
    %cst_167 = arith.constant dense<0.000000e+00> : vector<16xf32>
    %359 = vector.multi_reduction <add>, %358, %cst_167 [1] : vector<16x32xf32> to vector<16xf32>
    %360 = vector.shape_cast %359 : vector<16xf32> to vector<16x1xf32>
    %cst_168 = arith.constant 3.200000e+01 : f32
    %361 = vector.broadcast %cst_168 : f32 to vector<16x1xf32>
    %362 = arith.divf %360, %361 : vector<16x1xf32>
    %363 = vector.broadcast %355 : vector<16x1xf32> to vector<16x32xf32>
    %364 = arith.subf %349, %363 : vector<16x32xf32>
    %cst_169 = arith.constant 9.99999974E-6 : f32
    %365 = vector.broadcast %cst_169 : f32 to vector<16x1xf32>
    %366 = arith.addf %362, %365 : vector<16x1xf32>
    %367 = math.rsqrt %366 : vector<16x1xf32>
    %368 = vector.broadcast %367 : vector<16x1xf32> to vector<16x32xf32>
    %369 = arith.mulf %364, %368 : vector<16x32xf32>
    %370 = vector.broadcast %350 : vector<1x32xf32> to vector<16x32xf32>
    %371 = arith.mulf %369, %370 : vector<16x32xf32>
    %372 = vector.broadcast %351 : vector<1x32xf32> to vector<16x32xf32>
    %373 = arith.addf %371, %372 : vector<16x32xf32>
    %c0_170 = arith.constant 0 : index
    %c0_171 = arith.constant 0 : index
    %374 = vector.load %arg11[%c0_170, %c0_171] : memref<16x32xf32, #tpu.memory_space<vmem>>, vector<16x32xf32>
    tpu.vector_store %arg11[%c0_170, %c0_171], %373 {strides = array<i32>} : memref<16x32xf32, #tpu.memory_space<vmem>>, vector<16x32xf32>,
    return
  }
}

</mosaic_0001>

<llo_original>
// kernel: transformer_forward.1
$region0: #{transformer_forward.1}
  #allocation0 [shape = 'u32[]', space=smem, size = 0x4, offset = 0x4, fixed_abs, tag = 'smem constant byte address 0x4 - core index']
  #allocation1 [shape = 'u32[144,128]{1,0:T(1,128)}', space=vmem, size = 0x12000, scoped, tag = 'internal scratch']
  %s0 = inlined_call_operand.vmem [shape: f32[2,8,32], index: 0, kind: input, shape index: {}]
  %s1 = inlined_call_operand.vmem [shape: f32[8,32], index: 1, kind: input, shape index: {}]
  %s2 = inlined_call_operand.vmem [shape: f32[2,1,8], index: 2, kind: input, shape index: {}]
  %s3 = inlined_call_operand.vmem [shape: f32[2,32,96], index: 3, kind: input, shape index: {}]
  %s4 = inlined_call_operand.vmem [shape: f32[2,1,96], index: 4, kind: input, shape index: {}]
  %s5 = inlined_call_operand.vmem [shape: f32[2,32,32], index: 5, kind: input, shape index: {}]
  %s6 = inlined_call_operand.vmem [shape: f32[2,32,64], index: 6, kind: input, shape index: {}]
  %s7 = inlined_call_operand.vmem [shape: f32[2,64,32], index: 7, kind: input, shape index: {}]
  %s8 = inlined_call_operand.vmem [shape: f32[2,6,32], index: 8, kind: input, shape index: {}]
  %s9 = inlined_call_operand.vmem [shape: f32[2,1,64], index: 9, kind: input, shape index: {}]
  %s10 = inlined_call_operand.vmem [shape: f32[2,32], index: 10, kind: input, shape index: {}]
  %s11 = inlined_call_operand.hbm [shape: f32[16,32], index: 11, kind: output, shape index: {}]
  %s12 = sld [smem:[#allocation0]]
  $region54: #{transformer_forward.1} parent=0
    _
  %s14 = ssub.s32 1, %s12
  %s15 = scalar_select 0, %s14, %s12
  $region1: #{transformer_forward.1} parent=0
    #allocation2 [shape = 'u8[8192]{0}', space=vmem, size = 0x2000, scoped, tag = 'output window, operand 0, single buffered']
    #allocation3 [shape = 's32[1]{0}', space=sflag, size = 0x4, scoped, tag = 'scoped memory for transformer_forward.1']
    %16 = vsyncpa [#allocation3], 0
    // Predicated region
    $region2: #{transformer_forward.1} parent=1 // pred_check
      _
    $region3: #{transformer_forward.1} parent=1 // pred_check_branch
      %18 = sbr.rel (0) target = $region5
    $region4: #{transformer_forward.1} parent=1 // pred_region
      _
    $region5: #{transformer_forward.1} parent=1 // pred_fallthru
      _
    // Predicated region
    $region6: #{transformer_forward.1} parent=1 // pred_check
      _
    $region7: #{transformer_forward.1} parent=1 // pred_check_branch
      %20 = sbr.rel (0) target = $region9
    $region8: #{transformer_forward.1} parent=1 // pred_region
      _
    $region9: #{transformer_forward.1} parent=1 // pred_fallthru
      _
    // Predicated region
    $region10: #{transformer_forward.1} parent=1 // pred_check
      _
    $region11: #{transformer_forward.1} parent=1 // pred_check_branch
      %22 = sbr.rel (0) target = $region13
    $region12: #{transformer_forward.1} parent=1 // pred_region
      _
    $region13: #{transformer_forward.1} parent=1 // pred_fallthru
      _
    // Predicated region
    $region14: #{transformer_forward.1} parent=1 // pred_check
      _
    $region15: #{transformer_forward.1} parent=1 // pred_check_branch
      %24 = sbr.rel (0) target = $region17
    $region16: #{transformer_forward.1} parent=1 // pred_region
      _
    $region17: #{transformer_forward.1} parent=1 // pred_fallthru
      _
    // Predicated region
    $region18: #{transformer_forward.1} parent=1 // pred_check
      _
    $region19: #{transformer_forward.1} parent=1 // pred_check_branch
      %26 = sbr.rel (0) target = $region21
    $region20: #{transformer_forward.1} parent=1 // pred_region
      _
    $region21: #{transformer_forward.1} parent=1 // pred_fallthru
      _
    // Predicated region
    $region22: #{transformer_forward.1} parent=1 // pred_check
      _
    $region23: #{transformer_forward.1} parent=1 // pred_check_branch
      %28 = sbr.rel (0) target = $region25
    $region24: #{transformer_forward.1} parent=1 // pred_region
      _
    $region25: #{transformer_forward.1} parent=1 // pred_fallthru
      _
    // Predicated region
    $region26: #{transformer_forward.1} parent=1 // pred_check
      _
    $region27: #{transformer_forward.1} parent=1 // pred_check_branch
      %30 = sbr.rel (0) target = $region29
    $region28: #{transformer_forward.1} parent=1 // pred_region
      _
    $region29: #{transformer_forward.1} parent=1 // pred_fallthru
      _
    // Predicated region
    $region30: #{transformer_forward.1} parent=1 // pred_check
      _
    $region31: #{transformer_forward.1} parent=1 // pred_check_branch
      %32 = sbr.rel (0) target = $region33
    $region32: #{transformer_forward.1} parent=1 // pred_region
      _
    $region33: #{transformer_forward.1} parent=1 // pred_fallthru
      _
    // Predicated region
    $region34: #{transformer_forward.1} parent=1 // pred_check
      _
    $region35: #{transformer_forward.1} parent=1 // pred_check_branch
      %34 = sbr.rel (0) target = $region37
    $region36: #{transformer_forward.1} parent=1 // pred_region
      _
    $region37: #{transformer_forward.1} parent=1 // pred_fallthru
      _
    // Predicated region
    $region38: #{transformer_forward.1} parent=1 // pred_check
      _
    $region39: #{transformer_forward.1} parent=1 // pred_check_branch
      %36 = sbr.rel (0) target = $region41
    $region40: #{transformer_forward.1} parent=1 // pred_region
      _
    $region41: #{transformer_forward.1} parent=1 // pred_fallthru
      _
    // Predicated region
    $region42: #{transformer_forward.1} parent=1 // pred_check
      _
    $region43: #{transformer_forward.1} parent=1 // pred_check_branch
      %38 = sbr.rel (0) target = $region45
    $region44: #{transformer_forward.1} parent=1 // pred_region
      _
    $region45: #{transformer_forward.1} parent=1 // pred_fallthru
      _
    %v39 = vld [vmem:[%s0] sm:$0xff]
    %v40 = vld [vmem:[%s0 + $0x8] sm:$0xff]
    %v41 = vld [vmem:[%s1] sm:$0xff]
    %v42 = vadd.f32 %v39, %v41
    %v43 = vadd.f32 %v40, %v41
    %v44 = vld [vmem:[%s2] sm:$0x1]
    %v45 = vld [vmem:[%s2 + $0x1] sm:$0x1]
    %vm46 = vcmp.lt.f32.partialorder %v44, 0.5
    %vm47 = vcmp.lt.f32.partialorder %v45, 0.5
    %v48 = vsel %vm46, -1e+09, 0.0
    %v49 = vsel %vm47, -1e+09, 0.0
    %v52 = vlaneseq
    %v53 = vshrl.u32 %v52, 7
    %v54 = vsub.s32 0, %v53
    %v55 = vrot.slane %v48, %v54
    %v56 = vlaneseq
    %v57 = vshrl.u32 %v56, 7
    %v58 = vsub.s32 0, %v57
    %v59 = vrot.slane %v49, %v58
    %v62 = vld [vmem:[%s8] sm:$0x1]
    %v63 = vld [vmem:[%s8 + $0x1] sm:$0x1]
    %v64 = vld [vmem:[%s8 + $0x2] sm:$0x1]
    %v65 = vld [vmem:[%s8 + $0x3] sm:$0x1]
    %v66 = vld [vmem:[%s8 + $0x4] sm:$0x1]
    %v67 = vld [vmem:[%s8 + $0x5] sm:$0x1]
    %vm68 = vcmask 261120
    %v69 = vsel %vm68, %v42, 0.0
    %70 = vadd.xlane.f32.xlu0 %v69
    %v71 = vpop.xlane.xlu0 %70
    %v72 = vsel %vm68, %v43, 0.0
    %73 = vadd.xlane.f32.xlu0 %v72
    %v74 = vpop.xlane.xlu0 %73
    %v75 = vrcp.pop 32.0
    %v76 = vmul.f32 %v71, %v75
    %v77 = vmul.f32 %v74, %v75
    %v78 = vsub.f32 %v42, %v76
    %v79 = vsub.f32 %v43, %v77
    %v80 = vmul.f32 %v78, %v78
    %v81 = vmul.f32 %v79, %v79
    %v82 = vsel %vm68, %v80, 0.0
    %83 = vadd.xlane.f32.xlu0 %v82
    %v84 = vpop.xlane.xlu0 %83
    %v85 = vsel %vm68, %v81, 0.0
    %86 = vadd.xlane.f32.xlu0 %v85
    %v87 = vpop.xlane.xlu0 %86
    %v88 = vmul.f32 %v84, %v75
    %v89 = vmul.f32 %v87, %v75
    %v90 = vadd.f32 %v88, 1e-05
    %v91 = vadd.f32 %v89, 1e-05
    %v92 = vrsqrt.pop %v90
    %v93 = vrsqrt.pop %v91
    %v94 = vmul.f32 %v78, %v92
    %v95 = vmul.f32 %v79, %v93
    %v96 = vlaneseq
    %v97 = vshrl.u32 %v96, 7
    %v98 = vsub.s32 0, %v97
    %v99 = vrot.slane %v62, %v98
    %v100 = vmul.f32 %v94, %v99
    %v101 = vmul.f32 %v95, %v99
    %v102 = vlaneseq
    %v103 = vshrl.u32 %v102, 7
    %v104 = vsub.s32 0, %v103
    %v105 = vrot.slane %v63, %v104
    %v106 = vadd.f32 %v100, %v105
    %v107 = vadd.f32 %v101, %v105
    %v108 = vld [vmem:[%s3] sm:$0xff]
    %v109 = vld [vmem:[%s3 + $0x8] sm:$0xff]
    %v110 = vld [vmem:[%s3 + $0x10] sm:$0xff]
    %v111 = vld [vmem:[%s3 + $0x18] sm:$0xff]
    %v112 = vld [vmem:[%s4] sm:$0x1]
    %v114 = vlaneseq
    %v115 = vshrl.u32 %v114, 7
    %v116 = vsub.s32 0, %v115
    %v117 = vrot.slane %v112, %v116
    %v120 = vsel %vm68, %v106, 0
    %v123 = vsel %vm68, %v107, 0
    %125 = vmatprep.subr.mxu0 0.0
    %126 = vmatpush1.msra.mxu0 0.0
    %127 = vmatprep.subr.mxu0 0.0
    %128 = vmatpush1.msra.mxu0 0.0
    %129 = vmatprep.subr.mxu0 0.0
    %130 = vmatpush1.msra.mxu0 0.0
    %131 = vmatprep.subr.mxu0 0.0
    %132 = vmatpush1.msra.mxu0 0.0
    %133 = vmatprep.subr.mxu0 0.0
    %134 = vmatpush1.msra.mxu0 0.0
    %135 = vmatprep.subr.mxu0 0.0
    %136 = vmatpush1.msra.mxu0 0.0
    %137 = vmatprep.subr.mxu0 0.0
    %138 = vmatpush1.msra.mxu0 0.0
    %139 = vmatprep.subr.mxu0 0.0
    %140 = vmatpush1.msra.mxu0 0.0
    %141 = vmatprep.subr.mxu0 0.0
    %142 = vmatpush1.msra.mxu0 0.0
    %143 = vmatprep.subr.mxu0 0.0
    %144 = vmatpush1.msra.mxu0 0.0
    %145 = vmatprep.subr.mxu0 0.0
    %146 = vmatpush1.msra.mxu0 0.0
    %147 = vmatprep.subr.mxu0 0.0
    %148 = vmatpush1.msra.mxu0 0.0
    %149 = vmatprep.subr.mxu0 0.0
    %150 = vmatpush1.msra.mxu0 %v111
    %151 = vmatprep.subr.mxu0 0.0
    %152 = vmatpush1.msra.mxu0 %v110
    %153 = vmatprep.subr.mxu0 0.0
    %154 = vmatpush1.msra.mxu0 %v109
    %155 = vmatprep.subr.mxu0 0.0
    %156 = vmatpush1.msra.mxu0 %v108
    %157 = vmatprep.subr.mxu0 0.0
    %158 = vmatpush2.msra.mxu0 0.0
    %159 = vmatprep.subr.mxu0 0.0
    %160 = vmatpush2.msra.mxu0 0.0
    %161 = vmatprep.subr.mxu0 0.0
    %162 = vmatpush2.msra.mxu0 0.0
    %163 = vmatprep.subr.mxu0 0.0
    %164 = vmatpush2.msra.mxu0 0.0
    %165 = vmatprep.subr.mxu0 0.0
    %166 = vmatpush2.msra.mxu0 0.0
    %167 = vmatprep.subr.mxu0 0.0
    %168 = vmatpush2.msra.mxu0 0.0
    %169 = vmatprep.subr.mxu0 0.0
    %170 = vmatpush2.msra.mxu0 0.0
    %171 = vmatprep.subr.mxu0 0.0
    %172 = vmatpush2.msra.mxu0 0.0
    %173 = vmatprep.subr.mxu0 0.0
    %174 = vmatpush2.msra.mxu0 0.0
    %175 = vmatprep.subr.mxu0 0.0
    %176 = vmatpush2.msra.mxu0 0.0
    %177 = vmatprep.subr.mxu0 0.0
    %178 = vmatpush2.msra.mxu0 0.0
    %179 = vmatprep.subr.mxu0 0.0
    %180 = vmatpush2.msra.mxu0 0.0
    %181 = vmatprep.subr.mxu0 0.0
    %182 = vmatpush2.msra.mxu0 0.0
    %183 = vmatprep.subr.mxu0 0.0
    %184 = vmatpush2.msra.mxu0 0.0
    %185 = vmatprep.subr.mxu0 0.0
    %186 = vmatpush2.msra.mxu0 0.0
    %187 = vmatprep.subr.mxu0 0.0
    %188 = vmatpush2.msra.mxu0 0.0
    %189 = vmatprep.mubr.f32.mxu0 0.0
    %190 = vmatmul.mubr.f32.gmra.mxu0 %v120
    %v191 = vpop.f32.mrf.mxu0
    %v192 = vadd.f32 %v117, %v191
    %v193 = vpop.f32.mrf.mxu0
    %194 = vmatprep.mubr.f32.mxu0 0.0
    %195 = vmatmul.mubr.f32.gmra.mxu0 %v123
    %v196 = vpop.f32.mrf.mxu0
    %v197 = vadd.f32 %v117, %v196
    %v198 = vpop.f32.mrf.mxu0
    %199 = vdwg.mxu0
    %201 = vrot.lane.b32.xlu0 %v192, 96
    %v202 = vpop.permute.xlu0 %201
    %vm203 = vcmask 64512
    %v204 = vsel %vm203, %v192, 0
    %v206 = vsel %vm203, %v202, 0
    %208 = vmatprep.subr.mxu0 0.0
    %209 = vmatpush1.xpose.msra.mxu0 0.0
    %210 = vmatprep.subr.mxu0 0.0
    %211 = vmatpush1.xpose.msra.mxu0 0.0
    %212 = vmatprep.subr.mxu0 0.0
    %213 = vmatpush1.xpose.msra.mxu0 0.0
    %214 = vmatprep.subr.mxu0 0.0
    %215 = vmatpush1.xpose.msra.mxu0 0.0
    %216 = vmatprep.subr.mxu0 0.0
    %217 = vmatpush1.xpose.msra.mxu0 0.0
    %218 = vmatprep.subr.mxu0 0.0
    %219 = vmatpush1.xpose.msra.mxu0 0.0
    %220 = vmatprep.subr.mxu0 0.0
    %221 = vmatpush1.xpose.msra.mxu0 0.0
    %222 = vmatprep.subr.mxu0 0.0
    %223 = vmatpush1.xpose.msra.mxu0 0.0
    %224 = vmatprep.subr.mxu0 0.0
    %225 = vmatpush1.xpose.msra.mxu0 0.0
    %226 = vmatprep.subr.mxu0 0.0
    %227 = vmatpush1.xpose.msra.mxu0 0.0
    %228 = vmatprep.subr.mxu0 0.0
    %229 = vmatpush1.xpose.msra.mxu0 0.0
    %230 = vmatprep.subr.mxu0 0.0
    %231 = vmatpush1.xpose.msra.mxu0 0.0
    %232 = vmatprep.subr.mxu0 0.0
    %233 = vmatpush1.xpose.msra.mxu0 0.0
    %234 = vmatprep.subr.mxu0 0.0
    %235 = vmatpush1.xpose.msra.mxu0 0.0
    %236 = vmatprep.subr.mxu0 0.0
    %237 = vmatpush1.xpose.msra.mxu0 0.0
    %238 = vmatprep.subr.mxu0 0.0
    %239 = vmatpush1.xpose.msra.mxu0 %v206
    %240 = vmatprep.subr.mxu0 0.0
    %241 = vmatpush2.xpose.msra.mxu0 0.0
    %242 = vmatprep.subr.mxu0 0.0
    %243 = vmatpush2.xpose.msra.mxu0 0.0
    %244 = vmatprep.subr.mxu0 0.0
    %245 = vmatpush2.xpose.msra.mxu0 0.0
    %246 = vmatprep.subr.mxu0 0.0
    %247 = vmatpush2.xpose.msra.mxu0 0.0
    %248 = vmatprep.subr.mxu0 0.0
    %249 = vmatpush2.xpose.msra.mxu0 0.0
    %250 = vmatprep.subr.mxu0 0.0
    %251 = vmatpush2.xpose.msra.mxu0 0.0
    %252 = vmatprep.subr.mxu0 0.0
    %253 = vmatpush2.xpose.msra.mxu0 0.0
    %254 = vmatprep.subr.mxu0 0.0
    %255 = vmatpush2.xpose.msra.mxu0 0.0
    %256 = vmatprep.subr.mxu0 0.0
    %257 = vmatpush2.xpose.msra.mxu0 0.0
    %258 = vmatprep.subr.mxu0 0.0
    %259 = vmatpush2.xpose.msra.mxu0 0.0
    %260 = vmatprep.subr.mxu0 0.0
    %261 = vmatpush2.xpose.msra.mxu0 0.0
    %262 = vmatprep.subr.mxu0 0.0
    %263 = vmatpush2.xpose.msra.mxu0 0.0
    %264 = vmatprep.subr.mxu0 0.0
    %265 = vmatpush2.xpose.msra.mxu0 0.0
    %266 = vmatprep.subr.mxu0 0.0
    %267 = vmatpush2.xpose.msra.mxu0 0.0
    %268 = vmatprep.subr.mxu0 0.0
    %269 = vmatpush2.xpose.msra.mxu0 0.0
    %270 = vmatprep.subr.mxu0 0.0
    %271 = vmatpush2.xpose.msra.mxu0 0.0
    %272 = vmatprep.mubr.f32.mxu0 0.0
    %273 = vmatmul.mubr.f32.gmra.mxu0 %v204
    %v274 = vpop.f32.mrf.mxu0
    %v275 = vadd.f32 %v55, %v274
    %v276 = vpop.f32.mrf.mxu0
    %277 = vdwg.mxu0
    %279 = vrot.lane.b32.xlu0 %v197, 96
    %v280 = vpop.permute.xlu0 %279
    %v281 = vsel %vm203, %v197, 0
    %v283 = vsel %vm203, %v280, 0
    %285 = vmatprep.subr.mxu0 0.0
    %286 = vmatpush1.xpose.msra.mxu0 0.0
    %287 = vmatprep.subr.mxu0 0.0
    %288 = vmatpush1.xpose.msra.mxu0 0.0
    %289 = vmatprep.subr.mxu0 0.0
    %290 = vmatpush1.xpose.msra.mxu0 0.0
    %291 = vmatprep.subr.mxu0 0.0
    %292 = vmatpush1.xpose.msra.mxu0 0.0
    %293 = vmatprep.subr.mxu0 0.0
    %294 = vmatpush1.xpose.msra.mxu0 0.0
    %295 = vmatprep.subr.mxu0 0.0
    %296 = vmatpush1.xpose.msra.mxu0 0.0
    %297 = vmatprep.subr.mxu0 0.0
    %298 = vmatpush1.xpose.msra.mxu0 0.0
    %299 = vmatprep.subr.mxu0 0.0
    %300 = vmatpush1.xpose.msra.mxu0 0.0
    %301 = vmatprep.subr.mxu0 0.0
    %302 = vmatpush1.xpose.msra.mxu0 0.0
    %303 = vmatprep.subr.mxu0 0.0
    %304 = vmatpush1.xpose.msra.mxu0 0.0
    %305 = vmatprep.subr.mxu0 0.0
    %306 = vmatpush1.xpose.msra.mxu0 0.0
    %307 = vmatprep.subr.mxu0 0.0
    %308 = vmatpush1.xpose.msra.mxu0 0.0
    %309 = vmatprep.subr.mxu0 0.0
    %310 = vmatpush1.xpose.msra.mxu0 0.0
    %311 = vmatprep.subr.mxu0 0.0
    %312 = vmatpush1.xpose.msra.mxu0 0.0
    %313 = vmatprep.subr.mxu0 0.0
    %314 = vmatpush1.xpose.msra.mxu0 0.0
    %315 = vmatprep.subr.mxu0 0.0
    %316 = vmatpush1.xpose.msra.mxu0 %v283
    %317 = vmatprep.subr.mxu0 0.0
    %318 = vmatpush2.xpose.msra.mxu0 0.0
    %319 = vmatprep.subr.mxu0 0.0
    %320 = vmatpush2.xpose.msra.mxu0 0.0
    %321 = vmatprep.subr.mxu0 0.0
    %322 = vmatpush2.xpose.msra.mxu0 0.0
    %323 = vmatprep.subr.mxu0 0.0
    %324 = vmatpush2.xpose.msra.mxu0 0.0
    %325 = vmatprep.subr.mxu0 0.0
    %326 = vmatpush2.xpose.msra.mxu0 0.0
    %327 = vmatprep.subr.mxu0 0.0
    %328 = vmatpush2.xpose.msra.mxu0 0.0
    %329 = vmatprep.subr.mxu0 0.0
    %330 = vmatpush2.xpose.msra.mxu0 0.0
    %331 = vmatprep.subr.mxu0 0.0
    %332 = vmatpush2.xpose.msra.mxu0 0.0
    %333 = vmatprep.subr.mxu0 0.0
    %334 = vmatpush2.xpose.msra.mxu0 0.0
    %335 = vmatprep.subr.mxu0 0.0
    %336 = vmatpush2.xpose.msra.mxu0 0.0
    %337 = vmatprep.subr.mxu0 0.0
    %338 = vmatpush2.xpose.msra.mxu0 0.0
    %339 = vmatprep.subr.mxu0 0.0
    %340 = vmatpush2.xpose.msra.mxu0 0.0
    %341 = vmatprep.subr.mxu0 0.0
    %342 = vmatpush2.xpose.msra.mxu0 0.0
    %343 = vmatprep.subr.mxu0 0.0
    %344 = vmatpush2.xpose.msra.mxu0 0.0
    %345 = vmatprep.subr.mxu0 0.0
    %346 = vmatpush2.xpose.msra.mxu0 0.0
    %347 = vmatprep.subr.mxu0 0.0
    %348 = vmatpush2.xpose.msra.mxu0 0.0
    %349 = vmatprep.mubr.f32.mxu0 0.0
    %350 = vmatmul.mubr.f32.gmra.mxu0 %v281
    %v351 = vpop.f32.mrf.mxu0
    %v352 = vadd.f32 %v59, %v351
    %v353 = vpop.f32.mrf.mxu0
    %354 = vdwg.mxu0
    %v355 = vsel %vm203, %v275, -inf
    %356 = vmax.xlane.f32.xlu0 %v355
    %v357 = vpop.xlane.xlu0 %356
    %v358 = vsel %vm203, %v352, -inf
    %359 = vmax.xlane.f32.xlu0 %v358
    %v360 = vpop.xlane.xlu0 %359
    %v361 = vsub.f32 %v275, %v357
    %v362 = vsub.f32 %v352, %v360
    %v363 = vmul.f32 %v361, 1.442695
    %v364 = vpow.pop %v363
    %v365 = vmul.f32 %v362, 1.442695
    %v366 = vpow.pop %v365
    %v367 = vsel %vm203, %v364, 0.0
    %368 = vadd.xlane.f32.xlu0 %v367
    %v369 = vpop.xlane.xlu0 %368
    %v370 = vsel %vm203, %v366, 0.0
    %371 = vadd.xlane.f32.xlu0 %v370
    %v372 = vpop.xlane.xlu0 %371
    %v373 = vrcp.pop %v369
    %v374 = vmul.f32 %v364, %v373
    %v375 = vrcp.pop %v372
    %v376 = vmul.f32 %v366, %v375
    %377 = vrot.lane.b32.xlu0 %v192, 64
    %v378 = vpop.permute.xlu0 %377
    %v381 = vsel %vm203, %v374, 0
    %383 = vmatprep.subr.mxu0 0.0
    %384 = vmatpush1.msra.mxu0 0.0
    %385 = vmatprep.subr.mxu0 0.0
    %386 = vmatpush1.msra.mxu0 0.0
    %387 = vmatprep.subr.mxu0 0.0
    %388 = vmatpush1.msra.mxu0 0.0
    %389 = vmatprep.subr.mxu0 0.0
    %390 = vmatpush1.msra.mxu0 0.0
    %391 = vmatprep.subr.mxu0 0.0
    %392 = vmatpush1.msra.mxu0 0.0
    %393 = vmatprep.subr.mxu0 0.0
    %394 = vmatpush1.msra.mxu0 0.0
    %395 = vmatprep.subr.mxu0 0.0
    %396 = vmatpush1.msra.mxu0 0.0
    %397 = vmatprep.subr.mxu0 0.0
    %398 = vmatpush1.msra.mxu0 0.0
    %399 = vmatprep.subr.mxu0 0.0
    %400 = vmatpush1.msra.mxu0 0.0
    %401 = vmatprep.subr.mxu0 0.0
    %402 = vmatpush1.msra.mxu0 0.0
    %403 = vmatprep.subr.mxu0 0.0
    %404 = vmatpush1.msra.mxu0 0.0
    %405 = vmatprep.subr.mxu0 0.0
    %406 = vmatpush1.msra.mxu0 0.0
    %407 = vmatprep.subr.mxu0 0.0
    %408 = vmatpush1.msra.mxu0 0.0
    %409 = vmatprep.subr.mxu0 0.0
    %410 = vmatpush1.msra.mxu0 0.0
    %411 = vmatprep.subr.mxu0 0.0
    %412 = vmatpush1.msra.mxu0 0.0
    %413 = vmatprep.subr.mxu0 0.0
    %414 = vmatpush1.msra.mxu0 %v378
    %415 = vmatprep.subr.mxu0 0.0
    %416 = vmatpush2.msra.mxu0 0.0
    %417 = vmatprep.subr.mxu0 0.0
    %418 = vmatpush2.msra.mxu0 0.0
    %419 = vmatprep.subr.mxu0 0.0
    %420 = vmatpush2.msra.mxu0 0.0
    %421 = vmatprep.subr.mxu0 0.0
    %422 = vmatpush2.msra.mxu0 0.0
    %423 = vmatprep.subr.mxu0 0.0
    %424 = vmatpush2.msra.mxu0 0.0
    %425 = vmatprep.subr.mxu0 0.0
    %426 = vmatpush2.msra.mxu0 0.0
    %427 = vmatprep.subr.mxu0 0.0
    %428 = vmatpush2.msra.mxu0 0.0
    %429 = vmatprep.subr.mxu0 0.0
    %430 = vmatpush2.msra.mxu0 0.0
    %431 = vmatprep.subr.mxu0 0.0
    %432 = vmatpush2.msra.mxu0 0.0
    %433 = vmatprep.subr.mxu0 0.0
    %434 = vmatpush2.msra.mxu0 0.0
    %435 = vmatprep.subr.mxu0 0.0
    %436 = vmatpush2.msra.mxu0 0.0
    %437 = vmatprep.subr.mxu0 0.0
    %438 = vmatpush2.msra.mxu0 0.0
    %439 = vmatprep.subr.mxu0 0.0
    %440 = vmatpush2.msra.mxu0 0.0
    %441 = vmatprep.subr.mxu0 0.0
    %442 = vmatpush2.msra.mxu0 0.0
    %443 = vmatprep.subr.mxu0 0.0
    %444 = vmatpush2.msra.mxu0 0.0
    %445 = vmatprep.subr.mxu0 0.0
    %446 = vmatpush2.msra.mxu0 0.0
    %447 = vmatprep.mubr.f32.mxu0 0.0
    %448 = vmatmul.mubr.f32.gmra.mxu0 %v381
    %v449 = vpop.f32.mrf.mxu0
    %v450 = vadd.f32 0.0, %v449
    %v451 = vpop.f32.mrf.mxu0
    %452 = vdwg.mxu0
    %453 = vrot.lane.b32.xlu0 %v197, 64
    %v454 = vpop.permute.xlu0 %453
    %v457 = vsel %vm203, %v376, 0
    %459 = vmatprep.subr.mxu0 0.0
    %460 = vmatpush1.msra.mxu0 0.0
    %461 = vmatprep.subr.mxu0 0.0
    %462 = vmatpush1.msra.mxu0 0.0
    %463 = vmatprep.subr.mxu0 0.0
    %464 = vmatpush1.msra.mxu0 0.0
    %465 = vmatprep.subr.mxu0 0.0
    %466 = vmatpush1.msra.mxu0 0.0
    %467 = vmatprep.subr.mxu0 0.0
    %468 = vmatpush1.msra.mxu0 0.0
    %469 = vmatprep.subr.mxu0 0.0
    %470 = vmatpush1.msra.mxu0 0.0
    %471 = vmatprep.subr.mxu0 0.0
    %472 = vmatpush1.msra.mxu0 0.0
    %473 = vmatprep.subr.mxu0 0.0
    %474 = vmatpush1.msra.mxu0 0.0
    %475 = vmatprep.subr.mxu0 0.0
    %476 = vmatpush1.msra.mxu0 0.0
    %477 = vmatprep.subr.mxu0 0.0
    %478 = vmatpush1.msra.mxu0 0.0
    %479 = vmatprep.subr.mxu0 0.0
    %480 = vmatpush1.msra.mxu0 0.0
    %481 = vmatprep.subr.mxu0 0.0
    %482 = vmatpush1.msra.mxu0 0.0
    %483 = vmatprep.subr.mxu0 0.0
    %484 = vmatpush1.msra.mxu0 0.0
    %485 = vmatprep.subr.mxu0 0.0
    %486 = vmatpush1.msra.mxu0 0.0
    %487 = vmatprep.subr.mxu0 0.0
    %488 = vmatpush1.msra.mxu0 0.0
    %489 = vmatprep.subr.mxu0 0.0
    %490 = vmatpush1.msra.mxu0 %v454
    %491 = vmatprep.subr.mxu0 0.0
    %492 = vmatpush2.msra.mxu0 0.0
    %493 = vmatprep.subr.mxu0 0.0
    %494 = vmatpush2.msra.mxu0 0.0
    %495 = vmatprep.subr.mxu0 0.0
    %496 = vmatpush2.msra.mxu0 0.0
    %497 = vmatprep.subr.mxu0 0.0
    %498 = vmatpush2.msra.mxu0 0.0
    %499 = vmatprep.subr.mxu0 0.0
    %500 = vmatpush2.msra.mxu0 0.0
    %501 = vmatprep.subr.mxu0 0.0
    %502 = vmatpush2.msra.mxu0 0.0
    %503 = vmatprep.subr.mxu0 0.0
    %504 = vmatpush2.msra.mxu0 0.0
    %505 = vmatprep.subr.mxu0 0.0
    %506 = vmatpush2.msra.mxu0 0.0
    %507 = vmatprep.subr.mxu0 0.0
    %508 = vmatpush2.msra.mxu0 0.0
    %509 = vmatprep.subr.mxu0 0.0
    %510 = vmatpush2.msra.mxu0 0.0
    %511 = vmatprep.subr.mxu0 0.0
    %512 = vmatpush2.msra.mxu0 0.0
    %513 = vmatprep.subr.mxu0 0.0
    %514 = vmatpush2.msra.mxu0 0.0
    %515 = vmatprep.subr.mxu0 0.0
    %516 = vmatpush2.msra.mxu0 0.0
    %517 = vmatprep.subr.mxu0 0.0
    %518 = vmatpush2.msra.mxu0 0.0
    %519 = vmatprep.subr.mxu0 0.0
    %520 = vmatpush2.msra.mxu0 0.0
    %521 = vmatprep.subr.mxu0 0.0
    %522 = vmatpush2.msra.mxu0 0.0
    %523 = vmatprep.mubr.f32.mxu0 0.0
    %524 = vmatmul.mubr.f32.gmra.mxu0 %v457
    %v525 = vpop.f32.mrf.mxu0
    %v526 = vadd.f32 0.0, %v525
    %v527 = vpop.f32.mrf.mxu0
    %528 = vdwg.mxu0
    %v529 = vld [vmem:[%s5] sm:$0xff]
    %530 = vrot.lane.b32.xlu0 %v192, 120
    %v531 = vpop.permute.xlu0 %530
    %532 = vrot.lane.b32.xlu0 %v192, 88
    %v533 = vpop.permute.xlu0 %532
    %v534 = vsel %vm203, %v531, 0
    %v536 = vsel %vm203, %v533, 0
    %538 = vmatprep.subr.mxu0 0.0
    %539 = vmatpush1.xpose.msra.mxu0 0.0
    %540 = vmatprep.subr.mxu0 0.0
    %541 = vmatpush1.xpose.msra.mxu0 0.0
    %542 = vmatprep.subr.mxu0 0.0
    %543 = vmatpush1.xpose.msra.mxu0 0.0
    %544 = vmatprep.subr.mxu0 0.0
    %545 = vmatpush1.xpose.msra.mxu0 0.0
    %546 = vmatprep.subr.mxu0 0.0
    %547 = vmatpush1.xpose.msra.mxu0 0.0
    %548 = vmatprep.subr.mxu0 0.0
    %549 = vmatpush1.xpose.msra.mxu0 0.0
    %550 = vmatprep.subr.mxu0 0.0
    %551 = vmatpush1.xpose.msra.mxu0 0.0
    %552 = vmatprep.subr.mxu0 0.0
    %553 = vmatpush1.xpose.msra.mxu0 0.0
    %554 = vmatprep.subr.mxu0 0.0
    %555 = vmatpush1.xpose.msra.mxu0 0.0
    %556 = vmatprep.subr.mxu0 0.0
    %557 = vmatpush1.xpose.msra.mxu0 0.0
    %558 = vmatprep.subr.mxu0 0.0
    %559 = vmatpush1.xpose.msra.mxu0 0.0
    %560 = vmatprep.subr.mxu0 0.0
    %561 = vmatpush1.xpose.msra.mxu0 0.0
    %562 = vmatprep.subr.mxu0 0.0
    %563 = vmatpush1.xpose.msra.mxu0 0.0
    %564 = vmatprep.subr.mxu0 0.0
    %565 = vmatpush1.xpose.msra.mxu0 0.0
    %566 = vmatprep.subr.mxu0 0.0
    %567 = vmatpush1.xpose.msra.mxu0 0.0
    %568 = vmatprep.subr.mxu0 0.0
    %569 = vmatpush1.xpose.msra.mxu0 %v536
    %570 = vmatprep.subr.mxu0 0.0
    %571 = vmatpush2.xpose.msra.mxu0 0.0
    %572 = vmatprep.subr.mxu0 0.0
    %573 = vmatpush2.xpose.msra.mxu0 0.0
    %574 = vmatprep.subr.mxu0 0.0
    %575 = vmatpush2.xpose.msra.mxu0 0.0
    %576 = vmatprep.subr.mxu0 0.0
    %577 = vmatpush2.xpose.msra.mxu0 0.0
    %578 = vmatprep.subr.mxu0 0.0
    %579 = vmatpush2.xpose.msra.mxu0 0.0
    %580 = vmatprep.subr.mxu0 0.0
    %581 = vmatpush2.xpose.msra.mxu0 0.0
    %582 = vmatprep.subr.mxu0 0.0
    %583 = vmatpush2.xpose.msra.mxu0 0.0
    %584 = vmatprep.subr.mxu0 0.0
    %585 = vmatpush2.xpose.msra.mxu0 0.0
    %586 = vmatprep.subr.mxu0 0.0
    %587 = vmatpush2.xpose.msra.mxu0 0.0
    %588 = vmatprep.subr.mxu0 0.0
    %589 = vmatpush2.xpose.msra.mxu0 0.0
    %590 = vmatprep.subr.mxu0 0.0
    %591 = vmatpush2.xpose.msra.mxu0 0.0
    %592 = vmatprep.subr.mxu0 0.0
    %593 = vmatpush2.xpose.msra.mxu0 0.0
    %594 = vmatprep.subr.mxu0 0.0
    %595 = vmatpush2.xpose.msra.mxu0 0.0
    %596 = vmatprep.subr.mxu0 0.0
    %597 = vmatpush2.xpose.msra.mxu0 0.0
    %598 = vmatprep.subr.mxu0 0.0
    %599 = vmatpush2.xpose.msra.mxu0 0.0
    %600 = vmatprep.subr.mxu0 0.0
    %601 = vmatpush2.xpose.msra.mxu0 0.0
    %602 = vmatprep.mubr.f32.mxu0 0.0
    %603 = vmatmul.mubr.f32.gmra.mxu0 %v534
    %v604 = vpop.f32.mrf.mxu0
    %v605 = vadd.f32 %v55, %v604
    %v606 = vpop.f32.mrf.mxu0
    %607 = vdwg.mxu0
    %608 = vrot.lane.b32.xlu0 %v197, 120
    %v609 = vpop.permute.xlu0 %608
    %610 = vrot.lane.b32.xlu0 %v197, 88
    %v611 = vpop.permute.xlu0 %610
    %v612 = vsel %vm203, %v609, 0
    %v614 = vsel %vm203, %v611, 0
    %616 = vmatprep.subr.mxu0 0.0
    %617 = vmatpush1.xpose.msra.mxu0 0.0
    %618 = vmatprep.subr.mxu0 0.0
    %619 = vmatpush1.xpose.msra.mxu0 0.0
    %620 = vmatprep.subr.mxu0 0.0
    %621 = vmatpush1.xpose.msra.mxu0 0.0
    %622 = vmatprep.subr.mxu0 0.0
    %623 = vmatpush1.xpose.msra.mxu0 0.0
    %624 = vmatprep.subr.mxu0 0.0
    %625 = vmatpush1.xpose.msra.mxu0 0.0
    %626 = vmatprep.subr.mxu0 0.0
    %627 = vmatpush1.xpose.msra.mxu0 0.0
    %628 = vmatprep.subr.mxu0 0.0
    %629 = vmatpush1.xpose.msra.mxu0 0.0
    %630 = vmatprep.subr.mxu0 0.0
    %631 = vmatpush1.xpose.msra.mxu0 0.0
    %632 = vmatprep.subr.mxu0 0.0
    %633 = vmatpush1.xpose.msra.mxu0 0.0
    %634 = vmatprep.subr.mxu0 0.0
    %635 = vmatpush1.xpose.msra.mxu0 0.0
    %636 = vmatprep.subr.mxu0 0.0
    %637 = vmatpush1.xpose.msra.mxu0 0.0
    %638 = vmatprep.subr.mxu0 0.0
    %639 = vmatpush1.xpose.msra.mxu0 0.0
    %640 = vmatprep.subr.mxu0 0.0
    %641 = vmatpush1.xpose.msra.mxu0 0.0
    %642 = vmatprep.subr.mxu0 0.0
    %643 = vmatpush1.xpose.msra.mxu0 0.0
    %644 = vmatprep.subr.mxu0 0.0
    %645 = vmatpush1.xpose.msra.mxu0 0.0
    %646 = vmatprep.subr.mxu0 0.0
    %647 = vmatpush1.xpose.msra.mxu0 %v614
    %648 = vmatprep.subr.mxu0 0.0
    %649 = vmatpush2.xpose.msra.mxu0 0.0
    %650 = vmatprep.subr.mxu0 0.0
    %651 = vmatpush2.xpose.msra.mxu0 0.0
    %652 = vmatprep.subr.mxu0 0.0
    %653 = vmatpush2.xpose.msra.mxu0 0.0
    %654 = vmatprep.subr.mxu0 0.0
    %655 = vmatpush2.xpose.msra.mxu0 0.0
    %656 = vmatprep.subr.mxu0 0.0
    %657 = vmatpush2.xpose.msra.mxu0 0.0
    %658 = vmatprep.subr.mxu0 0.0
    %659 = vmatpush2.xpose.msra.mxu0 0.0
    %660 = vmatprep.subr.mxu0 0.0
    %661 = vmatpush2.xpose.msra.mxu0 0.0
    %662 = vmatprep.subr.mxu0 0.0
    %663 = vmatpush2.xpose.msra.mxu0 0.0
    %664 = vmatprep.subr.mxu0 0.0
    %665 = vmatpush2.xpose.msra.mxu0 0.0
    %666 = vmatprep.subr.mxu0 0.0
    %667 = vmatpush2.xpose.msra.mxu0 0.0
    %668 = vmatprep.subr.mxu0 0.0
    %669 = vmatpush2.xpose.msra.mxu0 0.0
    %670 = vmatprep.subr.mxu0 0.0
    %671 = vmatpush2.xpose.msra.mxu0 0.0
    %672 = vmatprep.subr.mxu0 0.0
    %673 = vmatpush2.xpose.msra.mxu0 0.0
    %674 = vmatprep.subr.mxu0 0.0
    %675 = vmatpush2.xpose.msra.mxu0 0.0
    %676 = vmatprep.subr.mxu0 0.0
    %677 = vmatpush2.xpose.msra.mxu0 0.0
    %678 = vmatprep.subr.mxu0 0.0
    %679 = vmatpush2.xpose.msra.mxu0 0.0
    %680 = vmatprep.mubr.f32.mxu0 0.0
    %681 = vmatmul.mubr.f32.gmra.mxu0 %v612
    %v682 = vpop.f32.mrf.mxu0
    %v683 = vadd.f32 %v59, %v682
    %v684 = vpop.f32.mrf.mxu0
    %685 = vdwg.mxu0
    %v686 = vsel %vm203, %v605, -inf
    %687 = vmax.xlane.f32.xlu0 %v686
    %v688 = vpop.xlane.xlu0 %687
    %v689 = vsel %vm203, %v683, -inf
    %690 = vmax.xlane.f32.xlu0 %v689
    %v691 = vpop.xlane.xlu0 %690
    %v692 = vsub.f32 %v605, %v688
    %v693 = vsub.f32 %v683, %v691
    %v694 = vmul.f32 %v692, 1.442695
    %v695 = vpow.pop %v694
    %v696 = vmul.f32 %v693, 1.442695
    %v697 = vpow.pop %v696
    %v698 = vsel %vm203, %v695, 0.0
    %699 = vadd.xlane.f32.xlu0 %v698
    %v700 = vpop.xlane.xlu0 %699
    %v701 = vsel %vm203, %v697, 0.0
    %702 = vadd.xlane.f32.xlu0 %v701
    %v703 = vpop.xlane.xlu0 %702
    %v704 = vrcp.pop %v700
    %v705 = vmul.f32 %v695, %v704
    %v706 = vrcp.pop %v703
    %v707 = vmul.f32 %v697, %v706
    %708 = vrot.lane.b32.xlu0 %v192, 56
    %v709 = vpop.permute.xlu0 %708
    %v712 = vsel %vm203, %v705, 0
    %714 = vmatprep.subr.mxu0 0.0
    %715 = vmatpush1.msra.mxu0 0.0
    %716 = vmatprep.subr.mxu0 0.0
    %717 = vmatpush1.msra.mxu0 0.0
    %718 = vmatprep.subr.mxu0 0.0
    %719 = vmatpush1.msra.mxu0 0.0
    %720 = vmatprep.subr.mxu0 0.0
    %721 = vmatpush1.msra.mxu0 0.0
    %722 = vmatprep.subr.mxu0 0.0
    %723 = vmatpush1.msra.mxu0 0.0
    %724 = vmatprep.subr.mxu0 0.0
    %725 = vmatpush1.msra.mxu0 0.0
    %726 = vmatprep.subr.mxu0 0.0
    %727 = vmatpush1.msra.mxu0 0.0
    %728 = vmatprep.subr.mxu0 0.0
    %729 = vmatpush1.msra.mxu0 0.0
    %730 = vmatprep.subr.mxu0 0.0
    %731 = vmatpush1.msra.mxu0 0.0
    %732 = vmatprep.subr.mxu0 0.0
    %733 = vmatpush1.msra.mxu0 0.0
    %734 = vmatprep.subr.mxu0 0.0
    %735 = vmatpush1.msra.mxu0 0.0
    %736 = vmatprep.subr.mxu0 0.0
    %737 = vmatpush1.msra.mxu0 0.0
    %738 = vmatprep.subr.mxu0 0.0
    %739 = vmatpush1.msra.mxu0 0.0
    %740 = vmatprep.subr.mxu0 0.0
    %741 = vmatpush1.msra.mxu0 0.0
    %742 = vmatprep.subr.mxu0 0.0
    %743 = vmatpush1.msra.mxu0 0.0
    %744 = vmatprep.subr.mxu0 0.0
    %745 = vmatpush1.msra.mxu0 %v709
    %746 = vmatprep.subr.mxu0 0.0
    %747 = vmatpush2.msra.mxu0 0.0
    %748 = vmatprep.subr.mxu0 0.0
    %749 = vmatpush2.msra.mxu0 0.0
    %750 = vmatprep.subr.mxu0 0.0
    %751 = vmatpush2.msra.mxu0 0.0
    %752 = vmatprep.subr.mxu0 0.0
    %753 = vmatpush2.msra.mxu0 0.0
    %754 = vmatprep.subr.mxu0 0.0
    %755 = vmatpush2.msra.mxu0 0.0
    %756 = vmatprep.subr.mxu0 0.0
    %757 = vmatpush2.msra.mxu0 0.0
    %758 = vmatprep.subr.mxu0 0.0
    %759 = vmatpush2.msra.mxu0 0.0
    %760 = vmatprep.subr.mxu0 0.0
    %761 = vmatpush2.msra.mxu0 0.0
    %762 = vmatprep.subr.mxu0 0.0
    %763 = vmatpush2.msra.mxu0 0.0
    %764 = vmatprep.subr.mxu0 0.0
    %765 = vmatpush2.msra.mxu0 0.0
    %766 = vmatprep.subr.mxu0 0.0
    %767 = vmatpush2.msra.mxu0 0.0
    %768 = vmatprep.subr.mxu0 0.0
    %769 = vmatpush2.msra.mxu0 0.0
    %770 = vmatprep.subr.mxu0 0.0
    %771 = vmatpush2.msra.mxu0 0.0
    %772 = vmatprep.subr.mxu0 0.0
    %773 = vmatpush2.msra.mxu0 0.0
    %774 = vmatprep.subr.mxu0 0.0
    %775 = vmatpush2.msra.mxu0 0.0
    %776 = vmatprep.subr.mxu0 0.0
    %777 = vmatpush2.msra.mxu0 0.0
    %778 = vmatprep.mubr.f32.mxu0 0.0
    %779 = vmatmul.mubr.f32.gmra.mxu0 %v712
    %v780 = vpop.f32.mrf.mxu0
    %v781 = vadd.f32 0.0, %v780
    %v782 = vpop.f32.mrf.mxu0
    %783 = vdwg.mxu0
    %784 = vrot.lane.b32.xlu0 %v197, 56
    %v785 = vpop.permute.xlu0 %784
    %v788 = vsel %vm203, %v707, 0
    %790 = vmatprep.subr.mxu0 0.0
    %791 = vmatpush1.msra.mxu0 0.0
    %792 = vmatprep.subr.mxu0 0.0
    %793 = vmatpush1.msra.mxu0 0.0
    %794 = vmatprep.subr.mxu0 0.0
    %795 = vmatpush1.msra.mxu0 0.0
    %796 = vmatprep.subr.mxu0 0.0
    %797 = vmatpush1.msra.mxu0 0.0
    %798 = vmatprep.subr.mxu0 0.0
    %799 = vmatpush1.msra.mxu0 0.0
    %800 = vmatprep.subr.mxu0 0.0
    %801 = vmatpush1.msra.mxu0 0.0
    %802 = vmatprep.subr.mxu0 0.0
    %803 = vmatpush1.msra.mxu0 0.0
    %804 = vmatprep.subr.mxu0 0.0
    %805 = vmatpush1.msra.mxu0 0.0
    %806 = vmatprep.subr.mxu0 0.0
    %807 = vmatpush1.msra.mxu0 0.0
    %808 = vmatprep.subr.mxu0 0.0
    %809 = vmatpush1.msra.mxu0 0.0
    %810 = vmatprep.subr.mxu0 0.0
    %811 = vmatpush1.msra.mxu0 0.0
    %812 = vmatprep.subr.mxu0 0.0
    %813 = vmatpush1.msra.mxu0 0.0
    %814 = vmatprep.subr.mxu0 0.0
    %815 = vmatpush1.msra.mxu0 0.0
    %816 = vmatprep.subr.mxu0 0.0
    %817 = vmatpush1.msra.mxu0 0.0
    %818 = vmatprep.subr.mxu0 0.0
    %819 = vmatpush1.msra.mxu0 0.0
    %820 = vmatprep.subr.mxu0 0.0
    %821 = vmatpush1.msra.mxu0 %v785
    %822 = vmatprep.subr.mxu0 0.0
    %823 = vmatpush2.msra.mxu0 0.0
    %824 = vmatprep.subr.mxu0 0.0
    %825 = vmatpush2.msra.mxu0 0.0
    %826 = vmatprep.subr.mxu0 0.0
    %827 = vmatpush2.msra.mxu0 0.0
    %828 = vmatprep.subr.mxu0 0.0
    %829 = vmatpush2.msra.mxu0 0.0
    %830 = vmatprep.subr.mxu0 0.0
    %831 = vmatpush2.msra.mxu0 0.0
    %832 = vmatprep.subr.mxu0 0.0
    %833 = vmatpush2.msra.mxu0 0.0
    %834 = vmatprep.subr.mxu0 0.0
    %835 = vmatpush2.msra.mxu0 0.0
    %836 = vmatprep.subr.mxu0 0.0
    %837 = vmatpush2.msra.mxu0 0.0
    %838 = vmatprep.subr.mxu0 0.0
    %839 = vmatpush2.msra.mxu0 0.0
    %840 = vmatprep.subr.mxu0 0.0
    %841 = vmatpush2.msra.mxu0 0.0
    %842 = vmatprep.subr.mxu0 0.0
    %843 = vmatpush2.msra.mxu0 0.0
    %844 = vmatprep.subr.mxu0 0.0
    %845 = vmatpush2.msra.mxu0 0.0
    %846 = vmatprep.subr.mxu0 0.0
    %847 = vmatpush2.msra.mxu0 0.0
    %848 = vmatprep.subr.mxu0 0.0
    %849 = vmatpush2.msra.mxu0 0.0
    %850 = vmatprep.subr.mxu0 0.0
    %851 = vmatpush2.msra.mxu0 0.0
    %852 = vmatprep.subr.mxu0 0.0
    %853 = vmatpush2.msra.mxu0 0.0
    %854 = vmatprep.mubr.f32.mxu0 0.0
    %855 = vmatmul.mubr.f32.gmra.mxu0 %v788
    %v856 = vpop.f32.mrf.mxu0
    %v857 = vadd.f32 0.0, %v856
    %v858 = vpop.f32.mrf.mxu0
    %859 = vdwg.mxu0
    %v860 = vld [vmem:[%s5 + $0x8] sm:$0xff]
    %v862 = vsel %vm203, %v781, 0
    %v865 = vsel %vm203, %v857, 0
    %867 = vmatprep.subr.mxu0 0.0
    %868 = vmatpush1.msra.mxu0 0.0
    %869 = vmatprep.subr.mxu0 0.0
    %870 = vmatpush1.msra.mxu0 0.0
    %871 = vmatprep.subr.mxu0 0.0
    %872 = vmatpush1.msra.mxu0 0.0
    %873 = vmatprep.subr.mxu0 0.0
    %874 = vmatpush1.msra.mxu0 0.0
    %875 = vmatprep.subr.mxu0 0.0
    %876 = vmatpush1.msra.mxu0 0.0
    %877 = vmatprep.subr.mxu0 0.0
    %878 = vmatpush1.msra.mxu0 0.0
    %879 = vmatprep.subr.mxu0 0.0
    %880 = vmatpush1.msra.mxu0 0.0
    %881 = vmatprep.subr.mxu0 0.0
    %882 = vmatpush1.msra.mxu0 0.0
    %883 = vmatprep.subr.mxu0 0.0
    %884 = vmatpush1.msra.mxu0 0.0
    %885 = vmatprep.subr.mxu0 0.0
    %886 = vmatpush1.msra.mxu0 0.0
    %887 = vmatprep.subr.mxu0 0.0
    %888 = vmatpush1.msra.mxu0 0.0
    %889 = vmatprep.subr.mxu0 0.0
    %890 = vmatpush1.msra.mxu0 0.0
    %891 = vmatprep.subr.mxu0 0.0
    %892 = vmatpush1.msra.mxu0 0.0
    %893 = vmatprep.subr.mxu0 0.0
    %894 = vmatpush1.msra.mxu0 0.0
    %895 = vmatprep.subr.mxu0 0.0
    %896 = vmatpush1.msra.mxu0 0.0
    %897 = vmatprep.subr.mxu0 0.0
    %898 = vmatpush1.msra.mxu0 %v860
    %899 = vmatprep.subr.mxu0 0.0
    %900 = vmatpush2.msra.mxu0 0.0
    %901 = vmatprep.subr.mxu0 0.0
    %902 = vmatpush2.msra.mxu0 0.0
    %903 = vmatprep.subr.mxu0 0.0
    %904 = vmatpush2.msra.mxu0 0.0
    %905 = vmatprep.subr.mxu0 0.0
    %906 = vmatpush2.msra.mxu0 0.0
    %907 = vmatprep.subr.mxu0 0.0
    %908 = vmatpush2.msra.mxu0 0.0
    %909 = vmatprep.subr.mxu0 0.0
    %910 = vmatpush2.msra.mxu0 0.0
    %911 = vmatprep.subr.mxu0 0.0
    %912 = vmatpush2.msra.mxu0 0.0
    %913 = vmatprep.subr.mxu0 0.0
    %914 = vmatpush2.msra.mxu0 0.0
    %915 = vmatprep.subr.mxu0 0.0
    %916 = vmatpush2.msra.mxu0 0.0
    %917 = vmatprep.subr.mxu0 0.0
    %918 = vmatpush2.msra.mxu0 0.0
    %919 = vmatprep.subr.mxu0 0.0
    %920 = vmatpush2.msra.mxu0 0.0
    %921 = vmatprep.subr.mxu0 0.0
    %922 = vmatpush2.msra.mxu0 0.0
    %923 = vmatprep.subr.mxu0 0.0
    %924 = vmatpush2.msra.mxu0 0.0
    %925 = vmatprep.subr.mxu0 0.0
    %926 = vmatpush2.msra.mxu0 0.0
    %927 = vmatprep.subr.mxu0 0.0
    %928 = vmatpush2.msra.mxu0 0.0
    %929 = vmatprep.subr.mxu0 0.0
    %930 = vmatpush2.msra.mxu0 0.0
    %931 = vmatprep.mubr.f32.mxu0 0.0
    %932 = vmatmul.mubr.f32.gmra.mxu0 %v862
    %v933 = vpop.f32.mrf.mxu0
    %v934 = vadd.f32 0.0, %v933
    %v935 = vpop.f32.mrf.mxu0
    %936 = vmatprep.mubr.f32.mxu0 0.0
    %937 = vmatmul.mubr.f32.gmra.mxu0 %v865
    %v938 = vpop.f32.mrf.mxu0
    %v939 = vadd.f32 0.0, %v938
    %v940 = vpop.f32.mrf.mxu0
    %941 = vdwg.mxu0
    %v943 = vsel %vm203, %v450, 0
    %v946 = vsel %vm203, %v526, 0
    %948 = vmatprep.subr.mxu0 0.0
    %949 = vmatpush1.msra.mxu0 0.0
    %950 = vmatprep.subr.mxu0 0.0
    %951 = vmatpush1.msra.mxu0 0.0
    %952 = vmatprep.subr.mxu0 0.0
    %953 = vmatpush1.msra.mxu0 0.0
    %954 = vmatprep.subr.mxu0 0.0
    %955 = vmatpush1.msra.mxu0 0.0
    %956 = vmatprep.subr.mxu0 0.0
    %957 = vmatpush1.msra.mxu0 0.0
    %958 = vmatprep.subr.mxu0 0.0
    %959 = vmatpush1.msra.mxu0 0.0
    %960 = vmatprep.subr.mxu0 0.0
    %961 = vmatpush1.msra.mxu0 0.0
    %962 = vmatprep.subr.mxu0 0.0
    %963 = vmatpush1.msra.mxu0 0.0
    %964 = vmatprep.subr.mxu0 0.0
    %965 = vmatpush1.msra.mxu0 0.0
    %966 = vmatprep.subr.mxu0 0.0
    %967 = vmatpush1.msra.mxu0 0.0
    %968 = vmatprep.subr.mxu0 0.0
    %969 = vmatpush1.msra.mxu0 0.0
    %970 = vmatprep.subr.mxu0 0.0
    %971 = vmatpush1.msra.mxu0 0.0
    %972 = vmatprep.subr.mxu0 0.0
    %973 = vmatpush1.msra.mxu0 0.0
    %974 = vmatprep.subr.mxu0 0.0
    %975 = vmatpush1.msra.mxu0 0.0
    %976 = vmatprep.subr.mxu0 0.0
    %977 = vmatpush1.msra.mxu0 0.0
    %978 = vmatprep.subr.mxu0 0.0
    %979 = vmatpush1.msra.mxu0 %v529
    %980 = vmatprep.subr.mxu0 0.0
    %981 = vmatpush2.msra.mxu0 0.0
    %982 = vmatprep.subr.mxu0 0.0
    %983 = vmatpush2.msra.mxu0 0.0
    %984 = vmatprep.subr.mxu0 0.0
    %985 = vmatpush2.msra.mxu0 0.0
    %986 = vmatprep.subr.mxu0 0.0
    %987 = vmatpush2.msra.mxu0 0.0
    %988 = vmatprep.subr.mxu0 0.0
    %989 = vmatpush2.msra.mxu0 0.0
    %990 = vmatprep.subr.mxu0 0.0
    %991 = vmatpush2.msra.mxu0 0.0
    %992 = vmatprep.subr.mxu0 0.0
    %993 = vmatpush2.msra.mxu0 0.0
    %994 = vmatprep.subr.mxu0 0.0
    %995 = vmatpush2.msra.mxu0 0.0
    %996 = vmatprep.subr.mxu0 0.0
    %997 = vmatpush2.msra.mxu0 0.0
    %998 = vmatprep.subr.mxu0 0.0
    %999 = vmatpush2.msra.mxu0 0.0
    %1000 = vmatprep.subr.mxu0 0.0
    %1001 = vmatpush2.msra.mxu0 0.0
    %1002 = vmatprep.subr.mxu0 0.0
    %1003 = vmatpush2.msra.mxu0 0.0
    %1004 = vmatprep.subr.mxu0 0.0
    %1005 = vmatpush2.msra.mxu0 0.0
    %1006 = vmatprep.subr.mxu0 0.0
    %1007 = vmatpush2.msra.mxu0 0.0
    %1008 = vmatprep.subr.mxu0 0.0
    %1009 = vmatpush2.msra.mxu0 0.0
    %1010 = vmatprep.subr.mxu0 0.0
    %1011 = vmatpush2.msra.mxu0 0.0
    %1012 = vmatprep.mubr.f32.mxu0 0.0
    %1013 = vmatmul.mubr.f32.gmra.mxu0 %v943
    %v1014 = vpop.f32.mrf.mxu0
    %v1015 = vadd.f32 %v934, %v1014
    %v1016 = vpop.f32.mrf.mxu0
    %1017 = vmatprep.mubr.f32.mxu0 0.0
    %1018 = vmatmul.mubr.f32.gmra.mxu0 %v946
    %v1019 = vpop.f32.mrf.mxu0
    %v1020 = vadd.f32 %v939, %v1019
    %v1021 = vpop.f32.mrf.mxu0
    %1022 = vdwg.mxu0
    %1023 = vrot.lane.b32.xlu0 %v192, 112
    %v1024 = vpop.permute.xlu0 %1023
    %1025 = vrot.lane.b32.xlu0 %v192, 80
    %v1026 = vpop.permute.xlu0 %1025
    %v1027 = vsel %vm203, %v1024, 0
    %v1029 = vsel %vm203, %v1026, 0
    %1031 = vmatprep.subr.mxu0 0.0
    %1032 = vmatpush1.xpose.msra.mxu0 0.0
    %1033 = vmatprep.subr.mxu0 0.0
    %1034 = vmatpush1.xpose.msra.mxu0 0.0
    %1035 = vmatprep.subr.mxu0 0.0
    %1036 = vmatpush1.xpose.msra.mxu0 0.0
    %1037 = vmatprep.subr.mxu0 0.0
    %1038 = vmatpush1.xpose.msra.mxu0 0.0
    %1039 = vmatprep.subr.mxu0 0.0
    %1040 = vmatpush1.xpose.msra.mxu0 0.0
    %1041 = vmatprep.subr.mxu0 0.0
    %1042 = vmatpush1.xpose.msra.mxu0 0.0
    %1043 = vmatprep.subr.mxu0 0.0
    %1044 = vmatpush1.xpose.msra.mxu0 0.0
    %1045 = vmatprep.subr.mxu0 0.0
    %1046 = vmatpush1.xpose.msra.mxu0 0.0
    %1047 = vmatprep.subr.mxu0 0.0
    %1048 = vmatpush1.xpose.msra.mxu0 0.0
    %1049 = vmatprep.subr.mxu0 0.0
    %1050 = vmatpush1.xpose.msra.mxu0 0.0
    %1051 = vmatprep.subr.mxu0 0.0
    %1052 = vmatpush1.xpose.msra.mxu0 0.0
    %1053 = vmatprep.subr.mxu0 0.0
    %1054 = vmatpush1.xpose.msra.mxu0 0.0
    %1055 = vmatprep.subr.mxu0 0.0
    %1056 = vmatpush1.xpose.msra.mxu0 0.0
    %1057 = vmatprep.subr.mxu0 0.0
    %1058 = vmatpush1.xpose.msra.mxu0 0.0
    %1059 = vmatprep.subr.mxu0 0.0
    %1060 = vmatpush1.xpose.msra.mxu0 0.0
    %1061 = vmatprep.subr.mxu0 0.0
    %1062 = vmatpush1.xpose.msra.mxu0 %v1029
    %1063 = vmatprep.subr.mxu0 0.0
    %1064 = vmatpush2.xpose.msra.mxu0 0.0
    %1065 = vmatprep.subr.mxu0 0.0
    %1066 = vmatpush2.xpose.msra.mxu0 0.0
    %1067 = vmatprep.subr.mxu0 0.0
    %1068 = vmatpush2.xpose.msra.mxu0 0.0
    %1069 = vmatprep.subr.mxu0 0.0
    %1070 = vmatpush2.xpose.msra.mxu0 0.0
    %1071 = vmatprep.subr.mxu0 0.0
    %1072 = vmatpush2.xpose.msra.mxu0 0.0
    %1073 = vmatprep.subr.mxu0 0.0
    %1074 = vmatpush2.xpose.msra.mxu0 0.0
    %1075 = vmatprep.subr.mxu0 0.0
    %1076 = vmatpush2.xpose.msra.mxu0 0.0
    %1077 = vmatprep.subr.mxu0 0.0
    %1078 = vmatpush2.xpose.msra.mxu0 0.0
    %1079 = vmatprep.subr.mxu0 0.0
    %1080 = vmatpush2.xpose.msra.mxu0 0.0
    %1081 = vmatprep.subr.mxu0 0.0
    %1082 = vmatpush2.xpose.msra.mxu0 0.0
    %1083 = vmatprep.subr.mxu0 0.0
    %1084 = vmatpush2.xpose.msra.mxu0 0.0
    %1085 = vmatprep.subr.mxu0 0.0
    %1086 = vmatpush2.xpose.msra.mxu0 0.0
    %1087 = vmatprep.subr.mxu0 0.0
    %1088 = vmatpush2.xpose.msra.mxu0 0.0
    %1089 = vmatprep.subr.mxu0 0.0
    %1090 = vmatpush2.xpose.msra.mxu0 0.0
    %1091 = vmatprep.subr.mxu0 0.0
    %1092 = vmatpush2.xpose.msra.mxu0 0.0
    %1093 = vmatprep.subr.mxu0 0.0
    %1094 = vmatpush2.xpose.msra.mxu0 0.0
    %1095 = vmatprep.mubr.f32.mxu0 0.0
    %1096 = vmatmul.mubr.f32.gmra.mxu0 %v1027
    %v1097 = vpop.f32.mrf.mxu0
    %v1098 = vadd.f32 %v55, %v1097
    %v1099 = vpop.f32.mrf.mxu0
    %1100 = vdwg.mxu0
    %1101 = vrot.lane.b32.xlu0 %v197, 112
    %v1102 = vpop.permute.xlu0 %1101
    %1103 = vrot.lane.b32.xlu0 %v197, 80
    %v1104 = vpop.permute.xlu0 %1103
    %v1105 = vsel %vm203, %v1102, 0
    %v1107 = vsel %vm203, %v1104, 0
    %1109 = vmatprep.subr.mxu0 0.0
    %1110 = vmatpush1.xpose.msra.mxu0 0.0
    %1111 = vmatprep.subr.mxu0 0.0
    %1112 = vmatpush1.xpose.msra.mxu0 0.0
    %1113 = vmatprep.subr.mxu0 0.0
    %1114 = vmatpush1.xpose.msra.mxu0 0.0
    %1115 = vmatprep.subr.mxu0 0.0
    %1116 = vmatpush1.xpose.msra.mxu0 0.0
    %1117 = vmatprep.subr.mxu0 0.0
    %1118 = vmatpush1.xpose.msra.mxu0 0.0
    %1119 = vmatprep.subr.mxu0 0.0
    %1120 = vmatpush1.xpose.msra.mxu0 0.0
    %1121 = vmatprep.subr.mxu0 0.0
    %1122 = vmatpush1.xpose.msra.mxu0 0.0
    %1123 = vmatprep.subr.mxu0 0.0
    %1124 = vmatpush1.xpose.msra.mxu0 0.0
    %1125 = vmatprep.subr.mxu0 0.0
    %1126 = vmatpush1.xpose.msra.mxu0 0.0
    %1127 = vmatprep.subr.mxu0 0.0
    %1128 = vmatpush1.xpose.msra.mxu0 0.0
    %1129 = vmatprep.subr.mxu0 0.0
    %1130 = vmatpush1.xpose.msra.mxu0 0.0
    %1131 = vmatprep.subr.mxu0 0.0
    %1132 = vmatpush1.xpose.msra.mxu0 0.0
    %1133 = vmatprep.subr.mxu0 0.0
    %1134 = vmatpush1.xpose.msra.mxu0 0.0
    %1135 = vmatprep.subr.mxu0 0.0
    %1136 = vmatpush1.xpose.msra.mxu0 0.0
    %1137 = vmatprep.subr.mxu0 0.0
    %1138 = vmatpush1.xpose.msra.mxu0 0.0
    %1139 = vmatprep.subr.mxu0 0.0
    %1140 = vmatpush1.xpose.msra.mxu0 %v1107
    %1141 = vmatprep.subr.mxu0 0.0
    %1142 = vmatpush2.xpose.msra.mxu0 0.0
    %1143 = vmatprep.subr.mxu0 0.0
    %1144 = vmatpush2.xpose.msra.mxu0 0.0
    %1145 = vmatprep.subr.mxu0 0.0
    %1146 = vmatpush2.xpose.msra.mxu0 0.0
    %1147 = vmatprep.subr.mxu0 0.0
    %1148 = vmatpush2.xpose.msra.mxu0 0.0
    %1149 = vmatprep.subr.mxu0 0.0
    %1150 = vmatpush2.xpose.msra.mxu0 0.0
    %1151 = vmatprep.subr.mxu0 0.0
    %1152 = vmatpush2.xpose.msra.mxu0 0.0
    %1153 = vmatprep.subr.mxu0 0.0
    %1154 = vmatpush2.xpose.msra.mxu0 0.0
    %1155 = vmatprep.subr.mxu0 0.0
    %1156 = vmatpush2.xpose.msra.mxu0 0.0
    %1157 = vmatprep.subr.mxu0 0.0
    %1158 = vmatpush2.xpose.msra.mxu0 0.0
    %1159 = vmatprep.subr.mxu0 0.0
    %1160 = vmatpush2.xpose.msra.mxu0 0.0
    %1161 = vmatprep.subr.mxu0 0.0
    %1162 = vmatpush2.xpose.msra.mxu0 0.0
    %1163 = vmatprep.subr.mxu0 0.0
    %1164 = vmatpush2.xpose.msra.mxu0 0.0
    %1165 = vmatprep.subr.mxu0 0.0
    %1166 = vmatpush2.xpose.msra.mxu0 0.0
    %1167 = vmatprep.subr.mxu0 0.0
    %1168 = vmatpush2.xpose.msra.mxu0 0.0
    %1169 = vmatprep.subr.mxu0 0.0
    %1170 = vmatpush2.xpose.msra.mxu0 0.0
    %1171 = vmatprep.subr.mxu0 0.0
    %1172 = vmatpush2.xpose.msra.mxu0 0.0
    %1173 = vmatprep.mubr.f32.mxu0 0.0
    %1174 = vmatmul.mubr.f32.gmra.mxu0 %v1105
    %v1175 = vpop.f32.mrf.mxu0
    %v1176 = vadd.f32 %v59, %v1175
    %v1177 = vpop.f32.mrf.mxu0
    %1178 = vdwg.mxu0
    %v1179 = vsel %vm203, %v1098, -inf
    %1180 = vmax.xlane.f32.xlu0 %v1179
    %v1181 = vpop.xlane.xlu0 %1180
    %v1182 = vsel %vm203, %v1176, -inf
    %1183 = vmax.xlane.f32.xlu0 %v1182
    %v1184 = vpop.xlane.xlu0 %1183
    %v1185 = vsub.f32 %v1098, %v1181
    %v1186 = vsub.f32 %v1176, %v1184
    %v1187 = vmul.f32 %v1185, 1.442695
    %v1188 = vpow.pop %v1187
    %v1189 = vmul.f32 %v1186, 1.442695
    %v1190 = vpow.pop %v1189
    %v1191 = vsel %vm203, %v1188, 0.0
    %1192 = vadd.xlane.f32.xlu0 %v1191
    %v1193 = vpop.xlane.xlu0 %1192
    %v1194 = vsel %vm203, %v1190, 0.0
    %1195 = vadd.xlane.f32.xlu0 %v1194
    %v1196 = vpop.xlane.xlu0 %1195
    %v1197 = vrcp.pop %v1193
    %v1198 = vmul.f32 %v1188, %v1197
    %v1199 = vrcp.pop %v1196
    %v1200 = vmul.f32 %v1190, %v1199
    %1201 = vrot.lane.b32.xlu0 %v192, 48
    %v1202 = vpop.permute.xlu0 %1201
    %v1205 = vsel %vm203, %v1198, 0
    %1207 = vmatprep.subr.mxu0 0.0
    %1208 = vmatpush1.msra.mxu0 0.0
    %1209 = vmatprep.subr.mxu0 0.0
    %1210 = vmatpush1.msra.mxu0 0.0
    %1211 = vmatprep.subr.mxu0 0.0
    %1212 = vmatpush1.msra.mxu0 0.0
    %1213 = vmatprep.subr.mxu0 0.0
    %1214 = vmatpush1.msra.mxu0 0.0
    %1215 = vmatprep.subr.mxu0 0.0
    %1216 = vmatpush1.msra.mxu0 0.0
    %1217 = vmatprep.subr.mxu0 0.0
    %1218 = vmatpush1.msra.mxu0 0.0
    %1219 = vmatprep.subr.mxu0 0.0
    %1220 = vmatpush1.msra.mxu0 0.0
    %1221 = vmatprep.subr.mxu0 0.0
    %1222 = vmatpush1.msra.mxu0 0.0
    %1223 = vmatprep.subr.mxu0 0.0
    %1224 = vmatpush1.msra.mxu0 0.0
    %1225 = vmatprep.subr.mxu0 0.0
    %1226 = vmatpush1.msra.mxu0 0.0
    %1227 = vmatprep.subr.mxu0 0.0
    %1228 = vmatpush1.msra.mxu0 0.0
    %1229 = vmatprep.subr.mxu0 0.0
    %1230 = vmatpush1.msra.mxu0 0.0
    %1231 = vmatprep.subr.mxu0 0.0
    %1232 = vmatpush1.msra.mxu0 0.0
    %1233 = vmatprep.subr.mxu0 0.0
    %1234 = vmatpush1.msra.mxu0 0.0
    %1235 = vmatprep.subr.mxu0 0.0
    %1236 = vmatpush1.msra.mxu0 0.0
    %1237 = vmatprep.subr.mxu0 0.0
    %1238 = vmatpush1.msra.mxu0 %v1202
    %1239 = vmatprep.subr.mxu0 0.0
    %1240 = vmatpush2.msra.mxu0 0.0
    %1241 = vmatprep.subr.mxu0 0.0
    %1242 = vmatpush2.msra.mxu0 0.0
    %1243 = vmatprep.subr.mxu0 0.0
    %1244 = vmatpush2.msra.mxu0 0.0
    %1245 = vmatprep.subr.mxu0 0.0
    %1246 = vmatpush2.msra.mxu0 0.0
    %1247 = vmatprep.subr.mxu0 0.0
    %1248 = vmatpush2.msra.mxu0 0.0
    %1249 = vmatprep.subr.mxu0 0.0
    %1250 = vmatpush2.msra.mxu0 0.0
    %1251 = vmatprep.subr.mxu0 0.0
    %1252 = vmatpush2.msra.mxu0 0.0
    %1253 = vmatprep.subr.mxu0 0.0
    %1254 = vmatpush2.msra.mxu0 0.0
    %1255 = vmatprep.subr.mxu0 0.0
    %1256 = vmatpush2.msra.mxu0 0.0
    %1257 = vmatprep.subr.mxu0 0.0
    %1258 = vmatpush2.msra.mxu0 0.0
    %1259 = vmatprep.subr.mxu0 0.0
    %1260 = vmatpush2.msra.mxu0 0.0
    %1261 = vmatprep.subr.mxu0 0.0
    %1262 = vmatpush2.msra.mxu0 0.0
    %1263 = vmatprep.subr.mxu0 0.0
    %1264 = vmatpush2.msra.mxu0 0.0
    %1265 = vmatprep.subr.mxu0 0.0
    %1266 = vmatpush2.msra.mxu0 0.0
    %1267 = vmatprep.subr.mxu0 0.0
    %1268 = vmatpush2.msra.mxu0 0.0
    %1269 = vmatprep.subr.mxu0 0.0
    %1270 = vmatpush2.msra.mxu0 0.0
    %1271 = vmatprep.mubr.f32.mxu0 0.0
    %1272 = vmatmul.mubr.f32.gmra.mxu0 %v1205
    %v1273 = vpop.f32.mrf.mxu0
    %v1274 = vadd.f32 0.0, %v1273
    %v1275 = vpop.f32.mrf.mxu0
    %1276 = vdwg.mxu0
    %1277 = vrot.lane.b32.xlu0 %v197, 48
    %v1278 = vpop.permute.xlu0 %1277
    %v1281 = vsel %vm203, %v1200, 0
    %1283 = vmatprep.subr.mxu0 0.0
    %1284 = vmatpush1.msra.mxu0 0.0
    %1285 = vmatprep.subr.mxu0 0.0
    %1286 = vmatpush1.msra.mxu0 0.0
    %1287 = vmatprep.subr.mxu0 0.0
    %1288 = vmatpush1.msra.mxu0 0.0
    %1289 = vmatprep.subr.mxu0 0.0
    %1290 = vmatpush1.msra.mxu0 0.0
    %1291 = vmatprep.subr.mxu0 0.0
    %1292 = vmatpush1.msra.mxu0 0.0
    %1293 = vmatprep.subr.mxu0 0.0
    %1294 = vmatpush1.msra.mxu0 0.0
    %1295 = vmatprep.subr.mxu0 0.0
    %1296 = vmatpush1.msra.mxu0 0.0
    %1297 = vmatprep.subr.mxu0 0.0
    %1298 = vmatpush1.msra.mxu0 0.0
    %1299 = vmatprep.subr.mxu0 0.0
    %1300 = vmatpush1.msra.mxu0 0.0
    %1301 = vmatprep.subr.mxu0 0.0
    %1302 = vmatpush1.msra.mxu0 0.0
    %1303 = vmatprep.subr.mxu0 0.0
    %1304 = vmatpush1.msra.mxu0 0.0
    %1305 = vmatprep.subr.mxu0 0.0
    %1306 = vmatpush1.msra.mxu0 0.0
    %1307 = vmatprep.subr.mxu0 0.0
    %1308 = vmatpush1.msra.mxu0 0.0
    %1309 = vmatprep.subr.mxu0 0.0
    %1310 = vmatpush1.msra.mxu0 0.0
    %1311 = vmatprep.subr.mxu0 0.0
    %1312 = vmatpush1.msra.mxu0 0.0
    %1313 = vmatprep.subr.mxu0 0.0
    %1314 = vmatpush1.msra.mxu0 %v1278
    %1315 = vmatprep.subr.mxu0 0.0
    %1316 = vmatpush2.msra.mxu0 0.0
    %1317 = vmatprep.subr.mxu0 0.0
    %1318 = vmatpush2.msra.mxu0 0.0
    %1319 = vmatprep.subr.mxu0 0.0
    %1320 = vmatpush2.msra.mxu0 0.0
    %1321 = vmatprep.subr.mxu0 0.0
    %1322 = vmatpush2.msra.mxu0 0.0
    %1323 = vmatprep.subr.mxu0 0.0
    %1324 = vmatpush2.msra.mxu0 0.0
    %1325 = vmatprep.subr.mxu0 0.0
    %1326 = vmatpush2.msra.mxu0 0.0
    %1327 = vmatprep.subr.mxu0 0.0
    %1328 = vmatpush2.msra.mxu0 0.0
    %1329 = vmatprep.subr.mxu0 0.0
    %1330 = vmatpush2.msra.mxu0 0.0
    %1331 = vmatprep.subr.mxu0 0.0
    %1332 = vmatpush2.msra.mxu0 0.0
    %1333 = vmatprep.subr.mxu0 0.0
    %1334 = vmatpush2.msra.mxu0 0.0
    %1335 = vmatprep.subr.mxu0 0.0
    %1336 = vmatpush2.msra.mxu0 0.0
    %1337 = vmatprep.subr.mxu0 0.0
    %1338 = vmatpush2.msra.mxu0 0.0
    %1339 = vmatprep.subr.mxu0 0.0
    %1340 = vmatpush2.msra.mxu0 0.0
    %1341 = vmatprep.subr.mxu0 0.0
    %1342 = vmatpush2.msra.mxu0 0.0
    %1343 = vmatprep.subr.mxu0 0.0
    %1344 = vmatpush2.msra.mxu0 0.0
    %1345 = vmatprep.subr.mxu0 0.0
    %1346 = vmatpush2.msra.mxu0 0.0
    %1347 = vmatprep.mubr.f32.mxu0 0.0
    %1348 = vmatmul.mubr.f32.gmra.mxu0 %v1281
    %v1349 = vpop.f32.mrf.mxu0
    %v1350 = vadd.f32 0.0, %v1349
    %v1351 = vpop.f32.mrf.mxu0
    %1352 = vdwg.mxu0
    %v1353 = vld [vmem:[%s5 + $0x10] sm:$0xff]
    %v1355 = vsel %vm203, %v1274, 0
    %v1358 = vsel %vm203, %v1350, 0
    %1360 = vmatprep.subr.mxu0 0.0
    %1361 = vmatpush1.msra.mxu0 0.0
    %1362 = vmatprep.subr.mxu0 0.0
    %1363 = vmatpush1.msra.mxu0 0.0
    %1364 = vmatprep.subr.mxu0 0.0
    %1365 = vmatpush1.msra.mxu0 0.0
    %1366 = vmatprep.subr.mxu0 0.0
    %1367 = vmatpush1.msra.mxu0 0.0
    %1368 = vmatprep.subr.mxu0 0.0
    %1369 = vmatpush1.msra.mxu0 0.0
    %1370 = vmatprep.subr.mxu0 0.0
    %1371 = vmatpush1.msra.mxu0 0.0
    %1372 = vmatprep.subr.mxu0 0.0
    %1373 = vmatpush1.msra.mxu0 0.0
    %1374 = vmatprep.subr.mxu0 0.0
    %1375 = vmatpush1.msra.mxu0 0.0
    %1376 = vmatprep.subr.mxu0 0.0
    %1377 = vmatpush1.msra.mxu0 0.0
    %1378 = vmatprep.subr.mxu0 0.0
    %1379 = vmatpush1.msra.mxu0 0.0
    %1380 = vmatprep.subr.mxu0 0.0
    %1381 = vmatpush1.msra.mxu0 0.0
    %1382 = vmatprep.subr.mxu0 0.0
    %1383 = vmatpush1.msra.mxu0 0.0
    %1384 = vmatprep.subr.mxu0 0.0
    %1385 = vmatpush1.msra.mxu0 0.0
    %1386 = vmatprep.subr.mxu0 0.0
    %1387 = vmatpush1.msra.mxu0 0.0
    %1388 = vmatprep.subr.mxu0 0.0
    %1389 = vmatpush1.msra.mxu0 0.0
    %1390 = vmatprep.subr.mxu0 0.0
    %1391 = vmatpush1.msra.mxu0 %v1353
    %1392 = vmatprep.subr.mxu0 0.0
    %1393 = vmatpush2.msra.mxu0 0.0
    %1394 = vmatprep.subr.mxu0 0.0
    %1395 = vmatpush2.msra.mxu0 0.0
    %1396 = vmatprep.subr.mxu0 0.0
    %1397 = vmatpush2.msra.mxu0 0.0
    %1398 = vmatprep.subr.mxu0 0.0
    %1399 = vmatpush2.msra.mxu0 0.0
    %1400 = vmatprep.subr.mxu0 0.0
    %1401 = vmatpush2.msra.mxu0 0.0
    %1402 = vmatprep.subr.mxu0 0.0
    %1403 = vmatpush2.msra.mxu0 0.0
    %1404 = vmatprep.subr.mxu0 0.0
    %1405 = vmatpush2.msra.mxu0 0.0
    %1406 = vmatprep.subr.mxu0 0.0
    %1407 = vmatpush2.msra.mxu0 0.0
    %1408 = vmatprep.subr.mxu0 0.0
    %1409 = vmatpush2.msra.mxu0 0.0
    %1410 = vmatprep.subr.mxu0 0.0
    %1411 = vmatpush2.msra.mxu0 0.0
    %1412 = vmatprep.subr.mxu0 0.0
    %1413 = vmatpush2.msra.mxu0 0.0
    %1414 = vmatprep.subr.mxu0 0.0
    %1415 = vmatpush2.msra.mxu0 0.0
    %1416 = vmatprep.subr.mxu0 0.0
    %1417 = vmatpush2.msra.mxu0 0.0
    %1418 = vmatprep.subr.mxu0 0.0
    %1419 = vmatpush2.msra.mxu0 0.0
    %1420 = vmatprep.subr.mxu0 0.0
    %1421 = vmatpush2.msra.mxu0 0.0
    %1422 = vmatprep.subr.mxu0 0.0
    %1423 = vmatpush2.msra.mxu0 0.0
    %1424 = vmatprep.mubr.f32.mxu0 0.0
    %1425 = vmatmul.mubr.f32.gmra.mxu0 %v1355
    %v1426 = vpop.f32.mrf.mxu0
    %v1427 = vadd.f32 0.0, %v1426
    %v1428 = vpop.f32.mrf.mxu0
    %1429 = vmatprep.mubr.f32.mxu0 0.0
    %1430 = vmatmul.mubr.f32.gmra.mxu0 %v1358
    %v1431 = vpop.f32.mrf.mxu0
    %v1432 = vadd.f32 0.0, %v1431
    %v1433 = vpop.f32.mrf.mxu0
    %1434 = vdwg.mxu0
    %v1435 = vadd.f32 %v1015, %v1427
    %v1436 = vadd.f32 %v1020, %v1432
    %1437 = vrot.lane.b32.xlu0 %v192, 104
    %v1438 = vpop.permute.xlu0 %1437
    %1439 = vrot.lane.b32.xlu0 %v192, 72
    %v1440 = vpop.permute.xlu0 %1439
    %v1441 = vsel %vm203, %v1438, 0
    %v1443 = vsel %vm203, %v1440, 0
    %1445 = vmatprep.subr.mxu0 0.0
    %1446 = vmatpush1.xpose.msra.mxu0 0.0
    %1447 = vmatprep.subr.mxu0 0.0
    %1448 = vmatpush1.xpose.msra.mxu0 0.0
    %1449 = vmatprep.subr.mxu0 0.0
    %1450 = vmatpush1.xpose.msra.mxu0 0.0
    %1451 = vmatprep.subr.mxu0 0.0
    %1452 = vmatpush1.xpose.msra.mxu0 0.0
    %1453 = vmatprep.subr.mxu0 0.0
    %1454 = vmatpush1.xpose.msra.mxu0 0.0
    %1455 = vmatprep.subr.mxu0 0.0
    %1456 = vmatpush1.xpose.msra.mxu0 0.0
    %1457 = vmatprep.subr.mxu0 0.0
    %1458 = vmatpush1.xpose.msra.mxu0 0.0
    %1459 = vmatprep.subr.mxu0 0.0
    %1460 = vmatpush1.xpose.msra.mxu0 0.0
    %1461 = vmatprep.subr.mxu0 0.0
    %1462 = vmatpush1.xpose.msra.mxu0 0.0
    %1463 = vmatprep.subr.mxu0 0.0
    %1464 = vmatpush1.xpose.msra.mxu0 0.0
    %1465 = vmatprep.subr.mxu0 0.0
    %1466 = vmatpush1.xpose.msra.mxu0 0.0
    %1467 = vmatprep.subr.mxu0 0.0
    %1468 = vmatpush1.xpose.msra.mxu0 0.0
    %1469 = vmatprep.subr.mxu0 0.0
    %1470 = vmatpush1.xpose.msra.mxu0 0.0
    %1471 = vmatprep.subr.mxu0 0.0
    %1472 = vmatpush1.xpose.msra.mxu0 0.0
    %1473 = vmatprep.subr.mxu0 0.0
    %1474 = vmatpush1.xpose.msra.mxu0 0.0
    %1475 = vmatprep.subr.mxu0 0.0
    %1476 = vmatpush1.xpose.msra.mxu0 %v1443
    %1477 = vmatprep.subr.mxu0 0.0
    %1478 = vmatpush2.xpose.msra.mxu0 0.0
    %1479 = vmatprep.subr.mxu0 0.0
    %1480 = vmatpush2.xpose.msra.mxu0 0.0
    %1481 = vmatprep.subr.mxu0 0.0
    %1482 = vmatpush2.xpose.msra.mxu0 0.0
    %1483 = vmatprep.subr.mxu0 0.0
    %1484 = vmatpush2.xpose.msra.mxu0 0.0
    %1485 = vmatprep.subr.mxu0 0.0
    %1486 = vmatpush2.xpose.msra.mxu0 0.0
    %1487 = vmatprep.subr.mxu0 0.0
    %1488 = vmatpush2.xpose.msra.mxu0 0.0
    %1489 = vmatprep.subr.mxu0 0.0
    %1490 = vmatpush2.xpose.msra.mxu0 0.0
    %1491 = vmatprep.subr.mxu0 0.0
    %1492 = vmatpush2.xpose.msra.mxu0 0.0
    %1493 = vmatprep.subr.mxu0 0.0
    %1494 = vmatpush2.xpose.msra.mxu0 0.0
    %1495 = vmatprep.subr.mxu0 0.0
    %1496 = vmatpush2.xpose.msra.mxu0 0.0
    %1497 = vmatprep.subr.mxu0 0.0
    %1498 = vmatpush2.xpose.msra.mxu0 0.0
    %1499 = vmatprep.subr.mxu0 0.0
    %1500 = vmatpush2.xpose.msra.mxu0 0.0
    %1501 = vmatprep.subr.mxu0 0.0
    %1502 = vmatpush2.xpose.msra.mxu0 0.0
    %1503 = vmatprep.subr.mxu0 0.0
    %1504 = vmatpush2.xpose.msra.mxu0 0.0
    %1505 = vmatprep.subr.mxu0 0.0
    %1506 = vmatpush2.xpose.msra.mxu0 0.0
    %1507 = vmatprep.subr.mxu0 0.0
    %1508 = vmatpush2.xpose.msra.mxu0 0.0
    %1509 = vmatprep.mubr.f32.mxu0 0.0
    %1510 = vmatmul.mubr.f32.gmra.mxu0 %v1441
    %v1511 = vpop.f32.mrf.mxu0
    %v1512 = vadd.f32 %v55, %v1511
    %v1513 = vpop.f32.mrf.mxu0
    %1514 = vdwg.mxu0
    %1515 = vrot.lane.b32.xlu0 %v197, 104
    %v1516 = vpop.permute.xlu0 %1515
    %1517 = vrot.lane.b32.xlu0 %v197, 72
    %v1518 = vpop.permute.xlu0 %1517
    %v1519 = vsel %vm203, %v1516, 0
    %v1521 = vsel %vm203, %v1518, 0
    %1523 = vmatprep.subr.mxu0 0.0
    %1524 = vmatpush1.xpose.msra.mxu0 0.0
    %1525 = vmatprep.subr.mxu0 0.0
    %1526 = vmatpush1.xpose.msra.mxu0 0.0
    %1527 = vmatprep.subr.mxu0 0.0
    %1528 = vmatpush1.xpose.msra.mxu0 0.0
    %1529 = vmatprep.subr.mxu0 0.0
    %1530 = vmatpush1.xpose.msra.mxu0 0.0
    %1531 = vmatprep.subr.mxu0 0.0
    %1532 = vmatpush1.xpose.msra.mxu0 0.0
    %1533 = vmatprep.subr.mxu0 0.0
    %1534 = vmatpush1.xpose.msra.mxu0 0.0
    %1535 = vmatprep.subr.mxu0 0.0
    %1536 = vmatpush1.xpose.msra.mxu0 0.0
    %1537 = vmatprep.subr.mxu0 0.0
    %1538 = vmatpush1.xpose.msra.mxu0 0.0
    %1539 = vmatprep.subr.mxu0 0.0
    %1540 = vmatpush1.xpose.msra.mxu0 0.0
    %1541 = vmatprep.subr.mxu0 0.0
    %1542 = vmatpush1.xpose.msra.mxu0 0.0
    %1543 = vmatprep.subr.mxu0 0.0
    %1544 = vmatpush1.xpose.msra.mxu0 0.0
    %1545 = vmatprep.subr.mxu0 0.0
    %1546 = vmatpush1.xpose.msra.mxu0 0.0
    %1547 = vmatprep.subr.mxu0 0.0
    %1548 = vmatpush1.xpose.msra.mxu0 0.0
    %1549 = vmatprep.subr.mxu0 0.0
    %1550 = vmatpush1.xpose.msra.mxu0 0.0
    %1551 = vmatprep.subr.mxu0 0.0
    %1552 = vmatpush1.xpose.msra.mxu0 0.0
    %1553 = vmatprep.subr.mxu0 0.0
    %1554 = vmatpush1.xpose.msra.mxu0 %v1521
    %1555 = vmatprep.subr.mxu0 0.0
    %1556 = vmatpush2.xpose.msra.mxu0 0.0
    %1557 = vmatprep.subr.mxu0 0.0
    %1558 = vmatpush2.xpose.msra.mxu0 0.0
    %1559 = vmatprep.subr.mxu0 0.0
    %1560 = vmatpush2.xpose.msra.mxu0 0.0
    %1561 = vmatprep.subr.mxu0 0.0
    %1562 = vmatpush2.xpose.msra.mxu0 0.0
    %1563 = vmatprep.subr.mxu0 0.0
    %1564 = vmatpush2.xpose.msra.mxu0 0.0
    %1565 = vmatprep.subr.mxu0 0.0
    %1566 = vmatpush2.xpose.msra.mxu0 0.0
    %1567 = vmatprep.subr.mxu0 0.0
    %1568 = vmatpush2.xpose.msra.mxu0 0.0
    %1569 = vmatprep.subr.mxu0 0.0
    %1570 = vmatpush2.xpose.msra.mxu0 0.0
    %1571 = vmatprep.subr.mxu0 0.0
    %1572 = vmatpush2.xpose.msra.mxu0 0.0
    %1573 = vmatprep.subr.mxu0 0.0
    %1574 = vmatpush2.xpose.msra.mxu0 0.0
    %1575 = vmatprep.subr.mxu0 0.0
    %1576 = vmatpush2.xpose.msra.mxu0 0.0
    %1577 = vmatprep.subr.mxu0 0.0
    %1578 = vmatpush2.xpose.msra.mxu0 0.0
    %1579 = vmatprep.subr.mxu0 0.0
    %1580 = vmatpush2.xpose.msra.mxu0 0.0
    %1581 = vmatprep.subr.mxu0 0.0
    %1582 = vmatpush2.xpose.msra.mxu0 0.0
    %1583 = vmatprep.subr.mxu0 0.0
    %1584 = vmatpush2.xpose.msra.mxu0 0.0
    %1585 = vmatprep.subr.mxu0 0.0
    %1586 = vmatpush2.xpose.msra.mxu0 0.0
    %1587 = vmatprep.mubr.f32.mxu0 0.0
    %1588 = vmatmul.mubr.f32.gmra.mxu0 %v1519
    %v1589 = vpop.f32.mrf.mxu0
    %v1590 = vadd.f32 %v59, %v1589
    %v1591 = vpop.f32.mrf.mxu0
    %1592 = vdwg.mxu0
    %v1593 = vsel %vm203, %v1512, -inf
    %1594 = vmax.xlane.f32.xlu0 %v1593
    %v1595 = vpop.xlane.xlu0 %1594
    %v1596 = vsel %vm203, %v1590, -inf
    %1597 = vmax.xlane.f32.xlu0 %v1596
    %v1598 = vpop.xlane.xlu0 %1597
    %v1599 = vsub.f32 %v1512, %v1595
    %v1600 = vsub.f32 %v1590, %v1598
    %v1601 = vmul.f32 %v1599, 1.442695
    %v1602 = vpow.pop %v1601
    %v1603 = vmul.f32 %v1600, 1.442695
    %v1604 = vpow.pop %v1603
    %v1605 = vsel %vm203, %v1602, 0.0
    %1606 = vadd.xlane.f32.xlu0 %v1605
    %v1607 = vpop.xlane.xlu0 %1606
    %v1608 = vsel %vm203, %v1604, 0.0
    %1609 = vadd.xlane.f32.xlu0 %v1608
    %v1610 = vpop.xlane.xlu0 %1609
    %v1611 = vrcp.pop %v1607
    %v1612 = vmul.f32 %v1602, %v1611
    %v1613 = vrcp.pop %v1610
    %v1614 = vmul.f32 %v1604, %v1613
    %1615 = vrot.lane.b32.xlu0 %v192, 40
    %v1616 = vpop.permute.xlu0 %1615
    %v1619 = vsel %vm203, %v1612, 0
    %1621 = vmatprep.subr.mxu0 0.0
    %1622 = vmatpush1.msra.mxu0 0.0
    %1623 = vmatprep.subr.mxu0 0.0
    %1624 = vmatpush1.msra.mxu0 0.0
    %1625 = vmatprep.subr.mxu0 0.0
    %1626 = vmatpush1.msra.mxu0 0.0
    %1627 = vmatprep.subr.mxu0 0.0
    %1628 = vmatpush1.msra.mxu0 0.0
    %1629 = vmatprep.subr.mxu0 0.0
    %1630 = vmatpush1.msra.mxu0 0.0
    %1631 = vmatprep.subr.mxu0 0.0
    %1632 = vmatpush1.msra.mxu0 0.0
    %1633 = vmatprep.subr.mxu0 0.0
    %1634 = vmatpush1.msra.mxu0 0.0
    %1635 = vmatprep.subr.mxu0 0.0
    %1636 = vmatpush1.msra.mxu0 0.0
    %1637 = vmatprep.subr.mxu0 0.0
    %1638 = vmatpush1.msra.mxu0 0.0
    %1639 = vmatprep.subr.mxu0 0.0
    %1640 = vmatpush1.msra.mxu0 0.0
    %1641 = vmatprep.subr.mxu0 0.0
    %1642 = vmatpush1.msra.mxu0 0.0
    %1643 = vmatprep.subr.mxu0 0.0
    %1644 = vmatpush1.msra.mxu0 0.0
    %1645 = vmatprep.subr.mxu0 0.0
    %1646 = vmatpush1.msra.mxu0 0.0
    %1647 = vmatprep.subr.mxu0 0.0
    %1648 = vmatpush1.msra.mxu0 0.0
    %1649 = vmatprep.subr.mxu0 0.0
    %1650 = vmatpush1.msra.mxu0 0.0
    %1651 = vmatprep.subr.mxu0 0.0
    %1652 = vmatpush1.msra.mxu0 %v1616
    %1653 = vmatprep.subr.mxu0 0.0
    %1654 = vmatpush2.msra.mxu0 0.0
    %1655 = vmatprep.subr.mxu0 0.0
    %1656 = vmatpush2.msra.mxu0 0.0
    %1657 = vmatprep.subr.mxu0 0.0
    %1658 = vmatpush2.msra.mxu0 0.0
    %1659 = vmatprep.subr.mxu0 0.0
    %1660 = vmatpush2.msra.mxu0 0.0
    %1661 = vmatprep.subr.mxu0 0.0
    %1662 = vmatpush2.msra.mxu0 0.0
    %1663 = vmatprep.subr.mxu0 0.0
    %1664 = vmatpush2.msra.mxu0 0.0
    %1665 = vmatprep.subr.mxu0 0.0
    %1666 = vmatpush2.msra.mxu0 0.0
    %1667 = vmatprep.subr.mxu0 0.0
    %1668 = vmatpush2.msra.mxu0 0.0
    %1669 = vmatprep.subr.mxu0 0.0
    %1670 = vmatpush2.msra.mxu0 0.0
    %1671 = vmatprep.subr.mxu0 0.0
    %1672 = vmatpush2.msra.mxu0 0.0
    %1673 = vmatprep.subr.mxu0 0.0
    %1674 = vmatpush2.msra.mxu0 0.0
    %1675 = vmatprep.subr.mxu0 0.0
    %1676 = vmatpush2.msra.mxu0 0.0
    %1677 = vmatprep.subr.mxu0 0.0
    %1678 = vmatpush2.msra.mxu0 0.0
    %1679 = vmatprep.subr.mxu0 0.0
    %1680 = vmatpush2.msra.mxu0 0.0
    %1681 = vmatprep.subr.mxu0 0.0
    %1682 = vmatpush2.msra.mxu0 0.0
    %1683 = vmatprep.subr.mxu0 0.0
    %1684 = vmatpush2.msra.mxu0 0.0
    %1685 = vmatprep.mubr.f32.mxu0 0.0
    %1686 = vmatmul.mubr.f32.gmra.mxu0 %v1619
    %v1687 = vpop.f32.mrf.mxu0
    %v1688 = vadd.f32 0.0, %v1687
    %v1689 = vpop.f32.mrf.mxu0
    %1690 = vdwg.mxu0
    %1691 = vrot.lane.b32.xlu0 %v197, 40
    %v1692 = vpop.permute.xlu0 %1691
    %v1695 = vsel %vm203, %v1614, 0
    %1697 = vmatprep.subr.mxu0 0.0
    %1698 = vmatpush1.msra.mxu0 0.0
    %1699 = vmatprep.subr.mxu0 0.0
    %1700 = vmatpush1.msra.mxu0 0.0
    %1701 = vmatprep.subr.mxu0 0.0
    %1702 = vmatpush1.msra.mxu0 0.0
    %1703 = vmatprep.subr.mxu0 0.0
    %1704 = vmatpush1.msra.mxu0 0.0
    %1705 = vmatprep.subr.mxu0 0.0
    %1706 = vmatpush1.msra.mxu0 0.0
    %1707 = vmatprep.subr.mxu0 0.0
    %1708 = vmatpush1.msra.mxu0 0.0
    %1709 = vmatprep.subr.mxu0 0.0
    %1710 = vmatpush1.msra.mxu0 0.0
    %1711 = vmatprep.subr.mxu0 0.0
    %1712 = vmatpush1.msra.mxu0 0.0
    %1713 = vmatprep.subr.mxu0 0.0
    %1714 = vmatpush1.msra.mxu0 0.0
    %1715 = vmatprep.subr.mxu0 0.0
    %1716 = vmatpush1.msra.mxu0 0.0
    %1717 = vmatprep.subr.mxu0 0.0
    %1718 = vmatpush1.msra.mxu0 0.0
    %1719 = vmatprep.subr.mxu0 0.0
    %1720 = vmatpush1.msra.mxu0 0.0
    %1721 = vmatprep.subr.mxu0 0.0
    %1722 = vmatpush1.msra.mxu0 0.0
    %1723 = vmatprep.subr.mxu0 0.0
    %1724 = vmatpush1.msra.mxu0 0.0
    %1725 = vmatprep.subr.mxu0 0.0
    %1726 = vmatpush1.msra.mxu0 0.0
    %1727 = vmatprep.subr.mxu0 0.0
    %1728 = vmatpush1.msra.mxu0 %v1692
    %1729 = vmatprep.subr.mxu0 0.0
    %1730 = vmatpush2.msra.mxu0 0.0
    %1731 = vmatprep.subr.mxu0 0.0
    %1732 = vmatpush2.msra.mxu0 0.0
    %1733 = vmatprep.subr.mxu0 0.0
    %1734 = vmatpush2.msra.mxu0 0.0
    %1735 = vmatprep.subr.mxu0 0.0
    %1736 = vmatpush2.msra.mxu0 0.0
    %1737 = vmatprep.subr.mxu0 0.0
    %1738 = vmatpush2.msra.mxu0 0.0
    %1739 = vmatprep.subr.mxu0 0.0
    %1740 = vmatpush2.msra.mxu0 0.0
    %1741 = vmatprep.subr.mxu0 0.0
    %1742 = vmatpush2.msra.mxu0 0.0
    %1743 = vmatprep.subr.mxu0 0.0
    %1744 = vmatpush2.msra.mxu0 0.0
    %1745 = vmatprep.subr.mxu0 0.0
    %1746 = vmatpush2.msra.mxu0 0.0
    %1747 = vmatprep.subr.mxu0 0.0
    %1748 = vmatpush2.msra.mxu0 0.0
    %1749 = vmatprep.subr.mxu0 0.0
    %1750 = vmatpush2.msra.mxu0 0.0
    %1751 = vmatprep.subr.mxu0 0.0
    %1752 = vmatpush2.msra.mxu0 0.0
    %1753 = vmatprep.subr.mxu0 0.0
    %1754 = vmatpush2.msra.mxu0 0.0
    %1755 = vmatprep.subr.mxu0 0.0
    %1756 = vmatpush2.msra.mxu0 0.0
    %1757 = vmatprep.subr.mxu0 0.0
    %1758 = vmatpush2.msra.mxu0 0.0
    %1759 = vmatprep.subr.mxu0 0.0
    %1760 = vmatpush2.msra.mxu0 0.0
    %1761 = vmatprep.mubr.f32.mxu0 0.0
    %1762 = vmatmul.mubr.f32.gmra.mxu0 %v1695
    %v1763 = vpop.f32.mrf.mxu0
    %v1764 = vadd.f32 0.0, %v1763
    %v1765 = vpop.f32.mrf.mxu0
    %1766 = vdwg.mxu0
    %v1767 = vld [vmem:[%s5 + $0x18] sm:$0xff]
    %v1769 = vsel %vm203, %v1688, 0
    %v1772 = vsel %vm203, %v1764, 0
    %1774 = vmatprep.subr.mxu0 0.0
    %1775 = vmatpush1.msra.mxu0 0.0
    %1776 = vmatprep.subr.mxu0 0.0
    %1777 = vmatpush1.msra.mxu0 0.0
    %1778 = vmatprep.subr.mxu0 0.0
    %1779 = vmatpush1.msra.mxu0 0.0
    %1780 = vmatprep.subr.mxu0 0.0
    %1781 = vmatpush1.msra.mxu0 0.0
    %1782 = vmatprep.subr.mxu0 0.0
    %1783 = vmatpush1.msra.mxu0 0.0
    %1784 = vmatprep.subr.mxu0 0.0
    %1785 = vmatpush1.msra.mxu0 0.0
    %1786 = vmatprep.subr.mxu0 0.0
    %1787 = vmatpush1.msra.mxu0 0.0
    %1788 = vmatprep.subr.mxu0 0.0
    %1789 = vmatpush1.msra.mxu0 0.0
    %1790 = vmatprep.subr.mxu0 0.0
    %1791 = vmatpush1.msra.mxu0 0.0
    %1792 = vmatprep.subr.mxu0 0.0
    %1793 = vmatpush1.msra.mxu0 0.0
    %1794 = vmatprep.subr.mxu0 0.0
    %1795 = vmatpush1.msra.mxu0 0.0
    %1796 = vmatprep.subr.mxu0 0.0
    %1797 = vmatpush1.msra.mxu0 0.0
    %1798 = vmatprep.subr.mxu0 0.0
    %1799 = vmatpush1.msra.mxu0 0.0
    %1800 = vmatprep.subr.mxu0 0.0
    %1801 = vmatpush1.msra.mxu0 0.0
    %1802 = vmatprep.subr.mxu0 0.0
    %1803 = vmatpush1.msra.mxu0 0.0
    %1804 = vmatprep.subr.mxu0 0.0
    %1805 = vmatpush1.msra.mxu0 %v1767
    %1806 = vmatprep.subr.mxu0 0.0
    %1807 = vmatpush2.msra.mxu0 0.0
    %1808 = vmatprep.subr.mxu0 0.0
    %1809 = vmatpush2.msra.mxu0 0.0
    %1810 = vmatprep.subr.mxu0 0.0
    %1811 = vmatpush2.msra.mxu0 0.0
    %1812 = vmatprep.subr.mxu0 0.0
    %1813 = vmatpush2.msra.mxu0 0.0
    %1814 = vmatprep.subr.mxu0 0.0
    %1815 = vmatpush2.msra.mxu0 0.0
    %1816 = vmatprep.subr.mxu0 0.0
    %1817 = vmatpush2.msra.mxu0 0.0
    %1818 = vmatprep.subr.mxu0 0.0
    %1819 = vmatpush2.msra.mxu0 0.0
    %1820 = vmatprep.subr.mxu0 0.0
    %1821 = vmatpush2.msra.mxu0 0.0
    %1822 = vmatprep.subr.mxu0 0.0
    %1823 = vmatpush2.msra.mxu0 0.0
    %1824 = vmatprep.subr.mxu0 0.0
    %1825 = vmatpush2.msra.mxu0 0.0
    %1826 = vmatprep.subr.mxu0 0.0
    %1827 = vmatpush2.msra.mxu0 0.0
    %1828 = vmatprep.subr.mxu0 0.0
    %1829 = vmatpush2.msra.mxu0 0.0
    %1830 = vmatprep.subr.mxu0 0.0
    %1831 = vmatpush2.msra.mxu0 0.0
    %1832 = vmatprep.subr.mxu0 0.0
    %1833 = vmatpush2.msra.mxu0 0.0
    %1834 = vmatprep.subr.mxu0 0.0
    %1835 = vmatpush2.msra.mxu0 0.0
    %1836 = vmatprep.subr.mxu0 0.0
    %1837 = vmatpush2.msra.mxu0 0.0
    %1838 = vmatprep.mubr.f32.mxu0 0.0
    %1839 = vmatmul.mubr.f32.gmra.mxu0 %v1769
    %v1840 = vpop.f32.mrf.mxu0
    %v1841 = vadd.f32 0.0, %v1840
    %v1842 = vpop.f32.mrf.mxu0
    %1843 = vmatprep.mubr.f32.mxu0 0.0
    %1844 = vmatmul.mubr.f32.gmra.mxu0 %v1772
    %v1845 = vpop.f32.mrf.mxu0
    %v1846 = vadd.f32 0.0, %v1845
    %v1847 = vpop.f32.mrf.mxu0
    %1848 = vdwg.mxu0
    %v1849 = vadd.f32 %v1435, %v1841
    %v1850 = vadd.f32 %v1436, %v1846
    %v1851 = vadd.f32 %v42, %v1849
    %v1852 = vadd.f32 %v43, %v1850
    %v1853 = vlaneseq
    %v1854 = vshrl.u32 %v1853, 7
    %v1855 = vsub.s32 0, %v1854
    %v1856 = vrot.slane %v64, %v1855
    %v1857 = vadd.f32 %v1851, %v1856
    %v1858 = vadd.f32 %v1852, %v1856
    %v1859 = vsel %vm68, %v1857, 0.0
    %1860 = vadd.xlane.f32.xlu0 %v1859
    %v1861 = vpop.xlane.xlu0 %1860
    %v1862 = vsel %vm68, %v1858, 0.0
    %1863 = vadd.xlane.f32.xlu0 %v1862
    %v1864 = vpop.xlane.xlu0 %1863
    %v1865 = vmul.f32 %v1861, %v75
    %v1866 = vmul.f32 %v1864, %v75
    %v1867 = vsub.f32 %v1857, %v1865
    %v1868 = vsub.f32 %v1858, %v1866
    %v1869 = vmul.f32 %v1867, %v1867
    %v1870 = vmul.f32 %v1868, %v1868
    %v1871 = vsel %vm68, %v1869, 0.0
    %1872 = vadd.xlane.f32.xlu0 %v1871
    %v1873 = vpop.xlane.xlu0 %1872
    %v1874 = vsel %vm68, %v1870, 0.0
    %1875 = vadd.xlane.f32.xlu0 %v1874
    %v1876 = vpop.xlane.xlu0 %1875
    %v1877 = vmul.f32 %v1873, %v75
    %v1878 = vmul.f32 %v1876, %v75
    %v1879 = vadd.f32 %v1877, 1e-05
    %v1880 = vadd.f32 %v1878, 1e-05
    %v1881 = vrsqrt.pop %v1879
    %v1882 = vrsqrt.pop %v1880
    %v1883 = vmul.f32 %v1867, %v1881
    %v1884 = vmul.f32 %v1868, %v1882
    %v1885 = vlaneseq
    %v1886 = vshrl.u32 %v1885, 7
    %v1887 = vsub.s32 0, %v1886
    %v1888 = vrot.slane %v65, %v1887
    %v1889 = vmul.f32 %v1883, %v1888
    %v1890 = vmul.f32 %v1884, %v1888
    %v1891 = vlaneseq
    %v1892 = vshrl.u32 %v1891, 7
    %v1893 = vsub.s32 0, %v1892
    %v1894 = vrot.slane %v66, %v1893
    %v1895 = vadd.f32 %v1889, %v1894
    %v1896 = vadd.f32 %v1890, %v1894
    %v1897 = vld [vmem:[%s6] sm:$0xff]
    %v1898 = vld [vmem:[%s6 + $0x8] sm:$0xff]
    %v1899 = vld [vmem:[%s6 + $0x10] sm:$0xff]
    %v1900 = vld [vmem:[%s6 + $0x18] sm:$0xff]
    %v1901 = vld [vmem:[%s9] sm:$0x1]
    %v1903 = vlaneseq
    %v1904 = vshrl.u32 %v1903, 7
    %v1905 = vsub.s32 0, %v1904
    %v1906 = vrot.slane %v1901, %v1905
    %v1909 = vsel %vm68, %v1895, 0
    %v1912 = vsel %vm68, %v1896, 0
    %1914 = vmatprep.subr.mxu0 0.0
    %1915 = vmatpush1.msra.mxu0 0.0
    %1916 = vmatprep.subr.mxu0 0.0
    %1917 = vmatpush1.msra.mxu0 0.0
    %1918 = vmatprep.subr.mxu0 0.0
    %1919 = vmatpush1.msra.mxu0 0.0
    %1920 = vmatprep.subr.mxu0 0.0
    %1921 = vmatpush1.msra.mxu0 0.0
    %1922 = vmatprep.subr.mxu0 0.0
    %1923 = vmatpush1.msra.mxu0 0.0
    %1924 = vmatprep.subr.mxu0 0.0
    %1925 = vmatpush1.msra.mxu0 0.0
    %1926 = vmatprep.subr.mxu0 0.0
    %1927 = vmatpush1.msra.mxu0 0.0
    %1928 = vmatprep.subr.mxu0 0.0
    %1929 = vmatpush1.msra.mxu0 0.0
    %1930 = vmatprep.subr.mxu0 0.0
    %1931 = vmatpush1.msra.mxu0 0.0
    %1932 = vmatprep.subr.mxu0 0.0
    %1933 = vmatpush1.msra.mxu0 0.0
    %1934 = vmatprep.subr.mxu0 0.0
    %1935 = vmatpush1.msra.mxu0 0.0
    %1936 = vmatprep.subr.mxu0 0.0
    %1937 = vmatpush1.msra.mxu0 0.0
    %1938 = vmatprep.subr.mxu0 0.0
    %1939 = vmatpush1.msra.mxu0 %v1900
    %1940 = vmatprep.subr.mxu0 0.0
    %1941 = vmatpush1.msra.mxu0 %v1899
    %1942 = vmatprep.subr.mxu0 0.0
    %1943 = vmatpush1.msra.mxu0 %v1898
    %1944 = vmatprep.subr.mxu0 0.0
    %1945 = vmatpush1.msra.mxu0 %v1897
    %1946 = vmatprep.subr.mxu0 0.0
    %1947 = vmatpush2.msra.mxu0 0.0
    %1948 = vmatprep.subr.mxu0 0.0
    %1949 = vmatpush2.msra.mxu0 0.0
    %1950 = vmatprep.subr.mxu0 0.0
    %1951 = vmatpush2.msra.mxu0 0.0
    %1952 = vmatprep.subr.mxu0 0.0
    %1953 = vmatpush2.msra.mxu0 0.0
    %1954 = vmatprep.subr.mxu0 0.0
    %1955 = vmatpush2.msra.mxu0 0.0
    %1956 = vmatprep.subr.mxu0 0.0
    %1957 = vmatpush2.msra.mxu0 0.0
    %1958 = vmatprep.subr.mxu0 0.0
    %1959 = vmatpush2.msra.mxu0 0.0
    %1960 = vmatprep.subr.mxu0 0.0
    %1961 = vmatpush2.msra.mxu0 0.0
    %1962 = vmatprep.subr.mxu0 0.0
    %1963 = vmatpush2.msra.mxu0 0.0
    %1964 = vmatprep.subr.mxu0 0.0
    %1965 = vmatpush2.msra.mxu0 0.0
    %1966 = vmatprep.subr.mxu0 0.0
    %1967 = vmatpush2.msra.mxu0 0.0
    %1968 = vmatprep.subr.mxu0 0.0
    %1969 = vmatpush2.msra.mxu0 0.0
    %1970 = vmatprep.subr.mxu0 0.0
    %1971 = vmatpush2.msra.mxu0 0.0
    %1972 = vmatprep.subr.mxu0 0.0
    %1973 = vmatpush2.msra.mxu0 0.0
    %1974 = vmatprep.subr.mxu0 0.0
    %1975 = vmatpush2.msra.mxu0 0.0
    %1976 = vmatprep.subr.mxu0 0.0
    %1977 = vmatpush2.msra.mxu0 0.0
    %1978 = vmatprep.mubr.f32.mxu0 0.0
    %1979 = vmatmul.mubr.f32.gmra.mxu0 %v1909
    %v1980 = vpop.f32.mrf.mxu0
    %v1981 = vadd.f32 %v1906, %v1980
    %v1982 = vpop.f32.mrf.mxu0
    %1983 = vmatprep.mubr.f32.mxu0 0.0
    %1984 = vmatmul.mubr.f32.gmra.mxu0 %v1912
    %v1985 = vpop.f32.mrf.mxu0
    %v1986 = vadd.f32 %v1906, %v1985
    %v1987 = vpop.f32.mrf.mxu0
    %1988 = vdwg.mxu0
    %v1989 = vmax.f32 %v1981, 0.0
    %v1990 = vmax.f32 %v1986, 0.0
    %v1991 = vld [vmem:[%s7] sm:$0xff]
    %v1992 = vld [vmem:[%s7 + $0x8] sm:$0xff]
    %v1993 = vld [vmem:[%s7 + $0x10] sm:$0xff]
    %v1994 = vld [vmem:[%s7 + $0x18] sm:$0xff]
    %v1995 = vld [vmem:[%s7 + $0x20] sm:$0xff]
    %v1996 = vld [vmem:[%s7 + $0x28] sm:$0xff]
    %v1997 = vld [vmem:[%s7 + $0x30] sm:$0xff]
    %v1998 = vld [vmem:[%s7 + $0x38] sm:$0xff]
    %vm1999 = vcmask 523264
    %v2001 = vsel %vm1999, %v1989, 0
    %v2004 = vsel %vm1999, %v1990, 0
    %2006 = vmatprep.subr.mxu0 0.0
    %2007 = vmatpush1.msra.mxu0 0.0
    %2008 = vmatprep.subr.mxu0 0.0
    %2009 = vmatpush1.msra.mxu0 0.0
    %2010 = vmatprep.subr.mxu0 0.0
    %2011 = vmatpush1.msra.mxu0 0.0
    %2012 = vmatprep.subr.mxu0 0.0
    %2013 = vmatpush1.msra.mxu0 0.0
    %2014 = vmatprep.subr.mxu0 0.0
    %2015 = vmatpush1.msra.mxu0 0.0
    %2016 = vmatprep.subr.mxu0 0.0
    %2017 = vmatpush1.msra.mxu0 0.0
    %2018 = vmatprep.subr.mxu0 0.0
    %2019 = vmatpush1.msra.mxu0 0.0
    %2020 = vmatprep.subr.mxu0 0.0
    %2021 = vmatpush1.msra.mxu0 0.0
    %2022 = vmatprep.subr.mxu0 0.0
    %2023 = vmatpush1.msra.mxu0 %v1998
    %2024 = vmatprep.subr.mxu0 0.0
    %2025 = vmatpush1.msra.mxu0 %v1997
    %2026 = vmatprep.subr.mxu0 0.0
    %2027 = vmatpush1.msra.mxu0 %v1996
    %2028 = vmatprep.subr.mxu0 0.0
    %2029 = vmatpush1.msra.mxu0 %v1995
    %2030 = vmatprep.subr.mxu0 0.0
    %2031 = vmatpush1.msra.mxu0 %v1994
    %2032 = vmatprep.subr.mxu0 0.0
    %2033 = vmatpush1.msra.mxu0 %v1993
    %2034 = vmatprep.subr.mxu0 0.0
    %2035 = vmatpush1.msra.mxu0 %v1992
    %2036 = vmatprep.subr.mxu0 0.0
    %2037 = vmatpush1.msra.mxu0 %v1991
    %2038 = vmatprep.subr.mxu0 0.0
    %2039 = vmatpush2.msra.mxu0 0.0
    %2040 = vmatprep.subr.mxu0 0.0
    %2041 = vmatpush2.msra.mxu0 0.0
    %2042 = vmatprep.subr.mxu0 0.0
    %2043 = vmatpush2.msra.mxu0 0.0
    %2044 = vmatprep.subr.mxu0 0.0
    %2045 = vmatpush2.msra.mxu0 0.0
    %2046 = vmatprep.subr.mxu0 0.0
    %2047 = vmatpush2.msra.mxu0 0.0
    %2048 = vmatprep.subr.mxu0 0.0
    %2049 = vmatpush2.msra.mxu0 0.0
    %2050 = vmatprep.subr.mxu0 0.0
    %2051 = vmatpush2.msra.mxu0 0.0
    %2052 = vmatprep.subr.mxu0 0.0
    %2053 = vmatpush2.msra.mxu0 0.0
    %2054 = vmatprep.subr.mxu0 0.0
    %2055 = vmatpush2.msra.mxu0 0.0
    %2056 = vmatprep.subr.mxu0 0.0
    %2057 = vmatpush2.msra.mxu0 0.0
    %2058 = vmatprep.subr.mxu0 0.0
    %2059 = vmatpush2.msra.mxu0 0.0
    %2060 = vmatprep.subr.mxu0 0.0
    %2061 = vmatpush2.msra.mxu0 0.0
    %2062 = vmatprep.subr.mxu0 0.0
    %2063 = vmatpush2.msra.mxu0 0.0
    %2064 = vmatprep.subr.mxu0 0.0
    %2065 = vmatpush2.msra.mxu0 0.0
    %2066 = vmatprep.subr.mxu0 0.0
    %2067 = vmatpush2.msra.mxu0 0.0
    %2068 = vmatprep.subr.mxu0 0.0
    %2069 = vmatpush2.msra.mxu0 0.0
    %2070 = vmatprep.mubr.f32.mxu0 0.0
    %2071 = vmatmul.mubr.f32.gmra.mxu0 %v2001
    %v2072 = vpop.f32.mrf.mxu0
    %v2073 = vadd.f32 0.0, %v2072
    %v2074 = vpop.f32.mrf.mxu0
    %2075 = vmatprep.mubr.f32.mxu0 0.0
    %2076 = vmatmul.mubr.f32.gmra.mxu0 %v2004
    %v2077 = vpop.f32.mrf.mxu0
    %v2078 = vadd.f32 0.0, %v2077
    %v2079 = vpop.f32.mrf.mxu0
    %2080 = vdwg.mxu0
    %v2081 = vadd.f32 %v1857, %v2073
    %v2082 = vadd.f32 %v1858, %v2078
    %v2083 = vlaneseq
    %v2084 = vshrl.u32 %v2083, 7
    %v2085 = vsub.s32 0, %v2084
    %v2086 = vrot.slane %v67, %v2085
    %v2087 = vadd.f32 %v2081, %v2086
    %v2088 = vadd.f32 %v2082, %v2086
    %s2089 = scalar_lea.vmem %s8, 8
    %v2090 = vld [vmem:[%s2089] sm:$0x1]
    %v2091 = vld [vmem:[%s2089 + $0x1] sm:$0x1]
    %v2092 = vld [vmem:[%s2089 + $0x2] sm:$0x1]
    %v2093 = vld [vmem:[%s2089 + $0x3] sm:$0x1]
    %v2094 = vld [vmem:[%s2089 + $0x4] sm:$0x1]
    %v2095 = vld [vmem:[%s2089 + $0x5] sm:$0x1]
    %v2096 = vsel %vm68, %v2087, 0.0
    %2097 = vadd.xlane.f32.xlu0 %v2096
    %v2098 = vpop.xlane.xlu0 %2097
    %v2099 = vsel %vm68, %v2088, 0.0
    %2100 = vadd.xlane.f32.xlu0 %v2099
    %v2101 = vpop.xlane.xlu0 %2100
    %v2102 = vmul.f32 %v2098, %v75
    %v2103 = vmul.f32 %v2101, %v75
    %v2104 = vsub.f32 %v2087, %v2102
    %v2105 = vsub.f32 %v2088, %v2103
    %v2106 = vmul.f32 %v2104, %v2104
    %v2107 = vmul.f32 %v2105, %v2105
    %v2108 = vsel %vm68, %v2106, 0.0
    %2109 = vadd.xlane.f32.xlu0 %v2108
    %v2110 = vpop.xlane.xlu0 %2109
    %v2111 = vsel %vm68, %v2107, 0.0
    %2112 = vadd.xlane.f32.xlu0 %v2111
    %v2113 = vpop.xlane.xlu0 %2112
    %v2114 = vmul.f32 %v2110, %v75
    %v2115 = vmul.f32 %v2113, %v75
    %v2116 = vadd.f32 %v2114, 1e-05
    %v2117 = vadd.f32 %v2115, 1e-05
    %v2118 = vrsqrt.pop %v2116
    %v2119 = vrsqrt.pop %v2117
    %v2120 = vmul.f32 %v2104, %v2118
    %v2121 = vmul.f32 %v2105, %v2119
    %v2122 = vlaneseq
    %v2123 = vshrl.u32 %v2122, 7
    %v2124 = vsub.s32 0, %v2123
    %v2125 = vrot.slane %v2090, %v2124
    %v2126 = vmul.f32 %v2120, %v2125
    %v2127 = vmul.f32 %v2121, %v2125
    %v2128 = vlaneseq
    %v2129 = vshrl.u32 %v2128, 7
    %v2130 = vsub.s32 0, %v2129
    %v2131 = vrot.slane %v2091, %v2130
    %v2132 = vadd.f32 %v2126, %v2131
    %v2133 = vadd.f32 %v2127, %v2131
    %s2134 = scalar_lea.vmem %s3, 32
    %v2135 = vld [vmem:[%s2134] sm:$0xff]
    %v2136 = vld [vmem:[%s2134 + $0x8] sm:$0xff]
    %v2137 = vld [vmem:[%s2134 + $0x10] sm:$0xff]
    %v2138 = vld [vmem:[%s2134 + $0x18] sm:$0xff]
    %s2139 = scalar_lea.vmem %s4, 1
    %v2140 = vld [vmem:[%s2139] sm:$0x1]
    %v2142 = vlaneseq
    %v2143 = vshrl.u32 %v2142, 7
    %v2144 = vsub.s32 0, %v2143
    %v2145 = vrot.slane %v2140, %v2144
    %v2148 = vsel %vm68, %v2132, 0
    %v2151 = vsel %vm68, %v2133, 0
    %2153 = vmatprep.subr.mxu0 0.0
    %2154 = vmatpush1.msra.mxu0 0.0
    %2155 = vmatprep.subr.mxu0 0.0
    %2156 = vmatpush1.msra.mxu0 0.0
    %2157 = vmatprep.subr.mxu0 0.0
    %2158 = vmatpush1.msra.mxu0 0.0
    %2159 = vmatprep.subr.mxu0 0.0
    %2160 = vmatpush1.msra.mxu0 0.0
    %2161 = vmatprep.subr.mxu0 0.0
    %2162 = vmatpush1.msra.mxu0 0.0
    %2163 = vmatprep.subr.mxu0 0.0
    %2164 = vmatpush1.msra.mxu0 0.0
    %2165 = vmatprep.subr.mxu0 0.0
    %2166 = vmatpush1.msra.mxu0 0.0
    %2167 = vmatprep.subr.mxu0 0.0
    %2168 = vmatpush1.msra.mxu0 0.0
    %2169 = vmatprep.subr.mxu0 0.0
    %2170 = vmatpush1.msra.mxu0 0.0
    %2171 = vmatprep.subr.mxu0 0.0
    %2172 = vmatpush1.msra.mxu0 0.0
    %2173 = vmatprep.subr.mxu0 0.0
    %2174 = vmatpush1.msra.mxu0 0.0
    %2175 = vmatprep.subr.mxu0 0.0
    %2176 = vmatpush1.msra.mxu0 0.0
    %2177 = vmatprep.subr.mxu0 0.0
    %2178 = vmatpush1.msra.mxu0 %v2138
    %2179 = vmatprep.subr.mxu0 0.0
    %2180 = vmatpush1.msra.mxu0 %v2137
    %2181 = vmatprep.subr.mxu0 0.0
    %2182 = vmatpush1.msra.mxu0 %v2136
    %2183 = vmatprep.subr.mxu0 0.0
    %2184 = vmatpush1.msra.mxu0 %v2135
    %2185 = vmatprep.subr.mxu0 0.0
    %2186 = vmatpush2.msra.mxu0 0.0
    %2187 = vmatprep.subr.mxu0 0.0
    %2188 = vmatpush2.msra.mxu0 0.0
    %2189 = vmatprep.subr.mxu0 0.0
    %2190 = vmatpush2.msra.mxu0 0.0
    %2191 = vmatprep.subr.mxu0 0.0
    %2192 = vmatpush2.msra.mxu0 0.0
    %2193 = vmatprep.subr.mxu0 0.0
    %2194 = vmatpush2.msra.mxu0 0.0
    %2195 = vmatprep.subr.mxu0 0.0
    %2196 = vmatpush2.msra.mxu0 0.0
    %2197 = vmatprep.subr.mxu0 0.0
    %2198 = vmatpush2.msra.mxu0 0.0
    %2199 = vmatprep.subr.mxu0 0.0
    %2200 = vmatpush2.msra.mxu0 0.0
    %2201 = vmatprep.subr.mxu0 0.0
    %2202 = vmatpush2.msra.mxu0 0.0
    %2203 = vmatprep.subr.mxu0 0.0
    %2204 = vmatpush2.msra.mxu0 0.0
    %2205 = vmatprep.subr.mxu0 0.0
    %2206 = vmatpush2.msra.mxu0 0.0
    %2207 = vmatprep.subr.mxu0 0.0
    %2208 = vmatpush2.msra.mxu0 0.0
    %2209 = vmatprep.subr.mxu0 0.0
    %2210 = vmatpush2.msra.mxu0 0.0
    %2211 = vmatprep.subr.mxu0 0.0
    %2212 = vmatpush2.msra.mxu0 0.0
    %2213 = vmatprep.subr.mxu0 0.0
    %2214 = vmatpush2.msra.mxu0 0.0
    %2215 = vmatprep.subr.mxu0 0.0
    %2216 = vmatpush2.msra.mxu0 0.0
    %2217 = vmatprep.mubr.f32.mxu0 0.0
    %2218 = vmatmul.mubr.f32.gmra.mxu0 %v2148
    %v2219 = vpop.f32.mrf.mxu0
    %v2220 = vadd.f32 %v2145, %v2219
    %v2221 = vpop.f32.mrf.mxu0
    %2222 = vmatprep.mubr.f32.mxu0 0.0
    %2223 = vmatmul.mubr.f32.gmra.mxu0 %v2151
    %v2224 = vpop.f32.mrf.mxu0
    %v2225 = vadd.f32 %v2145, %v2224
    %v2226 = vpop.f32.mrf.mxu0
    %2227 = vdwg.mxu0
    %2229 = vrot.lane.b32.xlu0 %v2220, 96
    %v2230 = vpop.permute.xlu0 %2229
    %v2231 = vsel %vm203, %v2220, 0
    %v2233 = vsel %vm203, %v2230, 0
    %2235 = vmatprep.subr.mxu0 0.0
    %2236 = vmatpush1.xpose.msra.mxu0 0.0
    %2237 = vmatprep.subr.mxu0 0.0
    %2238 = vmatpush1.xpose.msra.mxu0 0.0
    %2239 = vmatprep.subr.mxu0 0.0
    %2240 = vmatpush1.xpose.msra.mxu0 0.0
    %2241 = vmatprep.subr.mxu0 0.0
    %2242 = vmatpush1.xpose.msra.mxu0 0.0
    %2243 = vmatprep.subr.mxu0 0.0
    %2244 = vmatpush1.xpose.msra.mxu0 0.0
    %2245 = vmatprep.subr.mxu0 0.0
    %2246 = vmatpush1.xpose.msra.mxu0 0.0
    %2247 = vmatprep.subr.mxu0 0.0
    %2248 = vmatpush1.xpose.msra.mxu0 0.0
    %2249 = vmatprep.subr.mxu0 0.0
    %2250 = vmatpush1.xpose.msra.mxu0 0.0
    %2251 = vmatprep.subr.mxu0 0.0
    %2252 = vmatpush1.xpose.msra.mxu0 0.0
    %2253 = vmatprep.subr.mxu0 0.0
    %2254 = vmatpush1.xpose.msra.mxu0 0.0
    %2255 = vmatprep.subr.mxu0 0.0
    %2256 = vmatpush1.xpose.msra.mxu0 0.0
    %2257 = vmatprep.subr.mxu0 0.0
    %2258 = vmatpush1.xpose.msra.mxu0 0.0
    %2259 = vmatprep.subr.mxu0 0.0
    %2260 = vmatpush1.xpose.msra.mxu0 0.0
    %2261 = vmatprep.subr.mxu0 0.0
    %2262 = vmatpush1.xpose.msra.mxu0 0.0
    %2263 = vmatprep.subr.mxu0 0.0
    %2264 = vmatpush1.xpose.msra.mxu0 0.0
    %2265 = vmatprep.subr.mxu0 0.0
    %2266 = vmatpush1.xpose.msra.mxu0 %v2233
    %2267 = vmatprep.subr.mxu0 0.0
    %2268 = vmatpush2.xpose.msra.mxu0 0.0
    %2269 = vmatprep.subr.mxu0 0.0
    %2270 = vmatpush2.xpose.msra.mxu0 0.0
    %2271 = vmatprep.subr.mxu0 0.0
    %2272 = vmatpush2.xpose.msra.mxu0 0.0
    %2273 = vmatprep.subr.mxu0 0.0
    %2274 = vmatpush2.xpose.msra.mxu0 0.0
    %2275 = vmatprep.subr.mxu0 0.0
    %2276 = vmatpush2.xpose.msra.mxu0 0.0
    %2277 = vmatprep.subr.mxu0 0.0
    %2278 = vmatpush2.xpose.msra.mxu0 0.0
    %2279 = vmatprep.subr.mxu0 0.0
    %2280 = vmatpush2.xpose.msra.mxu0 0.0
    %2281 = vmatprep.subr.mxu0 0.0
    %2282 = vmatpush2.xpose.msra.mxu0 0.0
    %2283 = vmatprep.subr.mxu0 0.0
    %2284 = vmatpush2.xpose.msra.mxu0 0.0
    %2285 = vmatprep.subr.mxu0 0.0
    %2286 = vmatpush2.xpose.msra.mxu0 0.0
    %2287 = vmatprep.subr.mxu0 0.0
    %2288 = vmatpush2.xpose.msra.mxu0 0.0
    %2289 = vmatprep.subr.mxu0 0.0
    %2290 = vmatpush2.xpose.msra.mxu0 0.0
    %2291 = vmatprep.subr.mxu0 0.0
    %2292 = vmatpush2.xpose.msra.mxu0 0.0
    %2293 = vmatprep.subr.mxu0 0.0
    %2294 = vmatpush2.xpose.msra.mxu0 0.0
    %2295 = vmatprep.subr.mxu0 0.0
    %2296 = vmatpush2.xpose.msra.mxu0 0.0
    %2297 = vmatprep.subr.mxu0 0.0
    %2298 = vmatpush2.xpose.msra.mxu0 0.0
    %2299 = vmatprep.mubr.f32.mxu0 0.0
    %2300 = vmatmul.mubr.f32.gmra.mxu0 %v2231
    %v2301 = vpop.f32.mrf.mxu0
    %v2302 = vadd.f32 %v55, %v2301
    %v2303 = vpop.f32.mrf.mxu0
    %2304 = vdwg.mxu0
    %2306 = vrot.lane.b32.xlu0 %v2225, 96
    %v2307 = vpop.permute.xlu0 %2306
    %v2308 = vsel %vm203, %v2225, 0
    %v2310 = vsel %vm203, %v2307, 0
    %2312 = vmatprep.subr.mxu0 0.0
    %2313 = vmatpush1.xpose.msra.mxu0 0.0
    %2314 = vmatprep.subr.mxu0 0.0
    %2315 = vmatpush1.xpose.msra.mxu0 0.0
    %2316 = vmatprep.subr.mxu0 0.0
    %2317 = vmatpush1.xpose.msra.mxu0 0.0
    %2318 = vmatprep.subr.mxu0 0.0
    %2319 = vmatpush1.xpose.msra.mxu0 0.0
    %2320 = vmatprep.subr.mxu0 0.0
    %2321 = vmatpush1.xpose.msra.mxu0 0.0
    %2322 = vmatprep.subr.mxu0 0.0
    %2323 = vmatpush1.xpose.msra.mxu0 0.0
    %2324 = vmatprep.subr.mxu0 0.0
    %2325 = vmatpush1.xpose.msra.mxu0 0.0
    %2326 = vmatprep.subr.mxu0 0.0
    %2327 = vmatpush1.xpose.msra.mxu0 0.0
    %2328 = vmatprep.subr.mxu0 0.0
    %2329 = vmatpush1.xpose.msra.mxu0 0.0
    %2330 = vmatprep.subr.mxu0 0.0
    %2331 = vmatpush1.xpose.msra.mxu0 0.0
    %2332 = vmatprep.subr.mxu0 0.0
    %2333 = vmatpush1.xpose.msra.mxu0 0.0
    %2334 = vmatprep.subr.mxu0 0.0
    %2335 = vmatpush1.xpose.msra.mxu0 0.0
    %2336 = vmatprep.subr.mxu0 0.0
    %2337 = vmatpush1.xpose.msra.mxu0 0.0
    %2338 = vmatprep.subr.mxu0 0.0
    %2339 = vmatpush1.xpose.msra.mxu0 0.0
    %2340 = vmatprep.subr.mxu0 0.0
    %2341 = vmatpush1.xpose.msra.mxu0 0.0
    %2342 = vmatprep.subr.mxu0 0.0
    %2343 = vmatpush1.xpose.msra.mxu0 %v2310
    %2344 = vmatprep.subr.mxu0 0.0
    %2345 = vmatpush2.xpose.msra.mxu0 0.0
    %2346 = vmatprep.subr.mxu0 0.0
    %2347 = vmatpush2.xpose.msra.mxu0 0.0
    %2348 = vmatprep.subr.mxu0 0.0
    %2349 = vmatpush2.xpose.msra.mxu0 0.0
    %2350 = vmatprep.subr.mxu0 0.0
    %2351 = vmatpush2.xpose.msra.mxu0 0.0
    %2352 = vmatprep.subr.mxu0 0.0
    %2353 = vmatpush2.xpose.msra.mxu0 0.0
    %2354 = vmatprep.subr.mxu0 0.0
    %2355 = vmatpush2.xpose.msra.mxu0 0.0
    %2356 = vmatprep.subr.mxu0 0.0
    %2357 = vmatpush2.xpose.msra.mxu0 0.0
    %2358 = vmatprep.subr.mxu0 0.0
    %2359 = vmatpush2.xpose.msra.mxu0 0.0
    %2360 = vmatprep.subr.mxu0 0.0
    %2361 = vmatpush2.xpose.msra.mxu0 0.0
    %2362 = vmatprep.subr.mxu0 0.0
    %2363 = vmatpush2.xpose.msra.mxu0 0.0
    %2364 = vmatprep.subr.mxu0 0.0
    %2365 = vmatpush2.xpose.msra.mxu0 0.0
    %2366 = vmatprep.subr.mxu0 0.0
    %2367 = vmatpush2.xpose.msra.mxu0 0.0
    %2368 = vmatprep.subr.mxu0 0.0
    %2369 = vmatpush2.xpose.msra.mxu0 0.0
    %2370 = vmatprep.subr.mxu0 0.0
    %2371 = vmatpush2.xpose.msra.mxu0 0.0
    %2372 = vmatprep.subr.mxu0 0.0
    %2373 = vmatpush2.xpose.msra.mxu0 0.0
    %2374 = vmatprep.subr.mxu0 0.0
    %2375 = vmatpush2.xpose.msra.mxu0 0.0
    %2376 = vmatprep.mubr.f32.mxu0 0.0
    %2377 = vmatmul.mubr.f32.gmra.mxu0 %v2308
    %v2378 = vpop.f32.mrf.mxu0
    %v2379 = vadd.f32 %v59, %v2378
    %v2380 = vpop.f32.mrf.mxu0
    %2381 = vdwg.mxu0
    %v2382 = vsel %vm203, %v2302, -inf
    %2383 = vmax.xlane.f32.xlu0 %v2382
    %v2384 = vpop.xlane.xlu0 %2383
    %v2385 = vsel %vm203, %v2379, -inf
    %2386 = vmax.xlane.f32.xlu0 %v2385
    %v2387 = vpop.xlane.xlu0 %2386
    %v2388 = vsub.f32 %v2302, %v2384
    %v2389 = vsub.f32 %v2379, %v2387
    %v2390 = vmul.f32 %v2388, 1.442695
    %v2391 = vpow.pop %v2390
    %v2392 = vmul.f32 %v2389, 1.442695
    %v2393 = vpow.pop %v2392
    %v2394 = vsel %vm203, %v2391, 0.0
    %2395 = vadd.xlane.f32.xlu0 %v2394
    %v2396 = vpop.xlane.xlu0 %2395
    %v2397 = vsel %vm203, %v2393, 0.0
    %2398 = vadd.xlane.f32.xlu0 %v2397
    %v2399 = vpop.xlane.xlu0 %2398
    %v2400 = vrcp.pop %v2396
    %v2401 = vmul.f32 %v2391, %v2400
    %v2402 = vrcp.pop %v2399
    %v2403 = vmul.f32 %v2393, %v2402
    %2404 = vrot.lane.b32.xlu0 %v2220, 64
    %v2405 = vpop.permute.xlu0 %2404
    %v2408 = vsel %vm203, %v2401, 0
    %2410 = vmatprep.subr.mxu0 0.0
    %2411 = vmatpush1.msra.mxu0 0.0
    %2412 = vmatprep.subr.mxu0 0.0
    %2413 = vmatpush1.msra.mxu0 0.0
    %2414 = vmatprep.subr.mxu0 0.0
    %2415 = vmatpush1.msra.mxu0 0.0
    %2416 = vmatprep.subr.mxu0 0.0
    %2417 = vmatpush1.msra.mxu0 0.0
    %2418 = vmatprep.subr.mxu0 0.0
    %2419 = vmatpush1.msra.mxu0 0.0
    %2420 = vmatprep.subr.mxu0 0.0
    %2421 = vmatpush1.msra.mxu0 0.0
    %2422 = vmatprep.subr.mxu0 0.0
    %2423 = vmatpush1.msra.mxu0 0.0
    %2424 = vmatprep.subr.mxu0 0.0
    %2425 = vmatpush1.msra.mxu0 0.0
    %2426 = vmatprep.subr.mxu0 0.0
    %2427 = vmatpush1.msra.mxu0 0.0
    %2428 = vmatprep.subr.mxu0 0.0
    %2429 = vmatpush1.msra.mxu0 0.0
    %2430 = vmatprep.subr.mxu0 0.0
    %2431 = vmatpush1.msra.mxu0 0.0
    %2432 = vmatprep.subr.mxu0 0.0
    %2433 = vmatpush1.msra.mxu0 0.0
    %2434 = vmatprep.subr.mxu0 0.0
    %2435 = vmatpush1.msra.mxu0 0.0
    %2436 = vmatprep.subr.mxu0 0.0
    %2437 = vmatpush1.msra.mxu0 0.0
    %2438 = vmatprep.subr.mxu0 0.0
    %2439 = vmatpush1.msra.mxu0 0.0
    %2440 = vmatprep.subr.mxu0 0.0
    %2441 = vmatpush1.msra.mxu0 %v2405
    %2442 = vmatprep.subr.mxu0 0.0
    %2443 = vmatpush2.msra.mxu0 0.0
    %2444 = vmatprep.subr.mxu0 0.0
    %2445 = vmatpush2.msra.mxu0 0.0
    %2446 = vmatprep.subr.mxu0 0.0
    %2447 = vmatpush2.msra.mxu0 0.0
    %2448 = vmatprep.subr.mxu0 0.0
    %2449 = vmatpush2.msra.mxu0 0.0
    %2450 = vmatprep.subr.mxu0 0.0
    %2451 = vmatpush2.msra.mxu0 0.0
    %2452 = vmatprep.subr.mxu0 0.0
    %2453 = vmatpush2.msra.mxu0 0.0
    %2454 = vmatprep.subr.mxu0 0.0
    %2455 = vmatpush2.msra.mxu0 0.0
    %2456 = vmatprep.subr.mxu0 0.0
    %2457 = vmatpush2.msra.mxu0 0.0
    %2458 = vmatprep.subr.mxu0 0.0
    %2459 = vmatpush2.msra.mxu0 0.0
    %2460 = vmatprep.subr.mxu0 0.0
    %2461 = vmatpush2.msra.mxu0 0.0
    %2462 = vmatprep.subr.mxu0 0.0
    %2463 = vmatpush2.msra.mxu0 0.0
    %2464 = vmatprep.subr.mxu0 0.0
    %2465 = vmatpush2.msra.mxu0 0.0
    %2466 = vmatprep.subr.mxu0 0.0
    %2467 = vmatpush2.msra.mxu0 0.0
    %2468 = vmatprep.subr.mxu0 0.0
    %2469 = vmatpush2.msra.mxu0 0.0
    %2470 = vmatprep.subr.mxu0 0.0
    %2471 = vmatpush2.msra.mxu0 0.0
    %2472 = vmatprep.subr.mxu0 0.0
    %2473 = vmatpush2.msra.mxu0 0.0
    %2474 = vmatprep.mubr.f32.mxu0 0.0
    %2475 = vmatmul.mubr.f32.gmra.mxu0 %v2408
    %v2476 = vpop.f32.mrf.mxu0
    %v2477 = vadd.f32 0.0, %v2476
    %v2478 = vpop.f32.mrf.mxu0
    %2479 = vdwg.mxu0
    %2480 = vrot.lane.b32.xlu0 %v2225, 64
    %v2481 = vpop.permute.xlu0 %2480
    %v2484 = vsel %vm203, %v2403, 0
    %2486 = vmatprep.subr.mxu0 0.0
    %2487 = vmatpush1.msra.mxu0 0.0
    %2488 = vmatprep.subr.mxu0 0.0
    %2489 = vmatpush1.msra.mxu0 0.0
    %2490 = vmatprep.subr.mxu0 0.0
    %2491 = vmatpush1.msra.mxu0 0.0
    %2492 = vmatprep.subr.mxu0 0.0
    %2493 = vmatpush1.msra.mxu0 0.0
    %2494 = vmatprep.subr.mxu0 0.0
    %2495 = vmatpush1.msra.mxu0 0.0
    %2496 = vmatprep.subr.mxu0 0.0
    %2497 = vmatpush1.msra.mxu0 0.0
    %2498 = vmatprep.subr.mxu0 0.0
    %2499 = vmatpush1.msra.mxu0 0.0
    %2500 = vmatprep.subr.mxu0 0.0
    %2501 = vmatpush1.msra.mxu0 0.0
    %2502 = vmatprep.subr.mxu0 0.0
    %2503 = vmatpush1.msra.mxu0 0.0
    %2504 = vmatprep.subr.mxu0 0.0
    %2505 = vmatpush1.msra.mxu0 0.0
    %2506 = vmatprep.subr.mxu0 0.0
    %2507 = vmatpush1.msra.mxu0 0.0
    %2508 = vmatprep.subr.mxu0 0.0
    %2509 = vmatpush1.msra.mxu0 0.0
    %2510 = vmatprep.subr.mxu0 0.0
    %2511 = vmatpush1.msra.mxu0 0.0
    %2512 = vmatprep.subr.mxu0 0.0
    %2513 = vmatpush1.msra.mxu0 0.0
    %2514 = vmatprep.subr.mxu0 0.0
    %2515 = vmatpush1.msra.mxu0 0.0
    %2516 = vmatprep.subr.mxu0 0.0
    %2517 = vmatpush1.msra.mxu0 %v2481
    %2518 = vmatprep.subr.mxu0 0.0
    %2519 = vmatpush2.msra.mxu0 0.0
    %2520 = vmatprep.subr.mxu0 0.0
    %2521 = vmatpush2.msra.mxu0 0.0
    %2522 = vmatprep.subr.mxu0 0.0
    %2523 = vmatpush2.msra.mxu0 0.0
    %2524 = vmatprep.subr.mxu0 0.0
    %2525 = vmatpush2.msra.mxu0 0.0
    %2526 = vmatprep.subr.mxu0 0.0
    %2527 = vmatpush2.msra.mxu0 0.0
    %2528 = vmatprep.subr.mxu0 0.0
    %2529 = vmatpush2.msra.mxu0 0.0
    %2530 = vmatprep.subr.mxu0 0.0
    %2531 = vmatpush2.msra.mxu0 0.0
    %2532 = vmatprep.subr.mxu0 0.0
    %2533 = vmatpush2.msra.mxu0 0.0
    %2534 = vmatprep.subr.mxu0 0.0
    %2535 = vmatpush2.msra.mxu0 0.0
    %2536 = vmatprep.subr.mxu0 0.0
    %2537 = vmatpush2.msra.mxu0 0.0
    %2538 = vmatprep.subr.mxu0 0.0
    %2539 = vmatpush2.msra.mxu0 0.0
    %2540 = vmatprep.subr.mxu0 0.0
    %2541 = vmatpush2.msra.mxu0 0.0
    %2542 = vmatprep.subr.mxu0 0.0
    %2543 = vmatpush2.msra.mxu0 0.0
    %2544 = vmatprep.subr.mxu0 0.0
    %2545 = vmatpush2.msra.mxu0 0.0
    %2546 = vmatprep.subr.mxu0 0.0
    %2547 = vmatpush2.msra.mxu0 0.0
    %2548 = vmatprep.subr.mxu0 0.0
    %2549 = vmatpush2.msra.mxu0 0.0
    %2550 = vmatprep.mubr.f32.mxu0 0.0
    %2551 = vmatmul.mubr.f32.gmra.mxu0 %v2484
    %v2552 = vpop.f32.mrf.mxu0
    %v2553 = vadd.f32 0.0, %v2552
    %v2554 = vpop.f32.mrf.mxu0
    %2555 = vdwg.mxu0
    %s2556 = scalar_lea.vmem %s5, 32
    %v2557 = vld [vmem:[%s2556] sm:$0xff]
    %2558 = vrot.lane.b32.xlu0 %v2220, 120
    %v2559 = vpop.permute.xlu0 %2558
    %2560 = vrot.lane.b32.xlu0 %v2220, 88
    %v2561 = vpop.permute.xlu0 %2560
    %v2562 = vsel %vm203, %v2559, 0
    %v2564 = vsel %vm203, %v2561, 0
    %2566 = vmatprep.subr.mxu0 0.0
    %2567 = vmatpush1.xpose.msra.mxu0 0.0
    %2568 = vmatprep.subr.mxu0 0.0
    %2569 = vmatpush1.xpose.msra.mxu0 0.0
    %2570 = vmatprep.subr.mxu0 0.0
    %2571 = vmatpush1.xpose.msra.mxu0 0.0
    %2572 = vmatprep.subr.mxu0 0.0
    %2573 = vmatpush1.xpose.msra.mxu0 0.0
    %2574 = vmatprep.subr.mxu0 0.0
    %2575 = vmatpush1.xpose.msra.mxu0 0.0
    %2576 = vmatprep.subr.mxu0 0.0
    %2577 = vmatpush1.xpose.msra.mxu0 0.0
    %2578 = vmatprep.subr.mxu0 0.0
    %2579 = vmatpush1.xpose.msra.mxu0 0.0
    %2580 = vmatprep.subr.mxu0 0.0
    %2581 = vmatpush1.xpose.msra.mxu0 0.0
    %2582 = vmatprep.subr.mxu0 0.0
    %2583 = vmatpush1.xpose.msra.mxu0 0.0
    %2584 = vmatprep.subr.mxu0 0.0
    %2585 = vmatpush1.xpose.msra.mxu0 0.0
    %2586 = vmatprep.subr.mxu0 0.0
    %2587 = vmatpush1.xpose.msra.mxu0 0.0
    %2588 = vmatprep.subr.mxu0 0.0
    %2589 = vmatpush1.xpose.msra.mxu0 0.0
    %2590 = vmatprep.subr.mxu0 0.0
    %2591 = vmatpush1.xpose.msra.mxu0 0.0
    %2592 = vmatprep.subr.mxu0 0.0
    %2593 = vmatpush1.xpose.msra.mxu0 0.0
    %2594 = vmatprep.subr.mxu0 0.0
    %2595 = vmatpush1.xpose.msra.mxu0 0.0
    %2596 = vmatprep.subr.mxu0 0.0
    %2597 = vmatpush1.xpose.msra.mxu0 %v2564
    %2598 = vmatprep.subr.mxu0 0.0
    %2599 = vmatpush2.xpose.msra.mxu0 0.0
    %2600 = vmatprep.subr.mxu0 0.0
    %2601 = vmatpush2.xpose.msra.mxu0 0.0
    %2602 = vmatprep.subr.mxu0 0.0
    %2603 = vmatpush2.xpose.msra.mxu0 0.0
    %2604 = vmatprep.subr.mxu0 0.0
    %2605 = vmatpush2.xpose.msra.mxu0 0.0
    %2606 = vmatprep.subr.mxu0 0.0
    %2607 = vmatpush2.xpose.msra.mxu0 0.0
    %2608 = vmatprep.subr.mxu0 0.0
    %2609 = vmatpush2.xpose.msra.mxu0 0.0
    %2610 = vmatprep.subr.mxu0 0.0
    %2611 = vmatpush2.xpose.msra.mxu0 0.0
    %2612 = vmatprep.subr.mxu0 0.0
    %2613 = vmatpush2.xpose.msra.mxu0 0.0
    %2614 = vmatprep.subr.mxu0 0.0
    %2615 = vmatpush2.xpose.msra.mxu0 0.0
    %2616 = vmatprep.subr.mxu0 0.0
    %2617 = vmatpush2.xpose.msra.mxu0 0.0
    %2618 = vmatprep.subr.mxu0 0.0
    %2619 = vmatpush2.xpose.msra.mxu0 0.0
    %2620 = vmatprep.subr.mxu0 0.0
    %2621 = vmatpush2.xpose.msra.mxu0 0.0
    %2622 = vmatprep.subr.mxu0 0.0
    %2623 = vmatpush2.xpose.msra.mxu0 0.0
    %2624 = vmatprep.subr.mxu0 0.0
    %2625 = vmatpush2.xpose.msra.mxu0 0.0
    %2626 = vmatprep.subr.mxu0 0.0
    %2627 = vmatpush2.xpose.msra.mxu0 0.0
    %2628 = vmatprep.subr.mxu0 0.0
    %2629 = vmatpush2.xpose.msra.mxu0 0.0
    %2630 = vmatprep.mubr.f32.mxu0 0.0
    %2631 = vmatmul.mubr.f32.gmra.mxu0 %v2562
    %v2632 = vpop.f32.mrf.mxu0
    %v2633 = vadd.f32 %v55, %v2632
    %v2634 = vpop.f32.mrf.mxu0
    %2635 = vdwg.mxu0
    %2636 = vrot.lane.b32.xlu0 %v2225, 120
    %v2637 = vpop.permute.xlu0 %2636
    %2638 = vrot.lane.b32.xlu0 %v2225, 88
    %v2639 = vpop.permute.xlu0 %2638
    %v2640 = vsel %vm203, %v2637, 0
    %v2642 = vsel %vm203, %v2639, 0
    %2644 = vmatprep.subr.mxu0 0.0
    %2645 = vmatpush1.xpose.msra.mxu0 0.0
    %2646 = vmatprep.subr.mxu0 0.0
    %2647 = vmatpush1.xpose.msra.mxu0 0.0
    %2648 = vmatprep.subr.mxu0 0.0
    %2649 = vmatpush1.xpose.msra.mxu0 0.0
    %2650 = vmatprep.subr.mxu0 0.0
    %2651 = vmatpush1.xpose.msra.mxu0 0.0
    %2652 = vmatprep.subr.mxu0 0.0
    %2653 = vmatpush1.xpose.msra.mxu0 0.0
    %2654 = vmatprep.subr.mxu0 0.0
    %2655 = vmatpush1.xpose.msra.mxu0 0.0
    %2656 = vmatprep.subr.mxu0 0.0
    %2657 = vmatpush1.xpose.msra.mxu0 0.0
    %2658 = vmatprep.subr.mxu0 0.0
    %2659 = vmatpush1.xpose.msra.mxu0 0.0
    %2660 = vmatprep.subr.mxu0 0.0
    %2661 = vmatpush1.xpose.msra.mxu0 0.0
    %2662 = vmatprep.subr.mxu0 0.0
    %2663 = vmatpush1.xpose.msra.mxu0 0.0
    %2664 = vmatprep.subr.mxu0 0.0
    %2665 = vmatpush1.xpose.msra.mxu0 0.0
    %2666 = vmatprep.subr.mxu0 0.0
    %2667 = vmatpush1.xpose.msra.mxu0 0.0
    %2668 = vmatprep.subr.mxu0 0.0
    %2669 = vmatpush1.xpose.msra.mxu0 0.0
    %2670 = vmatprep.subr.mxu0 0.0
    %2671 = vmatpush1.xpose.msra.mxu0 0.0
    %2672 = vmatprep.subr.mxu0 0.0
    %2673 = vmatpush1.xpose.msra.mxu0 0.0
    %2674 = vmatprep.subr.mxu0 0.0
    %2675 = vmatpush1.xpose.msra.mxu0 %v2642
    %2676 = vmatprep.subr.mxu0 0.0
    %2677 = vmatpush2.xpose.msra.mxu0 0.0
    %2678 = vmatprep.subr.mxu0 0.0
    %2679 = vmatpush2.xpose.msra.mxu0 0.0
    %2680 = vmatprep.subr.mxu0 0.0
    %2681 = vmatpush2.xpose.msra.mxu0 0.0
    %2682 = vmatprep.subr.mxu0 0.0
    %2683 = vmatpush2.xpose.msra.mxu0 0.0
    %2684 = vmatprep.subr.mxu0 0.0
    %2685 = vmatpush2.xpose.msra.mxu0 0.0
    %2686 = vmatprep.subr.mxu0 0.0
    %2687 = vmatpush2.xpose.msra.mxu0 0.0
    %2688 = vmatprep.subr.mxu0 0.0
    %2689 = vmatpush2.xpose.msra.mxu0 0.0
    %2690 = vmatprep.subr.mxu0 0.0
    %2691 = vmatpush2.xpose.msra.mxu0 0.0
    %2692 = vmatprep.subr.mxu0 0.0
    %2693 = vmatpush2.xpose.msra.mxu0 0.0
    %2694 = vmatprep.subr.mxu0 0.0
    %2695 = vmatpush2.xpose.msra.mxu0 0.0
    %2696 = vmatprep.subr.mxu0 0.0
    %2697 = vmatpush2.xpose.msra.mxu0 0.0
    %2698 = vmatprep.subr.mxu0 0.0
    %2699 = vmatpush2.xpose.msra.mxu0 0.0
    %2700 = vmatprep.subr.mxu0 0.0
    %2701 = vmatpush2.xpose.msra.mxu0 0.0
    %2702 = vmatprep.subr.mxu0 0.0
    %2703 = vmatpush2.xpose.msra.mxu0 0.0
    %2704 = vmatprep.subr.mxu0 0.0
    %2705 = vmatpush2.xpose.msra.mxu0 0.0
    %2706 = vmatprep.subr.mxu0 0.0
    %2707 = vmatpush2.xpose.msra.mxu0 0.0
    %2708 = vmatprep.mubr.f32.mxu0 0.0
    %2709 = vmatmul.mubr.f32.gmra.mxu0 %v2640
    %v2710 = vpop.f32.mrf.mxu0
    %v2711 = vadd.f32 %v59, %v2710
    %v2712 = vpop.f32.mrf.mxu0
    %2713 = vdwg.mxu0
    %v2714 = vsel %vm203, %v2633, -inf
    %2715 = vmax.xlane.f32.xlu0 %v2714
    %v2716 = vpop.xlane.xlu0 %2715
    %v2717 = vsel %vm203, %v2711, -inf
    %2718 = vmax.xlane.f32.xlu0 %v2717
    %v2719 = vpop.xlane.xlu0 %2718
    %v2720 = vsub.f32 %v2633, %v2716
    %v2721 = vsub.f32 %v2711, %v2719
    %v2722 = vmul.f32 %v2720, 1.442695
    %v2723 = vpow.pop %v2722
    %v2724 = vmul.f32 %v2721, 1.442695
    %v2725 = vpow.pop %v2724
    %v2726 = vsel %vm203, %v2723, 0.0
    %2727 = vadd.xlane.f32.xlu0 %v2726
    %v2728 = vpop.xlane.xlu0 %2727
    %v2729 = vsel %vm203, %v2725, 0.0
    %2730 = vadd.xlane.f32.xlu0 %v2729
    %v2731 = vpop.xlane.xlu0 %2730
    %v2732 = vrcp.pop %v2728
    %v2733 = vmul.f32 %v2723, %v2732
    %v2734 = vrcp.pop %v2731
    %v2735 = vmul.f32 %v2725, %v2734
    %2736 = vrot.lane.b32.xlu0 %v2220, 56
    %v2737 = vpop.permute.xlu0 %2736
    %v2740 = vsel %vm203, %v2733, 0
    %2742 = vmatprep.subr.mxu0 0.0
    %2743 = vmatpush1.msra.mxu0 0.0
    %2744 = vmatprep.subr.mxu0 0.0
    %2745 = vmatpush1.msra.mxu0 0.0
    %2746 = vmatprep.subr.mxu0 0.0
    %2747 = vmatpush1.msra.mxu0 0.0
    %2748 = vmatprep.subr.mxu0 0.0
    %2749 = vmatpush1.msra.mxu0 0.0
    %2750 = vmatprep.subr.mxu0 0.0
    %2751 = vmatpush1.msra.mxu0 0.0
    %2752 = vmatprep.subr.mxu0 0.0
    %2753 = vmatpush1.msra.mxu0 0.0
    %2754 = vmatprep.subr.mxu0 0.0
    %2755 = vmatpush1.msra.mxu0 0.0
    %2756 = vmatprep.subr.mxu0 0.0
    %2757 = vmatpush1.msra.mxu0 0.0
    %2758 = vmatprep.subr.mxu0 0.0
    %2759 = vmatpush1.msra.mxu0 0.0
    %2760 = vmatprep.subr.mxu0 0.0
    %2761 = vmatpush1.msra.mxu0 0.0
    %2762 = vmatprep.subr.mxu0 0.0
    %2763 = vmatpush1.msra.mxu0 0.0
    %2764 = vmatprep.subr.mxu0 0.0
    %2765 = vmatpush1.msra.mxu0 0.0
    %2766 = vmatprep.subr.mxu0 0.0
    %2767 = vmatpush1.msra.mxu0 0.0
    %2768 = vmatprep.subr.mxu0 0.0
    %2769 = vmatpush1.msra.mxu0 0.0
    %2770 = vmatprep.subr.mxu0 0.0
    %2771 = vmatpush1.msra.mxu0 0.0
    %2772 = vmatprep.subr.mxu0 0.0
    %2773 = vmatpush1.msra.mxu0 %v2737
    %2774 = vmatprep.subr.mxu0 0.0
    %2775 = vmatpush2.msra.mxu0 0.0
    %2776 = vmatprep.subr.mxu0 0.0
    %2777 = vmatpush2.msra.mxu0 0.0
    %2778 = vmatprep.subr.mxu0 0.0
    %2779 = vmatpush2.msra.mxu0 0.0
    %2780 = vmatprep.subr.mxu0 0.0
    %2781 = vmatpush2.msra.mxu0 0.0
    %2782 = vmatprep.subr.mxu0 0.0
    %2783 = vmatpush2.msra.mxu0 0.0
    %2784 = vmatprep.subr.mxu0 0.0
    %2785 = vmatpush2.msra.mxu0 0.0
    %2786 = vmatprep.subr.mxu0 0.0
    %2787 = vmatpush2.msra.mxu0 0.0
    %2788 = vmatprep.subr.mxu0 0.0
    %2789 = vmatpush2.msra.mxu0 0.0
    %2790 = vmatprep.subr.mxu0 0.0
    %2791 = vmatpush2.msra.mxu0 0.0
    %2792 = vmatprep.subr.mxu0 0.0
    %2793 = vmatpush2.msra.mxu0 0.0
    %2794 = vmatprep.subr.mxu0 0.0
    %2795 = vmatpush2.msra.mxu0 0.0
    %2796 = vmatprep.subr.mxu0 0.0
    %2797 = vmatpush2.msra.mxu0 0.0
    %2798 = vmatprep.subr.mxu0 0.0
    %2799 = vmatpush2.msra.mxu0 0.0
    %2800 = vmatprep.subr.mxu0 0.0
    %2801 = vmatpush2.msra.mxu0 0.0
    %2802 = vmatprep.subr.mxu0 0.0
    %2803 = vmatpush2.msra.mxu0 0.0
    %2804 = vmatprep.subr.mxu0 0.0
    %2805 = vmatpush2.msra.mxu0 0.0
    %2806 = vmatprep.mubr.f32.mxu0 0.0
    %2807 = vmatmul.mubr.f32.gmra.mxu0 %v2740
    %v2808 = vpop.f32.mrf.mxu0
    %v2809 = vadd.f32 0.0, %v2808
    %v2810 = vpop.f32.mrf.mxu0
    %2811 = vdwg.mxu0
    %2812 = vrot.lane.b32.xlu0 %v2225, 56
    %v2813 = vpop.permute.xlu0 %2812
    %v2816 = vsel %vm203, %v2735, 0
    %2818 = vmatprep.subr.mxu0 0.0
    %2819 = vmatpush1.msra.mxu0 0.0
    %2820 = vmatprep.subr.mxu0 0.0
    %2821 = vmatpush1.msra.mxu0 0.0
    %2822 = vmatprep.subr.mxu0 0.0
    %2823 = vmatpush1.msra.mxu0 0.0
    %2824 = vmatprep.subr.mxu0 0.0
    %2825 = vmatpush1.msra.mxu0 0.0
    %2826 = vmatprep.subr.mxu0 0.0
    %2827 = vmatpush1.msra.mxu0 0.0
    %2828 = vmatprep.subr.mxu0 0.0
    %2829 = vmatpush1.msra.mxu0 0.0
    %2830 = vmatprep.subr.mxu0 0.0
    %2831 = vmatpush1.msra.mxu0 0.0
    %2832 = vmatprep.subr.mxu0 0.0
    %2833 = vmatpush1.msra.mxu0 0.0
    %2834 = vmatprep.subr.mxu0 0.0
    %2835 = vmatpush1.msra.mxu0 0.0
    %2836 = vmatprep.subr.mxu0 0.0
    %2837 = vmatpush1.msra.mxu0 0.0
    %2838 = vmatprep.subr.mxu0 0.0
    %2839 = vmatpush1.msra.mxu0 0.0
    %2840 = vmatprep.subr.mxu0 0.0
    %2841 = vmatpush1.msra.mxu0 0.0
    %2842 = vmatprep.subr.mxu0 0.0
    %2843 = vmatpush1.msra.mxu0 0.0
    %2844 = vmatprep.subr.mxu0 0.0
    %2845 = vmatpush1.msra.mxu0 0.0
    %2846 = vmatprep.subr.mxu0 0.0
    %2847 = vmatpush1.msra.mxu0 0.0
    %2848 = vmatprep.subr.mxu0 0.0
    %2849 = vmatpush1.msra.mxu0 %v2813
    %2850 = vmatprep.subr.mxu0 0.0
    %2851 = vmatpush2.msra.mxu0 0.0
    %2852 = vmatprep.subr.mxu0 0.0
    %2853 = vmatpush2.msra.mxu0 0.0
    %2854 = vmatprep.subr.mxu0 0.0
    %2855 = vmatpush2.msra.mxu0 0.0
    %2856 = vmatprep.subr.mxu0 0.0
    %2857 = vmatpush2.msra.mxu0 0.0
    %2858 = vmatprep.subr.mxu0 0.0
    %2859 = vmatpush2.msra.mxu0 0.0
    %2860 = vmatprep.subr.mxu0 0.0
    %2861 = vmatpush2.msra.mxu0 0.0
    %2862 = vmatprep.subr.mxu0 0.0
    %2863 = vmatpush2.msra.mxu0 0.0
    %2864 = vmatprep.subr.mxu0 0.0
    %2865 = vmatpush2.msra.mxu0 0.0
    %2866 = vmatprep.subr.mxu0 0.0
    %2867 = vmatpush2.msra.mxu0 0.0
    %2868 = vmatprep.subr.mxu0 0.0
    %2869 = vmatpush2.msra.mxu0 0.0
    %2870 = vmatprep.subr.mxu0 0.0
    %2871 = vmatpush2.msra.mxu0 0.0
    %2872 = vmatprep.subr.mxu0 0.0
    %2873 = vmatpush2.msra.mxu0 0.0
    %2874 = vmatprep.subr.mxu0 0.0
    %2875 = vmatpush2.msra.mxu0 0.0
    %2876 = vmatprep.subr.mxu0 0.0
    %2877 = vmatpush2.msra.mxu0 0.0
    %2878 = vmatprep.subr.mxu0 0.0
    %2879 = vmatpush2.msra.mxu0 0.0
    %2880 = vmatprep.subr.mxu0 0.0
    %2881 = vmatpush2.msra.mxu0 0.0
    %2882 = vmatprep.mubr.f32.mxu0 0.0
    %2883 = vmatmul.mubr.f32.gmra.mxu0 %v2816
    %v2884 = vpop.f32.mrf.mxu0
    %v2885 = vadd.f32 0.0, %v2884
    %v2886 = vpop.f32.mrf.mxu0
    %2887 = vdwg.mxu0
    %v2888 = vld [vmem:[%s2556 + $0x8] sm:$0xff]
    %v2890 = vsel %vm203, %v2809, 0
    %v2893 = vsel %vm203, %v2885, 0
    %2895 = vmatprep.subr.mxu0 0.0
    %2896 = vmatpush1.msra.mxu0 0.0
    %2897 = vmatprep.subr.mxu0 0.0
    %2898 = vmatpush1.msra.mxu0 0.0
    %2899 = vmatprep.subr.mxu0 0.0
    %2900 = vmatpush1.msra.mxu0 0.0
    %2901 = vmatprep.subr.mxu0 0.0
    %2902 = vmatpush1.msra.mxu0 0.0
    %2903 = vmatprep.subr.mxu0 0.0
    %2904 = vmatpush1.msra.mxu0 0.0
    %2905 = vmatprep.subr.mxu0 0.0
    %2906 = vmatpush1.msra.mxu0 0.0
    %2907 = vmatprep.subr.mxu0 0.0
    %2908 = vmatpush1.msra.mxu0 0.0
    %2909 = vmatprep.subr.mxu0 0.0
    %2910 = vmatpush1.msra.mxu0 0.0
    %2911 = vmatprep.subr.mxu0 0.0
    %2912 = vmatpush1.msra.mxu0 0.0
    %2913 = vmatprep.subr.mxu0 0.0
    %2914 = vmatpush1.msra.mxu0 0.0
    %2915 = vmatprep.subr.mxu0 0.0
    %2916 = vmatpush1.msra.mxu0 0.0
    %2917 = vmatprep.subr.mxu0 0.0
    %2918 = vmatpush1.msra.mxu0 0.0
    %2919 = vmatprep.subr.mxu0 0.0
    %2920 = vmatpush1.msra.mxu0 0.0
    %2921 = vmatprep.subr.mxu0 0.0
    %2922 = vmatpush1.msra.mxu0 0.0
    %2923 = vmatprep.subr.mxu0 0.0
    %2924 = vmatpush1.msra.mxu0 0.0
    %2925 = vmatprep.subr.mxu0 0.0
    %2926 = vmatpush1.msra.mxu0 %v2888
    %2927 = vmatprep.subr.mxu0 0.0
    %2928 = vmatpush2.msra.mxu0 0.0
    %2929 = vmatprep.subr.mxu0 0.0
    %2930 = vmatpush2.msra.mxu0 0.0
    %2931 = vmatprep.subr.mxu0 0.0
    %2932 = vmatpush2.msra.mxu0 0.0
    %2933 = vmatprep.subr.mxu0 0.0
    %2934 = vmatpush2.msra.mxu0 0.0
    %2935 = vmatprep.subr.mxu0 0.0
    %2936 = vmatpush2.msra.mxu0 0.0
    %2937 = vmatprep.subr.mxu0 0.0
    %2938 = vmatpush2.msra.mxu0 0.0
    %2939 = vmatprep.subr.mxu0 0.0
    %2940 = vmatpush2.msra.mxu0 0.0
    %2941 = vmatprep.subr.mxu0 0.0
    %2942 = vmatpush2.msra.mxu0 0.0
    %2943 = vmatprep.subr.mxu0 0.0
    %2944 = vmatpush2.msra.mxu0 0.0
    %2945 = vmatprep.subr.mxu0 0.0
    %2946 = vmatpush2.msra.mxu0 0.0
    %2947 = vmatprep.subr.mxu0 0.0
    %2948 = vmatpush2.msra.mxu0 0.0
    %2949 = vmatprep.subr.mxu0 0.0
    %2950 = vmatpush2.msra.mxu0 0.0
    %2951 = vmatprep.subr.mxu0 0.0
    %2952 = vmatpush2.msra.mxu0 0.0
    %2953 = vmatprep.subr.mxu0 0.0
    %2954 = vmatpush2.msra.mxu0 0.0
    %2955 = vmatprep.subr.mxu0 0.0
    %2956 = vmatpush2.msra.mxu0 0.0
    %2957 = vmatprep.subr.mxu0 0.0
    %2958 = vmatpush2.msra.mxu0 0.0
    %2959 = vmatprep.mubr.f32.mxu0 0.0
    %2960 = vmatmul.mubr.f32.gmra.mxu0 %v2890
    %v2961 = vpop.f32.mrf.mxu0
    %v2962 = vadd.f32 0.0, %v2961
    %v2963 = vpop.f32.mrf.mxu0
    %2964 = vmatprep.mubr.f32.mxu0 0.0
    %2965 = vmatmul.mubr.f32.gmra.mxu0 %v2893
    %v2966 = vpop.f32.mrf.mxu0
    %v2967 = vadd.f32 0.0, %v2966
    %v2968 = vpop.f32.mrf.mxu0
    %2969 = vdwg.mxu0
    %v2971 = vsel %vm203, %v2477, 0
    %v2974 = vsel %vm203, %v2553, 0
    %2976 = vmatprep.subr.mxu0 0.0
    %2977 = vmatpush1.msra.mxu0 0.0
    %2978 = vmatprep.subr.mxu0 0.0
    %2979 = vmatpush1.msra.mxu0 0.0
    %2980 = vmatprep.subr.mxu0 0.0
    %2981 = vmatpush1.msra.mxu0 0.0
    %2982 = vmatprep.subr.mxu0 0.0
    %2983 = vmatpush1.msra.mxu0 0.0
    %2984 = vmatprep.subr.mxu0 0.0
    %2985 = vmatpush1.msra.mxu0 0.0
    %2986 = vmatprep.subr.mxu0 0.0
    %2987 = vmatpush1.msra.mxu0 0.0
    %2988 = vmatprep.subr.mxu0 0.0
    %2989 = vmatpush1.msra.mxu0 0.0
    %2990 = vmatprep.subr.mxu0 0.0
    %2991 = vmatpush1.msra.mxu0 0.0
    %2992 = vmatprep.subr.mxu0 0.0
    %2993 = vmatpush1.msra.mxu0 0.0
    %2994 = vmatprep.subr.mxu0 0.0
    %2995 = vmatpush1.msra.mxu0 0.0
    %2996 = vmatprep.subr.mxu0 0.0
    %2997 = vmatpush1.msra.mxu0 0.0
    %2998 = vmatprep.subr.mxu0 0.0
    %2999 = vmatpush1.msra.mxu0 0.0
    %3000 = vmatprep.subr.mxu0 0.0
    %3001 = vmatpush1.msra.mxu0 0.0
    %3002 = vmatprep.subr.mxu0 0.0
    %3003 = vmatpush1.msra.mxu0 0.0
    %3004 = vmatprep.subr.mxu0 0.0
    %3005 = vmatpush1.msra.mxu0 0.0
    %3006 = vmatprep.subr.mxu0 0.0
    %3007 = vmatpush1.msra.mxu0 %v2557
    %3008 = vmatprep.subr.mxu0 0.0
    %3009 = vmatpush2.msra.mxu0 0.0
    %3010 = vmatprep.subr.mxu0 0.0
    %3011 = vmatpush2.msra.mxu0 0.0
    %3012 = vmatprep.subr.mxu0 0.0
    %3013 = vmatpush2.msra.mxu0 0.0
    %3014 = vmatprep.subr.mxu0 0.0
    %3015 = vmatpush2.msra.mxu0 0.0
    %3016 = vmatprep.subr.mxu0 0.0
    %3017 = vmatpush2.msra.mxu0 0.0
    %3018 = vmatprep.subr.mxu0 0.0
    %3019 = vmatpush2.msra.mxu0 0.0
    %3020 = vmatprep.subr.mxu0 0.0
    %3021 = vmatpush2.msra.mxu0 0.0
    %3022 = vmatprep.subr.mxu0 0.0
    %3023 = vmatpush2.msra.mxu0 0.0
    %3024 = vmatprep.subr.mxu0 0.0
    %3025 = vmatpush2.msra.mxu0 0.0
    %3026 = vmatprep.subr.mxu0 0.0
    %3027 = vmatpush2.msra.mxu0 0.0
    %3028 = vmatprep.subr.mxu0 0.0
    %3029 = vmatpush2.msra.mxu0 0.0
    %3030 = vmatprep.subr.mxu0 0.0
    %3031 = vmatpush2.msra.mxu0 0.0
    %3032 = vmatprep.subr.mxu0 0.0
    %3033 = vmatpush2.msra.mxu0 0.0
    %3034 = vmatprep.subr.mxu0 0.0
    %3035 = vmatpush2.msra.mxu0 0.0
    %3036 = vmatprep.subr.mxu0 0.0
    %3037 = vmatpush2.msra.mxu0 0.0
    %3038 = vmatprep.subr.mxu0 0.0
    %3039 = vmatpush2.msra.mxu0 0.0
    %3040 = vmatprep.mubr.f32.mxu0 0.0
    %3041 = vmatmul.mubr.f32.gmra.mxu0 %v2971
    %v3042 = vpop.f32.mrf.mxu0
    %v3043 = vadd.f32 %v2962, %v3042
    %v3044 = vpop.f32.mrf.mxu0
    %3045 = vmatprep.mubr.f32.mxu0 0.0
    %3046 = vmatmul.mubr.f32.gmra.mxu0 %v2974
    %v3047 = vpop.f32.mrf.mxu0
    %v3048 = vadd.f32 %v2967, %v3047
    %v3049 = vpop.f32.mrf.mxu0
    %3050 = vdwg.mxu0
    %3051 = vrot.lane.b32.xlu0 %v2220, 112
    %v3052 = vpop.permute.xlu0 %3051
    %3053 = vrot.lane.b32.xlu0 %v2220, 80
    %v3054 = vpop.permute.xlu0 %3053
    %v3055 = vsel %vm203, %v3052, 0
    %v3057 = vsel %vm203, %v3054, 0
    %3059 = vmatprep.subr.mxu0 0.0
    %3060 = vmatpush1.xpose.msra.mxu0 0.0
    %3061 = vmatprep.subr.mxu0 0.0
    %3062 = vmatpush1.xpose.msra.mxu0 0.0
    %3063 = vmatprep.subr.mxu0 0.0
    %3064 = vmatpush1.xpose.msra.mxu0 0.0
    %3065 = vmatprep.subr.mxu0 0.0
    %3066 = vmatpush1.xpose.msra.mxu0 0.0
    %3067 = vmatprep.subr.mxu0 0.0
    %3068 = vmatpush1.xpose.msra.mxu0 0.0
    %3069 = vmatprep.subr.mxu0 0.0
    %3070 = vmatpush1.xpose.msra.mxu0 0.0
    %3071 = vmatprep.subr.mxu0 0.0
    %3072 = vmatpush1.xpose.msra.mxu0 0.0
    %3073 = vmatprep.subr.mxu0 0.0
    %3074 = vmatpush1.xpose.msra.mxu0 0.0
    %3075 = vmatprep.subr.mxu0 0.0
    %3076 = vmatpush1.xpose.msra.mxu0 0.0
    %3077 = vmatprep.subr.mxu0 0.0
    %3078 = vmatpush1.xpose.msra.mxu0 0.0
    %3079 = vmatprep.subr.mxu0 0.0
    %3080 = vmatpush1.xpose.msra.mxu0 0.0
    %3081 = vmatprep.subr.mxu0 0.0
    %3082 = vmatpush1.xpose.msra.mxu0 0.0
    %3083 = vmatprep.subr.mxu0 0.0
    %3084 = vmatpush1.xpose.msra.mxu0 0.0
    %3085 = vmatprep.subr.mxu0 0.0
    %3086 = vmatpush1.xpose.msra.mxu0 0.0
    %3087 = vmatprep.subr.mxu0 0.0
    %3088 = vmatpush1.xpose.msra.mxu0 0.0
    %3089 = vmatprep.subr.mxu0 0.0
    %3090 = vmatpush1.xpose.msra.mxu0 %v3057
    %3091 = vmatprep.subr.mxu0 0.0
    %3092 = vmatpush2.xpose.msra.mxu0 0.0
    %3093 = vmatprep.subr.mxu0 0.0
    %3094 = vmatpush2.xpose.msra.mxu0 0.0
    %3095 = vmatprep.subr.mxu0 0.0
    %3096 = vmatpush2.xpose.msra.mxu0 0.0
    %3097 = vmatprep.subr.mxu0 0.0
    %3098 = vmatpush2.xpose.msra.mxu0 0.0
    %3099 = vmatprep.subr.mxu0 0.0
    %3100 = vmatpush2.xpose.msra.mxu0 0.0
    %3101 = vmatprep.subr.mxu0 0.0
    %3102 = vmatpush2.xpose.msra.mxu0 0.0
    %3103 = vmatprep.subr.mxu0 0.0
    %3104 = vmatpush2.xpose.msra.mxu0 0.0
    %3105 = vmatprep.subr.mxu0 0.0
    %3106 = vmatpush2.xpose.msra.mxu0 0.0
    %3107 = vmatprep.subr.mxu0 0.0
    %3108 = vmatpush2.xpose.msra.mxu0 0.0
    %3109 = vmatprep.subr.mxu0 0.0
    %3110 = vmatpush2.xpose.msra.mxu0 0.0
    %3111 = vmatprep.subr.mxu0 0.0
    %3112 = vmatpush2.xpose.msra.mxu0 0.0
    %3113 = vmatprep.subr.mxu0 0.0
    %3114 = vmatpush2.xpose.msra.mxu0 0.0
    %3115 = vmatprep.subr.mxu0 0.0
    %3116 = vmatpush2.xpose.msra.mxu0 0.0
    %3117 = vmatprep.subr.mxu0 0.0
    %3118 = vmatpush2.xpose.msra.mxu0 0.0
    %3119 = vmatprep.subr.mxu0 0.0
    %3120 = vmatpush2.xpose.msra.mxu0 0.0
    %3121 = vmatprep.subr.mxu0 0.0
    %3122 = vmatpush2.xpose.msra.mxu0 0.0
    %3123 = vmatprep.mubr.f32.mxu0 0.0
    %3124 = vmatmul.mubr.f32.gmra.mxu0 %v3055
    %v3125 = vpop.f32.mrf.mxu0
    %v3126 = vadd.f32 %v55, %v3125
    %v3127 = vpop.f32.mrf.mxu0
    %3128 = vdwg.mxu0
    %3129 = vrot.lane.b32.xlu0 %v2225, 112
    %v3130 = vpop.permute.xlu0 %3129
    %3131 = vrot.lane.b32.xlu0 %v2225, 80
    %v3132 = vpop.permute.xlu0 %3131
    %v3133 = vsel %vm203, %v3130, 0
    %v3135 = vsel %vm203, %v3132, 0
    %3137 = vmatprep.subr.mxu0 0.0
    %3138 = vmatpush1.xpose.msra.mxu0 0.0
    %3139 = vmatprep.subr.mxu0 0.0
    %3140 = vmatpush1.xpose.msra.mxu0 0.0
    %3141 = vmatprep.subr.mxu0 0.0
    %3142 = vmatpush1.xpose.msra.mxu0 0.0
    %3143 = vmatprep.subr.mxu0 0.0
    %3144 = vmatpush1.xpose.msra.mxu0 0.0
    %3145 = vmatprep.subr.mxu0 0.0
    %3146 = vmatpush1.xpose.msra.mxu0 0.0
    %3147 = vmatprep.subr.mxu0 0.0
    %3148 = vmatpush1.xpose.msra.mxu0 0.0
    %3149 = vmatprep.subr.mxu0 0.0
    %3150 = vmatpush1.xpose.msra.mxu0 0.0
    %3151 = vmatprep.subr.mxu0 0.0
    %3152 = vmatpush1.xpose.msra.mxu0 0.0
    %3153 = vmatprep.subr.mxu0 0.0
    %3154 = vmatpush1.xpose.msra.mxu0 0.0
    %3155 = vmatprep.subr.mxu0 0.0
    %3156 = vmatpush1.xpose.msra.mxu0 0.0
    %3157 = vmatprep.subr.mxu0 0.0
    %3158 = vmatpush1.xpose.msra.mxu0 0.0
    %3159 = vmatprep.subr.mxu0 0.0
    %3160 = vmatpush1.xpose.msra.mxu0 0.0
    %3161 = vmatprep.subr.mxu0 0.0
    %3162 = vmatpush1.xpose.msra.mxu0 0.0
    %3163 = vmatprep.subr.mxu0 0.0
    %3164 = vmatpush1.xpose.msra.mxu0 0.0
    %3165 = vmatprep.subr.mxu0 0.0
    %3166 = vmatpush1.xpose.msra.mxu0 0.0
    %3167 = vmatprep.subr.mxu0 0.0
    %3168 = vmatpush1.xpose.msra.mxu0 %v3135
    %3169 = vmatprep.subr.mxu0 0.0
    %3170 = vmatpush2.xpose.msra.mxu0 0.0
    %3171 = vmatprep.subr.mxu0 0.0
    %3172 = vmatpush2.xpose.msra.mxu0 0.0
    %3173 = vmatprep.subr.mxu0 0.0
    %3174 = vmatpush2.xpose.msra.mxu0 0.0
    %3175 = vmatprep.subr.mxu0 0.0
    %3176 = vmatpush2.xpose.msra.mxu0 0.0
    %3177 = vmatprep.subr.mxu0 0.0
    %3178 = vmatpush2.xpose.msra.mxu0 0.0
    %3179 = vmatprep.subr.mxu0 0.0
    %3180 = vmatpush2.xpose.msra.mxu0 0.0
    %3181 = vmatprep.subr.mxu0 0.0
    %3182 = vmatpush2.xpose.msra.mxu0 0.0
    %3183 = vmatprep.subr.mxu0 0.0
    %3184 = vmatpush2.xpose.msra.mxu0 0.0
    %3185 = vmatprep.subr.mxu0 0.0
    %3186 = vmatpush2.xpose.msra.mxu0 0.0
    %3187 = vmatprep.subr.mxu0 0.0
    %3188 = vmatpush2.xpose.msra.mxu0 0.0
    %3189 = vmatprep.subr.mxu0 0.0
    %3190 = vmatpush2.xpose.msra.mxu0 0.0
    %3191 = vmatprep.subr.mxu0 0.0
    %3192 = vmatpush2.xpose.msra.mxu0 0.0
    %3193 = vmatprep.subr.mxu0 0.0
    %3194 = vmatpush2.xpose.msra.mxu0 0.0
    %3195 = vmatprep.subr.mxu0 0.0
    %3196 = vmatpush2.xpose.msra.mxu0 0.0
    %3197 = vmatprep.subr.mxu0 0.0
    %3198 = vmatpush2.xpose.msra.mxu0 0.0
    %3199 = vmatprep.subr.mxu0 0.0
    %3200 = vmatpush2.xpose.msra.mxu0 0.0
    %3201 = vmatprep.mubr.f32.mxu0 0.0
    %3202 = vmatmul.mubr.f32.gmra.mxu0 %v3133
    %v3203 = vpop.f32.mrf.mxu0
    %v3204 = vadd.f32 %v59, %v3203
    %v3205 = vpop.f32.mrf.mxu0
    %3206 = vdwg.mxu0
    %v3207 = vsel %vm203, %v3126, -inf
    %3208 = vmax.xlane.f32.xlu0 %v3207
    %v3209 = vpop.xlane.xlu0 %3208
    %v3210 = vsel %vm203, %v3204, -inf
    %3211 = vmax.xlane.f32.xlu0 %v3210
    %v3212 = vpop.xlane.xlu0 %3211
    %v3213 = vsub.f32 %v3126, %v3209
    %v3214 = vsub.f32 %v3204, %v3212
    %v3215 = vmul.f32 %v3213, 1.442695
    %v3216 = vpow.pop %v3215
    %v3217 = vmul.f32 %v3214, 1.442695
    %v3218 = vpow.pop %v3217
    %v3219 = vsel %vm203, %v3216, 0.0
    %3220 = vadd.xlane.f32.xlu0 %v3219
    %v3221 = vpop.xlane.xlu0 %3220
    %v3222 = vsel %vm203, %v3218, 0.0
    %3223 = vadd.xlane.f32.xlu0 %v3222
    %v3224 = vpop.xlane.xlu0 %3223
    %v3225 = vrcp.pop %v3221
    %v3226 = vmul.f32 %v3216, %v3225
    %v3227 = vrcp.pop %v3224
    %v3228 = vmul.f32 %v3218, %v3227
    %3229 = vrot.lane.b32.xlu0 %v2220, 48
    %v3230 = vpop.permute.xlu0 %3229
    %v3233 = vsel %vm203, %v3226, 0
    %3235 = vmatprep.subr.mxu0 0.0
    %3236 = vmatpush1.msra.mxu0 0.0
    %3237 = vmatprep.subr.mxu0 0.0
    %3238 = vmatpush1.msra.mxu0 0.0
    %3239 = vmatprep.subr.mxu0 0.0
    %3240 = vmatpush1.msra.mxu0 0.0
    %3241 = vmatprep.subr.mxu0 0.0
    %3242 = vmatpush1.msra.mxu0 0.0
    %3243 = vmatprep.subr.mxu0 0.0
    %3244 = vmatpush1.msra.mxu0 0.0
    %3245 = vmatprep.subr.mxu0 0.0
    %3246 = vmatpush1.msra.mxu0 0.0
    %3247 = vmatprep.subr.mxu0 0.0
    %3248 = vmatpush1.msra.mxu0 0.0
    %3249 = vmatprep.subr.mxu0 0.0
    %3250 = vmatpush1.msra.mxu0 0.0
    %3251 = vmatprep.subr.mxu0 0.0
    %3252 = vmatpush1.msra.mxu0 0.0
    %3253 = vmatprep.subr.mxu0 0.0
    %3254 = vmatpush1.msra.mxu0 0.0
    %3255 = vmatprep.subr.mxu0 0.0
    %3256 = vmatpush1.msra.mxu0 0.0
    %3257 = vmatprep.subr.mxu0 0.0
    %3258 = vmatpush1.msra.mxu0 0.0
    %3259 = vmatprep.subr.mxu0 0.0
    %3260 = vmatpush1.msra.mxu0 0.0
    %3261 = vmatprep.subr.mxu0 0.0
    %3262 = vmatpush1.msra.mxu0 0.0
    %3263 = vmatprep.subr.mxu0 0.0
    %3264 = vmatpush1.msra.mxu0 0.0
    %3265 = vmatprep.subr.mxu0 0.0
    %3266 = vmatpush1.msra.mxu0 %v3230
    %3267 = vmatprep.subr.mxu0 0.0
    %3268 = vmatpush2.msra.mxu0 0.0
    %3269 = vmatprep.subr.mxu0 0.0
    %3270 = vmatpush2.msra.mxu0 0.0
    %3271 = vmatprep.subr.mxu0 0.0
    %3272 = vmatpush2.msra.mxu0 0.0
    %3273 = vmatprep.subr.mxu0 0.0
    %3274 = vmatpush2.msra.mxu0 0.0
    %3275 = vmatprep.subr.mxu0 0.0
    %3276 = vmatpush2.msra.mxu0 0.0
    %3277 = vmatprep.subr.mxu0 0.0
    %3278 = vmatpush2.msra.mxu0 0.0
    %3279 = vmatprep.subr.mxu0 0.0
    %3280 = vmatpush2.msra.mxu0 0.0
    %3281 = vmatprep.subr.mxu0 0.0
    %3282 = vmatpush2.msra.mxu0 0.0
    %3283 = vmatprep.subr.mxu0 0.0
    %3284 = vmatpush2.msra.mxu0 0.0
    %3285 = vmatprep.subr.mxu0 0.0
    %3286 = vmatpush2.msra.mxu0 0.0
    %3287 = vmatprep.subr.mxu0 0.0
    %3288 = vmatpush2.msra.mxu0 0.0
    %3289 = vmatprep.subr.mxu0 0.0
    %3290 = vmatpush2.msra.mxu0 0.0
    %3291 = vmatprep.subr.mxu0 0.0
    %3292 = vmatpush2.msra.mxu0 0.0
    %3293 = vmatprep.subr.mxu0 0.0
    %3294 = vmatpush2.msra.mxu0 0.0
    %3295 = vmatprep.subr.mxu0 0.0
    %3296 = vmatpush2.msra.mxu0 0.0
    %3297 = vmatprep.subr.mxu0 0.0
    %3298 = vmatpush2.msra.mxu0 0.0
    %3299 = vmatprep.mubr.f32.mxu0 0.0
    %3300 = vmatmul.mubr.f32.gmra.mxu0 %v3233
    %v3301 = vpop.f32.mrf.mxu0
    %v3302 = vadd.f32 0.0, %v3301
    %v3303 = vpop.f32.mrf.mxu0
    %3304 = vdwg.mxu0
    %3305 = vrot.lane.b32.xlu0 %v2225, 48
    %v3306 = vpop.permute.xlu0 %3305
    %v3309 = vsel %vm203, %v3228, 0
    %3311 = vmatprep.subr.mxu0 0.0
    %3312 = vmatpush1.msra.mxu0 0.0
    %3313 = vmatprep.subr.mxu0 0.0
    %3314 = vmatpush1.msra.mxu0 0.0
    %3315 = vmatprep.subr.mxu0 0.0
    %3316 = vmatpush1.msra.mxu0 0.0
    %3317 = vmatprep.subr.mxu0 0.0
    %3318 = vmatpush1.msra.mxu0 0.0
    %3319 = vmatprep.subr.mxu0 0.0
    %3320 = vmatpush1.msra.mxu0 0.0
    %3321 = vmatprep.subr.mxu0 0.0
    %3322 = vmatpush1.msra.mxu0 0.0
    %3323 = vmatprep.subr.mxu0 0.0
    %3324 = vmatpush1.msra.mxu0 0.0
    %3325 = vmatprep.subr.mxu0 0.0
    %3326 = vmatpush1.msra.mxu0 0.0
    %3327 = vmatprep.subr.mxu0 0.0
    %3328 = vmatpush1.msra.mxu0 0.0
    %3329 = vmatprep.subr.mxu0 0.0
    %3330 = vmatpush1.msra.mxu0 0.0
    %3331 = vmatprep.subr.mxu0 0.0
    %3332 = vmatpush1.msra.mxu0 0.0
    %3333 = vmatprep.subr.mxu0 0.0
    %3334 = vmatpush1.msra.mxu0 0.0
    %3335 = vmatprep.subr.mxu0 0.0
    %3336 = vmatpush1.msra.mxu0 0.0
    %3337 = vmatprep.subr.mxu0 0.0
    %3338 = vmatpush1.msra.mxu0 0.0
    %3339 = vmatprep.subr.mxu0 0.0
    %3340 = vmatpush1.msra.mxu0 0.0
    %3341 = vmatprep.subr.mxu0 0.0
    %3342 = vmatpush1.msra.mxu0 %v3306
    %3343 = vmatprep.subr.mxu0 0.0
    %3344 = vmatpush2.msra.mxu0 0.0
    %3345 = vmatprep.subr.mxu0 0.0
    %3346 = vmatpush2.msra.mxu0 0.0
    %3347 = vmatprep.subr.mxu0 0.0
    %3348 = vmatpush2.msra.mxu0 0.0
    %3349 = vmatprep.subr.mxu0 0.0
    %3350 = vmatpush2.msra.mxu0 0.0
    %3351 = vmatprep.subr.mxu0 0.0
    %3352 = vmatpush2.msra.mxu0 0.0
    %3353 = vmatprep.subr.mxu0 0.0
    %3354 = vmatpush2.msra.mxu0 0.0
    %3355 = vmatprep.subr.mxu0 0.0
    %3356 = vmatpush2.msra.mxu0 0.0
    %3357 = vmatprep.subr.mxu0 0.0
    %3358 = vmatpush2.msra.mxu0 0.0
    %3359 = vmatprep.subr.mxu0 0.0
    %3360 = vmatpush2.msra.mxu0 0.0
    %3361 = vmatprep.subr.mxu0 0.0
    %3362 = vmatpush2.msra.mxu0 0.0
    %3363 = vmatprep.subr.mxu0 0.0
    %3364 = vmatpush2.msra.mxu0 0.0
    %3365 = vmatprep.subr.mxu0 0.0
    %3366 = vmatpush2.msra.mxu0 0.0
    %3367 = vmatprep.subr.mxu0 0.0
    %3368 = vmatpush2.msra.mxu0 0.0
    %3369 = vmatprep.subr.mxu0 0.0
    %3370 = vmatpush2.msra.mxu0 0.0
    %3371 = vmatprep.subr.mxu0 0.0
    %3372 = vmatpush2.msra.mxu0 0.0
    %3373 = vmatprep.subr.mxu0 0.0
    %3374 = vmatpush2.msra.mxu0 0.0
    %3375 = vmatprep.mubr.f32.mxu0 0.0
    %3376 = vmatmul.mubr.f32.gmra.mxu0 %v3309
    %v3377 = vpop.f32.mrf.mxu0
    %v3378 = vadd.f32 0.0, %v3377
    %v3379 = vpop.f32.mrf.mxu0
    %3380 = vdwg.mxu0
    %v3381 = vld [vmem:[%s2556 + $0x10] sm:$0xff]
    %v3383 = vsel %vm203, %v3302, 0
    %v3386 = vsel %vm203, %v3378, 0
    %3388 = vmatprep.subr.mxu0 0.0
    %3389 = vmatpush1.msra.mxu0 0.0
    %3390 = vmatprep.subr.mxu0 0.0
    %3391 = vmatpush1.msra.mxu0 0.0
    %3392 = vmatprep.subr.mxu0 0.0
    %3393 = vmatpush1.msra.mxu0 0.0
    %3394 = vmatprep.subr.mxu0 0.0
    %3395 = vmatpush1.msra.mxu0 0.0
    %3396 = vmatprep.subr.mxu0 0.0
    %3397 = vmatpush1.msra.mxu0 0.0
    %3398 = vmatprep.subr.mxu0 0.0
    %3399 = vmatpush1.msra.mxu0 0.0
    %3400 = vmatprep.subr.mxu0 0.0
    %3401 = vmatpush1.msra.mxu0 0.0
    %3402 = vmatprep.subr.mxu0 0.0
    %3403 = vmatpush1.msra.mxu0 0.0
    %3404 = vmatprep.subr.mxu0 0.0
    %3405 = vmatpush1.msra.mxu0 0.0
    %3406 = vmatprep.subr.mxu0 0.0
    %3407 = vmatpush1.msra.mxu0 0.0
    %3408 = vmatprep.subr.mxu0 0.0
    %3409 = vmatpush1.msra.mxu0 0.0
    %3410 = vmatprep.subr.mxu0 0.0
    %3411 = vmatpush1.msra.mxu0 0.0
    %3412 = vmatprep.subr.mxu0 0.0
    %3413 = vmatpush1.msra.mxu0 0.0
    %3414 = vmatprep.subr.mxu0 0.0
    %3415 = vmatpush1.msra.mxu0 0.0
    %3416 = vmatprep.subr.mxu0 0.0
    %3417 = vmatpush1.msra.mxu0 0.0
    %3418 = vmatprep.subr.mxu0 0.0
    %3419 = vmatpush1.msra.mxu0 %v3381
    %3420 = vmatprep.subr.mxu0 0.0
    %3421 = vmatpush2.msra.mxu0 0.0
    %3422 = vmatprep.subr.mxu0 0.0
    %3423 = vmatpush2.msra.mxu0 0.0
    %3424 = vmatprep.subr.mxu0 0.0
    %3425 = vmatpush2.msra.mxu0 0.0
    %3426 = vmatprep.subr.mxu0 0.0
    %3427 = vmatpush2.msra.mxu0 0.0
    %3428 = vmatprep.subr.mxu0 0.0
    %3429 = vmatpush2.msra.mxu0 0.0
    %3430 = vmatprep.subr.mxu0 0.0
    %3431 = vmatpush2.msra.mxu0 0.0
    %3432 = vmatprep.subr.mxu0 0.0
    %3433 = vmatpush2.msra.mxu0 0.0
    %3434 = vmatprep.subr.mxu0 0.0
    %3435 = vmatpush2.msra.mxu0 0.0
    %3436 = vmatprep.subr.mxu0 0.0
    %3437 = vmatpush2.msra.mxu0 0.0
    %3438 = vmatprep.subr.mxu0 0.0
    %3439 = vmatpush2.msra.mxu0 0.0
    %3440 = vmatprep.subr.mxu0 0.0
    %3441 = vmatpush2.msra.mxu0 0.0
    %3442 = vmatprep.subr.mxu0 0.0
    %3443 = vmatpush2.msra.mxu0 0.0
    %3444 = vmatprep.subr.mxu0 0.0
    %3445 = vmatpush2.msra.mxu0 0.0
    %3446 = vmatprep.subr.mxu0 0.0
    %3447 = vmatpush2.msra.mxu0 0.0
    %3448 = vmatprep.subr.mxu0 0.0
    %3449 = vmatpush2.msra.mxu0 0.0
    %3450 = vmatprep.subr.mxu0 0.0
    %3451 = vmatpush2.msra.mxu0 0.0
    %3452 = vmatprep.mubr.f32.mxu0 0.0
    %3453 = vmatmul.mubr.f32.gmra.mxu0 %v3383
    %v3454 = vpop.f32.mrf.mxu0
    %v3455 = vadd.f32 0.0, %v3454
    %v3456 = vpop.f32.mrf.mxu0
    %3457 = vmatprep.mubr.f32.mxu0 0.0
    %3458 = vmatmul.mubr.f32.gmra.mxu0 %v3386
    %v3459 = vpop.f32.mrf.mxu0
    %v3460 = vadd.f32 0.0, %v3459
    %v3461 = vpop.f32.mrf.mxu0
    %3462 = vdwg.mxu0
    %v3463 = vadd.f32 %v3043, %v3455
    %v3464 = vadd.f32 %v3048, %v3460
    %3465 = vrot.lane.b32.xlu0 %v2220, 104
    %v3466 = vpop.permute.xlu0 %3465
    %3467 = vrot.lane.b32.xlu0 %v2220, 72
    %v3468 = vpop.permute.xlu0 %3467
    %v3469 = vsel %vm203, %v3466, 0
    %v3471 = vsel %vm203, %v3468, 0
    %3473 = vmatprep.subr.mxu0 0.0
    %3474 = vmatpush1.xpose.msra.mxu0 0.0
    %3475 = vmatprep.subr.mxu0 0.0
    %3476 = vmatpush1.xpose.msra.mxu0 0.0
    %3477 = vmatprep.subr.mxu0 0.0
    %3478 = vmatpush1.xpose.msra.mxu0 0.0
    %3479 = vmatprep.subr.mxu0 0.0
    %3480 = vmatpush1.xpose.msra.mxu0 0.0
    %3481 = vmatprep.subr.mxu0 0.0
    %3482 = vmatpush1.xpose.msra.mxu0 0.0
    %3483 = vmatprep.subr.mxu0 0.0
    %3484 = vmatpush1.xpose.msra.mxu0 0.0
    %3485 = vmatprep.subr.mxu0 0.0
    %3486 = vmatpush1.xpose.msra.mxu0 0.0
    %3487 = vmatprep.subr.mxu0 0.0
    %3488 = vmatpush1.xpose.msra.mxu0 0.0
    %3489 = vmatprep.subr.mxu0 0.0
    %3490 = vmatpush1.xpose.msra.mxu0 0.0
    %3491 = vmatprep.subr.mxu0 0.0
    %3492 = vmatpush1.xpose.msra.mxu0 0.0
    %3493 = vmatprep.subr.mxu0 0.0
    %3494 = vmatpush1.xpose.msra.mxu0 0.0
    %3495 = vmatprep.subr.mxu0 0.0
    %3496 = vmatpush1.xpose.msra.mxu0 0.0
    %3497 = vmatprep.subr.mxu0 0.0
    %3498 = vmatpush1.xpose.msra.mxu0 0.0
    %3499 = vmatprep.subr.mxu0 0.0
    %3500 = vmatpush1.xpose.msra.mxu0 0.0
    %3501 = vmatprep.subr.mxu0 0.0
    %3502 = vmatpush1.xpose.msra.mxu0 0.0
    %3503 = vmatprep.subr.mxu0 0.0
    %3504 = vmatpush1.xpose.msra.mxu0 %v3471
    %3505 = vmatprep.subr.mxu0 0.0
    %3506 = vmatpush2.xpose.msra.mxu0 0.0
    %3507 = vmatprep.subr.mxu0 0.0
    %3508 = vmatpush2.xpose.msra.mxu0 0.0
    %3509 = vmatprep.subr.mxu0 0.0
    %3510 = vmatpush2.xpose.msra.mxu0 0.0
    %3511 = vmatprep.subr.mxu0 0.0
    %3512 = vmatpush2.xpose.msra.mxu0 0.0
    %3513 = vmatprep.subr.mxu0 0.0
    %3514 = vmatpush2.xpose.msra.mxu0 0.0
    %3515 = vmatprep.subr.mxu0 0.0
    %3516 = vmatpush2.xpose.msra.mxu0 0.0
    %3517 = vmatprep.subr.mxu0 0.0
    %3518 = vmatpush2.xpose.msra.mxu0 0.0
    %3519 = vmatprep.subr.mxu0 0.0
    %3520 = vmatpush2.xpose.msra.mxu0 0.0
    %3521 = vmatprep.subr.mxu0 0.0
    %3522 = vmatpush2.xpose.msra.mxu0 0.0
    %3523 = vmatprep.subr.mxu0 0.0
    %3524 = vmatpush2.xpose.msra.mxu0 0.0
    %3525 = vmatprep.subr.mxu0 0.0
    %3526 = vmatpush2.xpose.msra.mxu0 0.0
    %3527 = vmatprep.subr.mxu0 0.0
    %3528 = vmatpush2.xpose.msra.mxu0 0.0
    %3529 = vmatprep.subr.mxu0 0.0
    %3530 = vmatpush2.xpose.msra.mxu0 0.0
    %3531 = vmatprep.subr.mxu0 0.0
    %3532 = vmatpush2.xpose.msra.mxu0 0.0
    %3533 = vmatprep.subr.mxu0 0.0
    %3534 = vmatpush2.xpose.msra.mxu0 0.0
    %3535 = vmatprep.subr.mxu0 0.0
    %3536 = vmatpush2.xpose.msra.mxu0 0.0
    %3537 = vmatprep.mubr.f32.mxu0 0.0
    %3538 = vmatmul.mubr.f32.gmra.mxu0 %v3469
    %v3539 = vpop.f32.mrf.mxu0
    %v3540 = vadd.f32 %v55, %v3539
    %v3541 = vpop.f32.mrf.mxu0
    %3542 = vdwg.mxu0
    %3543 = vrot.lane.b32.xlu0 %v2225, 104
    %v3544 = vpop.permute.xlu0 %3543
    %3545 = vrot.lane.b32.xlu0 %v2225, 72
    %v3546 = vpop.permute.xlu0 %3545
    %v3547 = vsel %vm203, %v3544, 0
    %v3549 = vsel %vm203, %v3546, 0
    %3551 = vmatprep.subr.mxu0 0.0
    %3552 = vmatpush1.xpose.msra.mxu0 0.0
    %3553 = vmatprep.subr.mxu0 0.0
    %3554 = vmatpush1.xpose.msra.mxu0 0.0
    %3555 = vmatprep.subr.mxu0 0.0
    %3556 = vmatpush1.xpose.msra.mxu0 0.0
    %3557 = vmatprep.subr.mxu0 0.0
    %3558 = vmatpush1.xpose.msra.mxu0 0.0
    %3559 = vmatprep.subr.mxu0 0.0
    %3560 = vmatpush1.xpose.msra.mxu0 0.0
    %3561 = vmatprep.subr.mxu0 0.0
    %3562 = vmatpush1.xpose.msra.mxu0 0.0
    %3563 = vmatprep.subr.mxu0 0.0
    %3564 = vmatpush1.xpose.msra.mxu0 0.0
    %3565 = vmatprep.subr.mxu0 0.0
    %3566 = vmatpush1.xpose.msra.mxu0 0.0
    %3567 = vmatprep.subr.mxu0 0.0
    %3568 = vmatpush1.xpose.msra.mxu0 0.0
    %3569 = vmatprep.subr.mxu0 0.0
    %3570 = vmatpush1.xpose.msra.mxu0 0.0
    %3571 = vmatprep.subr.mxu0 0.0
    %3572 = vmatpush1.xpose.msra.mxu0 0.0
    %3573 = vmatprep.subr.mxu0 0.0
    %3574 = vmatpush1.xpose.msra.mxu0 0.0
    %3575 = vmatprep.subr.mxu0 0.0
    %3576 = vmatpush1.xpose.msra.mxu0 0.0
    %3577 = vmatprep.subr.mxu0 0.0
    %3578 = vmatpush1.xpose.msra.mxu0 0.0
    %3579 = vmatprep.subr.mxu0 0.0
    %3580 = vmatpush1.xpose.msra.mxu0 0.0
    %3581 = vmatprep.subr.mxu0 0.0
    %3582 = vmatpush1.xpose.msra.mxu0 %v3549
    %3583 = vmatprep.subr.mxu0 0.0
    %3584 = vmatpush2.xpose.msra.mxu0 0.0
    %3585 = vmatprep.subr.mxu0 0.0
    %3586 = vmatpush2.xpose.msra.mxu0 0.0
    %3587 = vmatprep.subr.mxu0 0.0
    %3588 = vmatpush2.xpose.msra.mxu0 0.0
    %3589 = vmatprep.subr.mxu0 0.0
    %3590 = vmatpush2.xpose.msra.mxu0 0.0
    %3591 = vmatprep.subr.mxu0 0.0
    %3592 = vmatpush2.xpose.msra.mxu0 0.0
    %3593 = vmatprep.subr.mxu0 0.0
    %3594 = vmatpush2.xpose.msra.mxu0 0.0
    %3595 = vmatprep.subr.mxu0 0.0
    %3596 = vmatpush2.xpose.msra.mxu0 0.0
    %3597 = vmatprep.subr.mxu0 0.0
    %3598 = vmatpush2.xpose.msra.mxu0 0.0
    %3599 = vmatprep.subr.mxu0 0.0
    %3600 = vmatpush2.xpose.msra.mxu0 0.0
    %3601 = vmatprep.subr.mxu0 0.0
    %3602 = vmatpush2.xpose.msra.mxu0 0.0
    %3603 = vmatprep.subr.mxu0 0.0
    %3604 = vmatpush2.xpose.msra.mxu0 0.0
    %3605 = vmatprep.subr.mxu0 0.0
    %3606 = vmatpush2.xpose.msra.mxu0 0.0
    %3607 = vmatprep.subr.mxu0 0.0
    %3608 = vmatpush2.xpose.msra.mxu0 0.0
    %3609 = vmatprep.subr.mxu0 0.0
    %3610 = vmatpush2.xpose.msra.mxu0 0.0
    %3611 = vmatprep.subr.mxu0 0.0
    %3612 = vmatpush2.xpose.msra.mxu0 0.0
    %3613 = vmatprep.subr.mxu0 0.0
    %3614 = vmatpush2.xpose.msra.mxu0 0.0
    %3615 = vmatprep.mubr.f32.mxu0 0.0
    %3616 = vmatmul.mubr.f32.gmra.mxu0 %v3547
    %v3617 = vpop.f32.mrf.mxu0
    %v3618 = vadd.f32 %v59, %v3617
    %v3619 = vpop.f32.mrf.mxu0
    %3620 = vdwg.mxu0
    %v3621 = vsel %vm203, %v3540, -inf
    %3622 = vmax.xlane.f32.xlu0 %v3621
    %v3623 = vpop.xlane.xlu0 %3622
    %v3624 = vsel %vm203, %v3618, -inf
    %3625 = vmax.xlane.f32.xlu0 %v3624
    %v3626 = vpop.xlane.xlu0 %3625
    %v3627 = vsub.f32 %v3540, %v3623
    %v3628 = vsub.f32 %v3618, %v3626
    %v3629 = vmul.f32 %v3627, 1.442695
    %v3630 = vpow.pop %v3629
    %v3631 = vmul.f32 %v3628, 1.442695
    %v3632 = vpow.pop %v3631
    %v3633 = vsel %vm203, %v3630, 0.0
    %3634 = vadd.xlane.f32.xlu0 %v3633
    %v3635 = vpop.xlane.xlu0 %3634
    %v3636 = vsel %vm203, %v3632, 0.0
    %3637 = vadd.xlane.f32.xlu0 %v3636
    %v3638 = vpop.xlane.xlu0 %3637
    %v3639 = vrcp.pop %v3635
    %v3640 = vmul.f32 %v3630, %v3639
    %v3641 = vrcp.pop %v3638
    %v3642 = vmul.f32 %v3632, %v3641
    %3643 = vrot.lane.b32.xlu0 %v2220, 40
    %v3644 = vpop.permute.xlu0 %3643
    %v3647 = vsel %vm203, %v3640, 0
    %3649 = vmatprep.subr.mxu0 0.0
    %3650 = vmatpush1.msra.mxu0 0.0
    %3651 = vmatprep.subr.mxu0 0.0
    %3652 = vmatpush1.msra.mxu0 0.0
    %3653 = vmatprep.subr.mxu0 0.0
    %3654 = vmatpush1.msra.mxu0 0.0
    %3655 = vmatprep.subr.mxu0 0.0
    %3656 = vmatpush1.msra.mxu0 0.0
    %3657 = vmatprep.subr.mxu0 0.0
    %3658 = vmatpush1.msra.mxu0 0.0
    %3659 = vmatprep.subr.mxu0 0.0
    %3660 = vmatpush1.msra.mxu0 0.0
    %3661 = vmatprep.subr.mxu0 0.0
    %3662 = vmatpush1.msra.mxu0 0.0
    %3663 = vmatprep.subr.mxu0 0.0
    %3664 = vmatpush1.msra.mxu0 0.0
    %3665 = vmatprep.subr.mxu0 0.0
    %3666 = vmatpush1.msra.mxu0 0.0
    %3667 = vmatprep.subr.mxu0 0.0
    %3668 = vmatpush1.msra.mxu0 0.0
    %3669 = vmatprep.subr.mxu0 0.0
    %3670 = vmatpush1.msra.mxu0 0.0
    %3671 = vmatprep.subr.mxu0 0.0
    %3672 = vmatpush1.msra.mxu0 0.0
    %3673 = vmatprep.subr.mxu0 0.0
    %3674 = vmatpush1.msra.mxu0 0.0
    %3675 = vmatprep.subr.mxu0 0.0
    %3676 = vmatpush1.msra.mxu0 0.0
    %3677 = vmatprep.subr.mxu0 0.0
    %3678 = vmatpush1.msra.mxu0 0.0
    %3679 = vmatprep.subr.mxu0 0.0
    %3680 = vmatpush1.msra.mxu0 %v3644
    %3681 = vmatprep.subr.mxu0 0.0
    %3682 = vmatpush2.msra.mxu0 0.0
    %3683 = vmatprep.subr.mxu0 0.0
    %3684 = vmatpush2.msra.mxu0 0.0
    %3685 = vmatprep.subr.mxu0 0.0
    %3686 = vmatpush2.msra.mxu0 0.0
    %3687 = vmatprep.subr.mxu0 0.0
    %3688 = vmatpush2.msra.mxu0 0.0
    %3689 = vmatprep.subr.mxu0 0.0
    %3690 = vmatpush2.msra.mxu0 0.0
    %3691 = vmatprep.subr.mxu0 0.0
    %3692 = vmatpush2.msra.mxu0 0.0
    %3693 = vmatprep.subr.mxu0 0.0
    %3694 = vmatpush2.msra.mxu0 0.0
    %3695 = vmatprep.subr.mxu0 0.0
    %3696 = vmatpush2.msra.mxu0 0.0
    %3697 = vmatprep.subr.mxu0 0.0
    %3698 = vmatpush2.msra.mxu0 0.0
    %3699 = vmatprep.subr.mxu0 0.0
    %3700 = vmatpush2.msra.mxu0 0.0
    %3701 = vmatprep.subr.mxu0 0.0
    %3702 = vmatpush2.msra.mxu0 0.0
    %3703 = vmatprep.subr.mxu0 0.0
    %3704 = vmatpush2.msra.mxu0 0.0
    %3705 = vmatprep.subr.mxu0 0.0
    %3706 = vmatpush2.msra.mxu0 0.0
    %3707 = vmatprep.subr.mxu0 0.0
    %3708 = vmatpush2.msra.mxu0 0.0
    %3709 = vmatprep.subr.mxu0 0.0
    %3710 = vmatpush2.msra.mxu0 0.0
    %3711 = vmatprep.subr.mxu0 0.0
    %3712 = vmatpush2.msra.mxu0 0.0
    %3713 = vmatprep.mubr.f32.mxu0 0.0
    %3714 = vmatmul.mubr.f32.gmra.mxu0 %v3647
    %v3715 = vpop.f32.mrf.mxu0
    %v3716 = vadd.f32 0.0, %v3715
    %v3717 = vpop.f32.mrf.mxu0
    %3718 = vdwg.mxu0
    %3719 = vrot.lane.b32.xlu0 %v2225, 40
    %v3720 = vpop.permute.xlu0 %3719
    %v3723 = vsel %vm203, %v3642, 0
    %3725 = vmatprep.subr.mxu0 0.0
    %3726 = vmatpush1.msra.mxu0 0.0
    %3727 = vmatprep.subr.mxu0 0.0
    %3728 = vmatpush1.msra.mxu0 0.0
    %3729 = vmatprep.subr.mxu0 0.0
    %3730 = vmatpush1.msra.mxu0 0.0
    %3731 = vmatprep.subr.mxu0 0.0
    %3732 = vmatpush1.msra.mxu0 0.0
    %3733 = vmatprep.subr.mxu0 0.0
    %3734 = vmatpush1.msra.mxu0 0.0
    %3735 = vmatprep.subr.mxu0 0.0
    %3736 = vmatpush1.msra.mxu0 0.0
    %3737 = vmatprep.subr.mxu0 0.0
    %3738 = vmatpush1.msra.mxu0 0.0
    %3739 = vmatprep.subr.mxu0 0.0
    %3740 = vmatpush1.msra.mxu0 0.0
    %3741 = vmatprep.subr.mxu0 0.0
    %3742 = vmatpush1.msra.mxu0 0.0
    %3743 = vmatprep.subr.mxu0 0.0
    %3744 = vmatpush1.msra.mxu0 0.0
    %3745 = vmatprep.subr.mxu0 0.0
    %3746 = vmatpush1.msra.mxu0 0.0
    %3747 = vmatprep.subr.mxu0 0.0
    %3748 = vmatpush1.msra.mxu0 0.0
    %3749 = vmatprep.subr.mxu0 0.0
    %3750 = vmatpush1.msra.mxu0 0.0
    %3751 = vmatprep.subr.mxu0 0.0
    %3752 = vmatpush1.msra.mxu0 0.0
    %3753 = vmatprep.subr.mxu0 0.0
    %3754 = vmatpush1.msra.mxu0 0.0
    %3755 = vmatprep.subr.mxu0 0.0
    %3756 = vmatpush1.msra.mxu0 %v3720
    %3757 = vmatprep.subr.mxu0 0.0
    %3758 = vmatpush2.msra.mxu0 0.0
    %3759 = vmatprep.subr.mxu0 0.0
    %3760 = vmatpush2.msra.mxu0 0.0
    %3761 = vmatprep.subr.mxu0 0.0
    %3762 = vmatpush2.msra.mxu0 0.0
    %3763 = vmatprep.subr.mxu0 0.0
    %3764 = vmatpush2.msra.mxu0 0.0
    %3765 = vmatprep.subr.mxu0 0.0
    %3766 = vmatpush2.msra.mxu0 0.0
    %3767 = vmatprep.subr.mxu0 0.0
    %3768 = vmatpush2.msra.mxu0 0.0
    %3769 = vmatprep.subr.mxu0 0.0
    %3770 = vmatpush2.msra.mxu0 0.0
    %3771 = vmatprep.subr.mxu0 0.0
    %3772 = vmatpush2.msra.mxu0 0.0
    %3773 = vmatprep.subr.mxu0 0.0
    %3774 = vmatpush2.msra.mxu0 0.0
    %3775 = vmatprep.subr.mxu0 0.0
    %3776 = vmatpush2.msra.mxu0 0.0
    %3777 = vmatprep.subr.mxu0 0.0
    %3778 = vmatpush2.msra.mxu0 0.0
    %3779 = vmatprep.subr.mxu0 0.0
    %3780 = vmatpush2.msra.mxu0 0.0
    %3781 = vmatprep.subr.mxu0 0.0
    %3782 = vmatpush2.msra.mxu0 0.0
    %3783 = vmatprep.subr.mxu0 0.0
    %3784 = vmatpush2.msra.mxu0 0.0
    %3785 = vmatprep.subr.mxu0 0.0
    %3786 = vmatpush2.msra.mxu0 0.0
    %3787 = vmatprep.subr.mxu0 0.0
    %3788 = vmatpush2.msra.mxu0 0.0
    %3789 = vmatprep.mubr.f32.mxu0 0.0
    %3790 = vmatmul.mubr.f32.gmra.mxu0 %v3723
    %v3791 = vpop.f32.mrf.mxu0
    %v3792 = vadd.f32 0.0, %v3791
    %v3793 = vpop.f32.mrf.mxu0
    %3794 = vdwg.mxu0
    %v3795 = vld [vmem:[%s2556 + $0x18] sm:$0xff]
    %v3797 = vsel %vm203, %v3716, 0
    %v3800 = vsel %vm203, %v3792, 0
    %3802 = vmatprep.subr.mxu0 0.0
    %3803 = vmatpush1.msra.mxu0 0.0
    %3804 = vmatprep.subr.mxu0 0.0
    %3805 = vmatpush1.msra.mxu0 0.0
    %3806 = vmatprep.subr.mxu0 0.0
    %3807 = vmatpush1.msra.mxu0 0.0
    %3808 = vmatprep.subr.mxu0 0.0
    %3809 = vmatpush1.msra.mxu0 0.0
    %3810 = vmatprep.subr.mxu0 0.0
    %3811 = vmatpush1.msra.mxu0 0.0
    %3812 = vmatprep.subr.mxu0 0.0
    %3813 = vmatpush1.msra.mxu0 0.0
    %3814 = vmatprep.subr.mxu0 0.0
    %3815 = vmatpush1.msra.mxu0 0.0
    %3816 = vmatprep.subr.mxu0 0.0
    %3817 = vmatpush1.msra.mxu0 0.0
    %3818 = vmatprep.subr.mxu0 0.0
    %3819 = vmatpush1.msra.mxu0 0.0
    %3820 = vmatprep.subr.mxu0 0.0
    %3821 = vmatpush1.msra.mxu0 0.0
    %3822 = vmatprep.subr.mxu0 0.0
    %3823 = vmatpush1.msra.mxu0 0.0
    %3824 = vmatprep.subr.mxu0 0.0
    %3825 = vmatpush1.msra.mxu0 0.0
    %3826 = vmatprep.subr.mxu0 0.0
    %3827 = vmatpush1.msra.mxu0 0.0
    %3828 = vmatprep.subr.mxu0 0.0
    %3829 = vmatpush1.msra.mxu0 0.0
    %3830 = vmatprep.subr.mxu0 0.0
    %3831 = vmatpush1.msra.mxu0 0.0
    %3832 = vmatprep.subr.mxu0 0.0
    %3833 = vmatpush1.msra.mxu0 %v3795
    %3834 = vmatprep.subr.mxu0 0.0
    %3835 = vmatpush2.msra.mxu0 0.0
    %3836 = vmatprep.subr.mxu0 0.0
    %3837 = vmatpush2.msra.mxu0 0.0
    %3838 = vmatprep.subr.mxu0 0.0
    %3839 = vmatpush2.msra.mxu0 0.0
    %3840 = vmatprep.subr.mxu0 0.0
    %3841 = vmatpush2.msra.mxu0 0.0
    %3842 = vmatprep.subr.mxu0 0.0
    %3843 = vmatpush2.msra.mxu0 0.0
    %3844 = vmatprep.subr.mxu0 0.0
    %3845 = vmatpush2.msra.mxu0 0.0
    %3846 = vmatprep.subr.mxu0 0.0
    %3847 = vmatpush2.msra.mxu0 0.0
    %3848 = vmatprep.subr.mxu0 0.0
    %3849 = vmatpush2.msra.mxu0 0.0
    %3850 = vmatprep.subr.mxu0 0.0
    %3851 = vmatpush2.msra.mxu0 0.0
    %3852 = vmatprep.subr.mxu0 0.0
    %3853 = vmatpush2.msra.mxu0 0.0
    %3854 = vmatprep.subr.mxu0 0.0
    %3855 = vmatpush2.msra.mxu0 0.0
    %3856 = vmatprep.subr.mxu0 0.0
    %3857 = vmatpush2.msra.mxu0 0.0
    %3858 = vmatprep.subr.mxu0 0.0
    %3859 = vmatpush2.msra.mxu0 0.0
    %3860 = vmatprep.subr.mxu0 0.0
    %3861 = vmatpush2.msra.mxu0 0.0
    %3862 = vmatprep.subr.mxu0 0.0
    %3863 = vmatpush2.msra.mxu0 0.0
    %3864 = vmatprep.subr.mxu0 0.0
    %3865 = vmatpush2.msra.mxu0 0.0
    %3866 = vmatprep.mubr.f32.mxu0 0.0
    %3867 = vmatmul.mubr.f32.gmra.mxu0 %v3797
    %v3868 = vpop.f32.mrf.mxu0
    %v3869 = vadd.f32 0.0, %v3868
    %v3870 = vpop.f32.mrf.mxu0
    %3871 = vmatprep.mubr.f32.mxu0 0.0
    %3872 = vmatmul.mubr.f32.gmra.mxu0 %v3800
    %v3873 = vpop.f32.mrf.mxu0
    %v3874 = vadd.f32 0.0, %v3873
    %v3875 = vpop.f32.mrf.mxu0
    %3876 = vdwg.mxu0
    %v3877 = vadd.f32 %v3463, %v3869
    %v3878 = vadd.f32 %v3464, %v3874
    %v3879 = vadd.f32 %v2087, %v3877
    %v3880 = vadd.f32 %v2088, %v3878
    %v3881 = vlaneseq
    %v3882 = vshrl.u32 %v3881, 7
    %v3883 = vsub.s32 0, %v3882
    %v3884 = vrot.slane %v2092, %v3883
    %v3885 = vadd.f32 %v3879, %v3884
    %v3886 = vadd.f32 %v3880, %v3884
    %v3887 = vsel %vm68, %v3885, 0.0
    %3888 = vadd.xlane.f32.xlu0 %v3887
    %v3889 = vpop.xlane.xlu0 %3888
    %v3890 = vsel %vm68, %v3886, 0.0
    %3891 = vadd.xlane.f32.xlu0 %v3890
    %v3892 = vpop.xlane.xlu0 %3891
    %v3893 = vmul.f32 %v3889, %v75
    %v3894 = vmul.f32 %v3892, %v75
    %v3895 = vsub.f32 %v3885, %v3893
    %v3896 = vsub.f32 %v3886, %v3894
    %v3897 = vmul.f32 %v3895, %v3895
    %v3898 = vmul.f32 %v3896, %v3896
    %v3899 = vsel %vm68, %v3897, 0.0
    %3900 = vadd.xlane.f32.xlu0 %v3899
    %v3901 = vpop.xlane.xlu0 %3900
    %v3902 = vsel %vm68, %v3898, 0.0
    %3903 = vadd.xlane.f32.xlu0 %v3902
    %v3904 = vpop.xlane.xlu0 %3903
    %v3905 = vmul.f32 %v3901, %v75
    %v3906 = vmul.f32 %v3904, %v75
    %v3907 = vadd.f32 %v3905, 1e-05
    %v3908 = vadd.f32 %v3906, 1e-05
    %v3909 = vrsqrt.pop %v3907
    %v3910 = vrsqrt.pop %v3908
    %v3911 = vmul.f32 %v3895, %v3909
    %v3912 = vmul.f32 %v3896, %v3910
    %v3913 = vlaneseq
    %v3914 = vshrl.u32 %v3913, 7
    %v3915 = vsub.s32 0, %v3914
    %v3916 = vrot.slane %v2093, %v3915
    %v3917 = vmul.f32 %v3911, %v3916
    %v3918 = vmul.f32 %v3912, %v3916
    %v3919 = vlaneseq
    %v3920 = vshrl.u32 %v3919, 7
    %v3921 = vsub.s32 0, %v3920
    %v3922 = vrot.slane %v2094, %v3921
    %v3923 = vadd.f32 %v3917, %v3922
    %v3924 = vadd.f32 %v3918, %v3922
    %s3925 = scalar_lea.vmem %s6, 32
    %v3926 = vld [vmem:[%s3925] sm:$0xff]
    %v3927 = vld [vmem:[%s3925 + $0x8] sm:$0xff]
    %v3928 = vld [vmem:[%s3925 + $0x10] sm:$0xff]
    %v3929 = vld [vmem:[%s3925 + $0x18] sm:$0xff]
    %s3930 = scalar_lea.vmem %s9, 1
    %v3931 = vld [vmem:[%s3930] sm:$0x1]
    %v3933 = vlaneseq
    %v3934 = vshrl.u32 %v3933, 7
    %v3935 = vsub.s32 0, %v3934
    %v3936 = vrot.slane %v3931, %v3935
    %v3939 = vsel %vm68, %v3923, 0
    %v3942 = vsel %vm68, %v3924, 0
    %3944 = vmatprep.subr.mxu0 0.0
    %3945 = vmatpush1.msra.mxu0 0.0
    %3946 = vmatprep.subr.mxu0 0.0
    %3947 = vmatpush1.msra.mxu0 0.0
    %3948 = vmatprep.subr.mxu0 0.0
    %3949 = vmatpush1.msra.mxu0 0.0
    %3950 = vmatprep.subr.mxu0 0.0
    %3951 = vmatpush1.msra.mxu0 0.0
    %3952 = vmatprep.subr.mxu0 0.0
    %3953 = vmatpush1.msra.mxu0 0.0
    %3954 = vmatprep.subr.mxu0 0.0
    %3955 = vmatpush1.msra.mxu0 0.0
    %3956 = vmatprep.subr.mxu0 0.0
    %3957 = vmatpush1.msra.mxu0 0.0
    %3958 = vmatprep.subr.mxu0 0.0
    %3959 = vmatpush1.msra.mxu0 0.0
    %3960 = vmatprep.subr.mxu0 0.0
    %3961 = vmatpush1.msra.mxu0 0.0
    %3962 = vmatprep.subr.mxu0 0.0
    %3963 = vmatpush1.msra.mxu0 0.0
    %3964 = vmatprep.subr.mxu0 0.0
    %3965 = vmatpush1.msra.mxu0 0.0
    %3966 = vmatprep.subr.mxu0 0.0
    %3967 = vmatpush1.msra.mxu0 0.0
    %3968 = vmatprep.subr.mxu0 0.0
    %3969 = vmatpush1.msra.mxu0 %v3929
    %3970 = vmatprep.subr.mxu0 0.0
    %3971 = vmatpush1.msra.mxu0 %v3928
    %3972 = vmatprep.subr.mxu0 0.0
    %3973 = vmatpush1.msra.mxu0 %v3927
    %3974 = vmatprep.subr.mxu0 0.0
    %3975 = vmatpush1.msra.mxu0 %v3926
    %3976 = vmatprep.subr.mxu0 0.0
    %3977 = vmatpush2.msra.mxu0 0.0
    %3978 = vmatprep.subr.mxu0 0.0
    %3979 = vmatpush2.msra.mxu0 0.0
    %3980 = vmatprep.subr.mxu0 0.0
    %3981 = vmatpush2.msra.mxu0 0.0
    %3982 = vmatprep.subr.mxu0 0.0
    %3983 = vmatpush2.msra.mxu0 0.0
    %3984 = vmatprep.subr.mxu0 0.0
    %3985 = vmatpush2.msra.mxu0 0.0
    %3986 = vmatprep.subr.mxu0 0.0
    %3987 = vmatpush2.msra.mxu0 0.0
    %3988 = vmatprep.subr.mxu0 0.0
    %3989 = vmatpush2.msra.mxu0 0.0
    %3990 = vmatprep.subr.mxu0 0.0
    %3991 = vmatpush2.msra.mxu0 0.0
    %3992 = vmatprep.subr.mxu0 0.0
    %3993 = vmatpush2.msra.mxu0 0.0
    %3994 = vmatprep.subr.mxu0 0.0
    %3995 = vmatpush2.msra.mxu0 0.0
    %3996 = vmatprep.subr.mxu0 0.0
    %3997 = vmatpush2.msra.mxu0 0.0
    %3998 = vmatprep.subr.mxu0 0.0
    %3999 = vmatpush2.msra.mxu0 0.0
    %4000 = vmatprep.subr.mxu0 0.0
    %4001 = vmatpush2.msra.mxu0 0.0
    %4002 = vmatprep.subr.mxu0 0.0
    %4003 = vmatpush2.msra.mxu0 0.0
    %4004 = vmatprep.subr.mxu0 0.0
    %4005 = vmatpush2.msra.mxu0 0.0
    %4006 = vmatprep.subr.mxu0 0.0
    %4007 = vmatpush2.msra.mxu0 0.0
    %4008 = vmatprep.mubr.f32.mxu0 0.0
    %4009 = vmatmul.mubr.f32.gmra.mxu0 %v3939
    %v4010 = vpop.f32.mrf.mxu0
    %v4011 = vadd.f32 %v3936, %v4010
    %v4012 = vpop.f32.mrf.mxu0
    %4013 = vmatprep.mubr.f32.mxu0 0.0
    %4014 = vmatmul.mubr.f32.gmra.mxu0 %v3942
    %v4015 = vpop.f32.mrf.mxu0
    %v4016 = vadd.f32 %v3936, %v4015
    %v4017 = vpop.f32.mrf.mxu0
    %4018 = vdwg.mxu0
    %v4019 = vmax.f32 %v4011, 0.0
    %v4020 = vmax.f32 %v4016, 0.0
    %s4021 = scalar_lea.vmem %s7, 64
    %v4022 = vld [vmem:[%s4021] sm:$0xff]
    %v4023 = vld [vmem:[%s4021 + $0x8] sm:$0xff]
    %v4024 = vld [vmem:[%s4021 + $0x10] sm:$0xff]
    %v4025 = vld [vmem:[%s4021 + $0x18] sm:$0xff]
    %v4026 = vld [vmem:[%s4021 + $0x20] sm:$0xff]
    %v4027 = vld [vmem:[%s4021 + $0x28] sm:$0xff]
    %v4028 = vld [vmem:[%s4021 + $0x30] sm:$0xff]
    %v4029 = vld [vmem:[%s4021 + $0x38] sm:$0xff]
    %v4031 = vsel %vm1999, %v4019, 0
    %v4034 = vsel %vm1999, %v4020, 0
    %4036 = vmatprep.subr.mxu0 0.0
    %4037 = vmatpush1.msra.mxu0 0.0
    %4038 = vmatprep.subr.mxu0 0.0
    %4039 = vmatpush1.msra.mxu0 0.0
    %4040 = vmatprep.subr.mxu0 0.0
    %4041 = vmatpush1.msra.mxu0 0.0
    %4042 = vmatprep.subr.mxu0 0.0
    %4043 = vmatpush1.msra.mxu0 0.0
    %4044 = vmatprep.subr.mxu0 0.0
    %4045 = vmatpush1.msra.mxu0 0.0
    %4046 = vmatprep.subr.mxu0 0.0
    %4047 = vmatpush1.msra.mxu0 0.0
    %4048 = vmatprep.subr.mxu0 0.0
    %4049 = vmatpush1.msra.mxu0 0.0
    %4050 = vmatprep.subr.mxu0 0.0
    %4051 = vmatpush1.msra.mxu0 0.0
    %4052 = vmatprep.subr.mxu0 0.0
    %4053 = vmatpush1.msra.mxu0 %v4029
    %4054 = vmatprep.subr.mxu0 0.0
    %4055 = vmatpush1.msra.mxu0 %v4028
    %4056 = vmatprep.subr.mxu0 0.0
    %4057 = vmatpush1.msra.mxu0 %v4027
    %4058 = vmatprep.subr.mxu0 0.0
    %4059 = vmatpush1.msra.mxu0 %v4026
    %4060 = vmatprep.subr.mxu0 0.0
    %4061 = vmatpush1.msra.mxu0 %v4025
    %4062 = vmatprep.subr.mxu0 0.0
    %4063 = vmatpush1.msra.mxu0 %v4024
    %4064 = vmatprep.subr.mxu0 0.0
    %4065 = vmatpush1.msra.mxu0 %v4023
    %4066 = vmatprep.subr.mxu0 0.0
    %4067 = vmatpush1.msra.mxu0 %v4022
    %4068 = vmatprep.subr.mxu0 0.0
    %4069 = vmatpush2.msra.mxu0 0.0
    %4070 = vmatprep.subr.mxu0 0.0
    %4071 = vmatpush2.msra.mxu0 0.0
    %4072 = vmatprep.subr.mxu0 0.0
    %4073 = vmatpush2.msra.mxu0 0.0
    %4074 = vmatprep.subr.mxu0 0.0
    %4075 = vmatpush2.msra.mxu0 0.0
    %4076 = vmatprep.subr.mxu0 0.0
    %4077 = vmatpush2.msra.mxu0 0.0
    %4078 = vmatprep.subr.mxu0 0.0
    %4079 = vmatpush2.msra.mxu0 0.0
    %4080 = vmatprep.subr.mxu0 0.0
    %4081 = vmatpush2.msra.mxu0 0.0
    %4082 = vmatprep.subr.mxu0 0.0
    %4083 = vmatpush2.msra.mxu0 0.0
    %4084 = vmatprep.subr.mxu0 0.0
    %4085 = vmatpush2.msra.mxu0 0.0
    %4086 = vmatprep.subr.mxu0 0.0
    %4087 = vmatpush2.msra.mxu0 0.0
    %4088 = vmatprep.subr.mxu0 0.0
    %4089 = vmatpush2.msra.mxu0 0.0
    %4090 = vmatprep.subr.mxu0 0.0
    %4091 = vmatpush2.msra.mxu0 0.0
    %4092 = vmatprep.subr.mxu0 0.0
    %4093 = vmatpush2.msra.mxu0 0.0
    %4094 = vmatprep.subr.mxu0 0.0
    %4095 = vmatpush2.msra.mxu0 0.0
    %4096 = vmatprep.subr.mxu0 0.0
    %4097 = vmatpush2.msra.mxu0 0.0
    %4098 = vmatprep.subr.mxu0 0.0
    %4099 = vmatpush2.msra.mxu0 0.0
    %4100 = vmatprep.mubr.f32.mxu0 0.0
    %4101 = vmatmul.mubr.f32.gmra.mxu0 %v4031
    %v4102 = vpop.f32.mrf.mxu0
    %v4103 = vadd.f32 0.0, %v4102
    %v4104 = vpop.f32.mrf.mxu0
    %4105 = vmatprep.mubr.f32.mxu0 0.0
    %4106 = vmatmul.mubr.f32.gmra.mxu0 %v4034
    %v4107 = vpop.f32.mrf.mxu0
    %v4108 = vadd.f32 0.0, %v4107
    %v4109 = vpop.f32.mrf.mxu0
    %4110 = vdwg.mxu0
    %v4111 = vadd.f32 %v3885, %v4103
    %v4112 = vadd.f32 %v3886, %v4108
    %v4113 = vlaneseq
    %v4114 = vshrl.u32 %v4113, 7
    %v4115 = vsub.s32 0, %v4114
    %v4116 = vrot.slane %v2095, %v4115
    %v4117 = vadd.f32 %v4111, %v4116
    %v4118 = vadd.f32 %v4112, %v4116
    %v4119 = vld [vmem:[%s10] sm:$0x1]
    %v4120 = vld [vmem:[%s10 + $0x1] sm:$0x1]
    %v4121 = vsel %vm68, %v4117, 0.0
    %4122 = vadd.xlane.f32.xlu0 %v4121
    %v4123 = vpop.xlane.xlu0 %4122
    %v4124 = vsel %vm68, %v4118, 0.0
    %4125 = vadd.xlane.f32.xlu0 %v4124
    %v4126 = vpop.xlane.xlu0 %4125
    %v4127 = vmul.f32 %v4123, %v75
    %v4128 = vmul.f32 %v4126, %v75
    %v4129 = vsub.f32 %v4117, %v4127
    %v4130 = vsub.f32 %v4118, %v4128
    %v4131 = vmul.f32 %v4129, %v4129
    %v4132 = vmul.f32 %v4130, %v4130
    %v4133 = vsel %vm68, %v4131, 0.0
    %4134 = vadd.xlane.f32.xlu0 %v4133
    %v4135 = vpop.xlane.xlu0 %4134
    %v4136 = vsel %vm68, %v4132, 0.0
    %4137 = vadd.xlane.f32.xlu0 %v4136
    %v4138 = vpop.xlane.xlu0 %4137
    %v4139 = vmul.f32 %v4135, %v75
    %v4140 = vmul.f32 %v4138, %v75
    %v4141 = vadd.f32 %v4139, 1e-05
    %v4142 = vadd.f32 %v4140, 1e-05
    %v4143 = vrsqrt.pop %v4141
    %v4144 = vrsqrt.pop %v4142
    %v4145 = vmul.f32 %v4129, %v4143
    %v4146 = vmul.f32 %v4130, %v4144
    %v4147 = vlaneseq
    %v4148 = vshrl.u32 %v4147, 7
    %v4149 = vsub.s32 0, %v4148
    %v4150 = vrot.slane %v4119, %v4149
    %v4151 = vmul.f32 %v4145, %v4150
    %v4152 = vmul.f32 %v4146, %v4150
    %v4153 = vlaneseq
    %v4154 = vshrl.u32 %v4153, 7
    %v4155 = vsub.s32 0, %v4154
    %v4156 = vrot.slane %v4120, %v4155
    %v4157 = vadd.f32 %v4151, %v4156
    %v4158 = vadd.f32 %v4152, %v4156
    %4159 = vst.msk [vmem:[#allocation2] sm:$0xff] %vm68, %v4157
    %4160 = vst.msk [vmem:[#allocation2 + $0x8] sm:$0xff] %vm68, %v4158
    // Predicated region
    $region46: #{transformer_forward.1} parent=1 // pred_check
      _
    $region47: #{transformer_forward.1} parent=1 // pred_check_branch
      %4162 = sbr.rel (0) target = $region49
    $region48: #{transformer_forward.1} parent=1 // pred_region
      %s4164 = ssub.s32 256, 256
      %4165 = vsyncadd [#allocation3], %s4164
      %s4166 = sshll.u32 [#allocation2], 4
      %s4167 = int_to_ptr.vmem [resolvable:$true] %s4166
      %4172 = dma.vmem_to_hbm [thread:$0]  %s4167, 256, %s11, [#allocation3], 128, 128, 8
    $region49: #{transformer_forward.1} parent=1 // pred_fallthru
      _
    // Predicated region
    $region50: #{transformer_forward.1} parent=1 // pred_check
      _
    $region51: #{transformer_forward.1} parent=1 // pred_check_branch
      %4174 = sbr.rel (0) target = $region53
    $region52: #{transformer_forward.1} parent=1 // pred_region
      %4175 = dma.done [#allocation3], 256
    $region53: #{transformer_forward.1} parent=1 // pred_fallthru
      _
    %4176 = vsyncpa [#allocation3], 1

</llo_original>
